<compile_context>
chip_gen: v6e
topology: v6e:2x2x1
jax: 0.10.0
libtpu: 0.0.40
codegen_flags: <defaults>
</compile_context>

<pallas_src>
import functools

import jax
import jax.numpy as jnp
from jax import lax
from jax.experimental import pallas as pl
from jax.experimental.pallas import tpu as pltpu

# ---------------- model sizes (small, deterministic) ----------------
VOCAB = 16
HIDDEN = 32
BATCH = 2
SRC_LEN = 8
MAX_LEN = 8     # decoder steps when target_tensor is None
SOS_TOKEN = 0

_VMEM = pl.BlockSpec(memory_space=pltpu.MemorySpace.VMEM)
_SMEM = pl.BlockSpec(memory_space=pltpu.MemorySpace.SMEM)


# ---------------- shared GRU cell math (runs inside the kernel) ----------------
def _gru_cell(r_pre, z_pre, xg_n, hg_n, bhh_n, h_prev):
    """r_pre/z_pre already contain x-gate + h-gate (+ merged r/z biases)."""
    r = jax.nn.sigmoid(r_pre)
    z = jax.nn.sigmoid(z_pre)
    n = jnp.tanh(xg_n + r * (hg_n + bhh_n))
    return (1.0 - z) * n + z * h_prev


# ---------------- fused encoder + decoder kernel ----------------
def _translator_kernel(*refs, teacher_forcing, src_len, max_len, vocab, hidden, batch):
    if teacher_forcing:
        (tok_ref, tgt_ref, xgte_ref, whhe_ref, bne_ref,
         wcat_ref, bnd_ref, wout_ref, bout_ref, out_ref) = refs
    else:
        (tok_ref, xgte_ref, whhe_ref, bne_ref,
         wcat_ref, bnd_ref, wout_ref, bout_ref, out_ref) = refs

    H, V, B = hidden, vocab, batch
    f32 = jnp.float32

    tok = tok_ref[...]            # (B, src_len) int32 encoder tokens
    xgte = xgte_ref[...]          # (V, 4H) per-token enc input-gate table [r|z|n|0], bias baked in
    whhe = whhe_ref[...]          # (H, 4H) enc hidden weights [r|z|n|0]
    bne = bne_ref[...]            # (1, H)  enc b_hn
    wcat = wcat_ref[...]          # (V+H, 4H) dec packed [r_pre|z_pre|xg_n|hg_n]
    bnd = bnd_ref[...]            # (1, H)  dec b_hn
    wout = wout_ref[...]          # (H, V)
    bout = bout_ref[...]          # (1, V)

    iota_v = lax.broadcasted_iota(jnp.int32, (B, V), 1)

    # ---------------- encoder: unrolled GRU over source tokens ----------------
    h = jnp.zeros((B, H), f32)
    for t in range(src_len):                                   # static unroll
        onehot = (iota_v == tok[:, t:t + 1]).astype(f32)       # in-kernel embedding "gather"
        # token-only matmul: off the serial h-chain, scheduler hoists it
        xg = jnp.dot(onehot, xgte, preferred_element_type=f32)  # (B, 4H)
        hg = jnp.dot(h, whhe, preferred_element_type=f32)       # (B, 4H), one push on the chain
        h = _gru_cell(xg[:, :H] + hg[:, :H],
                      xg[:, H:2 * H] + hg[:, H:2 * H],
                      xg[:, 2 * H:3 * H], hg[:, 2 * H:3 * H],
                      bne, h)

    # ---------------- decoder: unrolled greedy / teacher-forced decode ----------------
    onehot = (iota_v == SOS_TOKEN).astype(f32)                  # SOS one-hot
    for t in range(max_len):                                    # static unroll
        cat = jnp.concatenate([onehot, h], axis=1)              # (B, V+H) = (2, 48)
        # single lane-dense gate push: (2,48)@(48,128) -> [r_pre|z_pre|xg_n|hg_n]
        g = jnp.dot(cat, wcat, preferred_element_type=f32)
        h = _gru_cell(g[:, :H], g[:, H:2 * H],
                      g[:, 2 * H:3 * H], g[:, 3 * H:], bnd, h)
        logits = jnp.dot(h, wout, preferred_element_type=f32) + bout
        m = jnp.max(logits, axis=-1, keepdims=True)
        lse = jnp.log(jnp.sum(jnp.exp(logits - m), axis=-1, keepdims=True)) + m
        out_ref[:, t * V:(t + 1) * V] = logits - lse            # F.log_softmax(..., dim=-1)

        if t + 1 < max_len:
            if teacher_forcing:
                # next decoder input = target token for this step (SMEM scalar reads)
                iota_row = lax.broadcasted_iota(jnp.int32, (1, V), 1)
                rows = [(iota_row == tgt_ref[b, t]).astype(f32) for b in range(B)]
                onehot = jnp.concatenate(rows, axis=0)
            else:
                # greedy argmax (first-max tie-break, same as torch.topk)
                nxt = jnp.min(jnp.where(logits == m, iota_v, V),
                              axis=-1, keepdims=True).astype(jnp.int32)
                onehot = (iota_v == nxt).astype(f32)


# ---------------- Translator.forward ----------------
def translator_forward(params, input_tokens, target_tokens=None):
    """input_tokens: (B, T_src) int32; returns decoder log-probs (B, MAX_LEN, VOCAB)."""
    B, T = input_tokens.shape
    H, V = HIDDEN, VOCAB
    teacher = target_tokens is not None
    f32 = jnp.float32

    def merge_bias(bih, bhh):
        # b_r, b_z can be pre-summed; bhh_n must stay separate (multiplied by r).
        b_merged = jnp.concatenate(
            [bih[:, :2 * H] + bhh[:, :2 * H], bih[:, 2 * H:]], axis=1)
        return b_merged, bhh[:, 2 * H:]

    enc_bm, enc_bhhn = merge_bias(params["enc_bih"], params["enc_bhh"])
    dec_bm, dec_bhhn = merge_bias(params["dec_bih"], params["dec_bhh"])

    # --- weight packing (params are jit constants in the demo -> constant-folded) ---
    zVH = jnp.zeros((V, H), f32)
    zHH = jnp.zeros((H, H), f32)

    # Encoder per-token input-gate table (V, 3H) + zero pad -> lane-dense (V, 4H=128).
    xgte = jnp.dot(params["enc_emb"], params["enc_wih"]) + enc_bm
    xgte = jnp.concatenate([xgte, zVH], axis=1)                       # [r|z|n|0]
    whhe = jnp.concatenate([params["enc_whh"], zHH], axis=1)          # [r|z|n|0]

    # Decoder per-token input-gate table with the relu(embedding) baked in,
    # packed together with W_hh into a single (V+H, 4H=128) cat-matmul weight.
    xgtd = jnp.dot(jnp.maximum(params["dec_emb"], 0.0), params["dec_wih"]) + dec_bm
    wcat_top = jnp.concatenate([xgtd, zVH], axis=1)                   # [r|z|n|0]
    whh_d = params["dec_whh"]
    wcat_bot = jnp.concatenate([whh_d[:, :2 * H], zHH, whh_d[:, 2 * H:]], axis=1)  # [r|z|0|n]
    wcat = jnp.concatenate([wcat_top, wcat_bot], axis=0)              # (V+H, 4H)

    kernel = functools.partial(_translator_kernel, teacher_forcing=teacher,
                               src_len=T, max_len=MAX_LEN, vocab=V,
                               hidden=H, batch=B)

    args = [input_tokens.astype(jnp.int32)]
    specs = [_VMEM]
    if teacher:
        args.append(target_tokens.astype(jnp.int32))
        specs.append(_SMEM)                                           # scalar control tokens
    args += [xgte, whhe, enc_bhhn, wcat, dec_bhhn,
             params["dec_wout"], params["dec_bout"]]
    specs += [_VMEM] * 7

    logp_flat = pl.pallas_call(
        kernel,
        out_shape=jax.ShapeDtypeStruct((B, MAX_LEN * V), jnp.float32),  # (2, 128) lane-dense
        in_specs=specs,
        out_specs=_VMEM,
    )(*args)
    return logp_flat.reshape(B, MAX_LEN, V)


# ---------------- deterministic parameter init (packed gate layout) ----------------
def init_params(key, vocab=VOCAB, hidden=HIDDEN):
    k = 1.0 / jnp.sqrt(jnp.float32(hidden))
    keys = jax.random.split(key, 12)

    def u(kk, shape):
        return jax.random.uniform(kk, shape, jnp.float32, -k, k)

    return {
        "enc_emb":  jax.random.normal(keys[0], (vocab, hidden), jnp.float32),
        "enc_wih":  u(keys[1], (hidden, 3 * hidden)),   # packed gates [r|z|n]
        "enc_whh":  u(keys[2], (hidden, 3 * hidden)),
        "enc_bih":  u(keys[3], (1, 3 * hidden)),
        "enc_bhh":  u(keys[4], (1, 3 * hidden)),
        "dec_emb":  jax.random.normal(keys[5], (vocab, hidden), jnp.float32),
        "dec_wih":  u(keys[6], (hidden, 3 * hidden)),
        "dec_whh":  u(keys[7], (hidden, 3 * hidden)),
        "dec_bih":  u(keys[8], (1, 3 * hidden)),
        "dec_bhh":  u(keys[9], (1, 3 * hidden)),
        "dec_wout": u(keys[10], (hidden, vocab)),
        "dec_bout": u(keys[11], (1, vocab)),
    }


if __name__ == "__main__":
    key = jax.random.PRNGKey(0)
    pkey, dkey = jax.random.split(key)
    params = init_params(pkey)
    input_tensor = jax.random.randint(dkey, (BATCH, SRC_LEN), 0, VOCAB, dtype=jnp.int32)

    fwd = jax.jit(functools.partial(translator_forward, params))
    decoder_outputs = fwd(input_tensor)
    jax.block_until_ready(decoder_outputs)

    assert decoder_outputs.shape == (BATCH, MAX_LEN, VOCAB)
    assert bool(jnp.all(jnp.isfinite(decoder_outputs)))
    # rows of log_softmax output must sum to ~1 in prob space
    assert bool(jnp.allclose(jnp.sum(jnp.exp(decoder_outputs), axis=-1), 1.0, atol=1e-4))
    print("KERNEL_OK")
</pallas_src>

<mosaic_0001>
module attributes {stable_mosaic.version = 11 : i64} {
  func.func @_translator_kernel(%arg0: memref<2x8xi32, #tpu.memory_space<vmem>>, %arg1: memref<16x128xf32, #tpu.memory_space<vmem>>, %arg2: memref<32x128xf32, #tpu.memory_space<vmem>>, %arg3: memref<1x32xf32, #tpu.memory_space<vmem>>, %arg4: memref<48x128xf32, #tpu.memory_space<vmem>>, %arg5: memref<1x32xf32, #tpu.memory_space<vmem>>, %arg6: memref<32x16xf32, #tpu.memory_space<vmem>>, %arg7: memref<1x16xf32, #tpu.memory_space<vmem>>, %arg8: memref<2x128xf32, #tpu.memory_space<vmem>>) attributes {dimension_semantics = [], scalar_prefetch = 0 : i64, scratch_operands = 0 : i64, tpu.core_type = #tpu.core_type<tc>} {
    %c0 = arith.constant 0 : index
    %c0_0 = arith.constant 0 : index
    %0 = vector.load %arg0[%c0, %c0_0] : memref<2x8xi32, #tpu.memory_space<vmem>>, vector<2x8xi32>
    %c0_1 = arith.constant 0 : index
    %c0_2 = arith.constant 0 : index
    %1 = vector.load %arg1[%c0_1, %c0_2] : memref<16x128xf32, #tpu.memory_space<vmem>>, vector<16x128xf32>
    %c0_3 = arith.constant 0 : index
    %c0_4 = arith.constant 0 : index
    %2 = vector.load %arg2[%c0_3, %c0_4] : memref<32x128xf32, #tpu.memory_space<vmem>>, vector<32x128xf32>
    %c0_5 = arith.constant 0 : index
    %c0_6 = arith.constant 0 : index
    %3 = vector.load %arg3[%c0_5, %c0_6] : memref<1x32xf32, #tpu.memory_space<vmem>>, vector<1x32xf32>
    %c0_7 = arith.constant 0 : index
    %c0_8 = arith.constant 0 : index
    %4 = vector.load %arg4[%c0_7, %c0_8] : memref<48x128xf32, #tpu.memory_space<vmem>>, vector<48x128xf32>
    %c0_9 = arith.constant 0 : index
    %c0_10 = arith.constant 0 : index
    %5 = vector.load %arg5[%c0_9, %c0_10] : memref<1x32xf32, #tpu.memory_space<vmem>>, vector<1x32xf32>
    %c0_11 = arith.constant 0 : index
    %c0_12 = arith.constant 0 : index
    %6 = vector.load %arg6[%c0_11, %c0_12] : memref<32x16xf32, #tpu.memory_space<vmem>>, vector<32x16xf32>
    %c0_13 = arith.constant 0 : index
    %c0_14 = arith.constant 0 : index
    %7 = vector.load %arg7[%c0_13, %c0_14] : memref<1x16xf32, #tpu.memory_space<vmem>>, vector<1x16xf32>
    %8 = tpu.iota {dimensions = array<i32: 1>} : vector<2x16xi32>
    %cst = arith.constant 0.000000e+00 : f32
    %9 = vector.broadcast %cst : f32 to vector<2x32xf32>
    %10 = vector.extract_strided_slice %0 {offsets = [0, 0], sizes = [2, 1], strides = [1, 1]} : vector<2x8xi32> to vector<2x1xi32>
    %11 = vector.broadcast %10 : vector<2x1xi32> to vector<2x16xi32>
    %12 = arith.cmpi eq, %8, %11 : vector<2x16xi32>
    %13 = arith.extui %12 : vector<2x16xi1> to vector<2x16xi32>
    %14 = arith.sitofp %13 : vector<2x16xi32> to vector<2x16xf32>
    %cst_15 = arith.constant dense<0.000000e+00> : vector<2x128xf32>
    %15 = tpu.matmul %14, %1, %cst_15 {dimension_numbers = #tpu.dot_dimension_numbers<[1], [0], [0], [1], [0, 0, 1, 1], [], []>} : vector<2x16xf32>, vector<16x128xf32>, vector<2x128xf32> -> vector<2x128xf32>
    %cst_16 = arith.constant dense<0.000000e+00> : vector<2x128xf32>
    %16 = tpu.matmul %9, %2, %cst_16 {dimension_numbers = #tpu.dot_dimension_numbers<[1], [0], [0], [1], [0, 0, 1, 1], [], []>} : vector<2x32xf32>, vector<32x128xf32>, vector<2x128xf32> -> vector<2x128xf32>
    %17 = vector.extract_strided_slice %15 {offsets = [0, 0], sizes = [2, 32], strides = [1, 1]} : vector<2x128xf32> to vector<2x32xf32>
    %18 = vector.extract_strided_slice %16 {offsets = [0, 0], sizes = [2, 32], strides = [1, 1]} : vector<2x128xf32> to vector<2x32xf32>
    %19 = arith.addf %17, %18 : vector<2x32xf32>
    %20 = vector.extract_strided_slice %15 {offsets = [0, 32], sizes = [2, 32], strides = [1, 1]} : vector<2x128xf32> to vector<2x32xf32>
    %21 = vector.extract_strided_slice %16 {offsets = [0, 32], sizes = [2, 32], strides = [1, 1]} : vector<2x128xf32> to vector<2x32xf32>
    %22 = arith.addf %20, %21 : vector<2x32xf32>
    %23 = vector.extract_strided_slice %15 {offsets = [0, 64], sizes = [2, 32], strides = [1, 1]} : vector<2x128xf32> to vector<2x32xf32>
    %24 = vector.extract_strided_slice %16 {offsets = [0, 64], sizes = [2, 32], strides = [1, 1]} : vector<2x128xf32> to vector<2x32xf32>
    %25 = arith.negf %19 : vector<2x32xf32>
    %26 = math.exp %25 : vector<2x32xf32>
    %cst_17 = arith.constant 1.000000e+00 : f32
    %27 = vector.broadcast %cst_17 : f32 to vector<2x32xf32>
    %28 = arith.addf %27, %26 : vector<2x32xf32>
    %29 = arith.divf %27, %28 : vector<2x32xf32>
    %30 = arith.negf %22 : vector<2x32xf32>
    %31 = math.exp %30 : vector<2x32xf32>
    %cst_18 = arith.constant 1.000000e+00 : f32
    %32 = vector.broadcast %cst_18 : f32 to vector<2x32xf32>
    %33 = arith.addf %32, %31 : vector<2x32xf32>
    %34 = arith.divf %32, %33 : vector<2x32xf32>
    %35 = vector.broadcast %3 : vector<1x32xf32> to vector<2x32xf32>
    %36 = arith.addf %24, %35 : vector<2x32xf32>
    %37 = arith.mulf %29, %36 : vector<2x32xf32>
    %38 = arith.addf %23, %37 : vector<2x32xf32>
    %39 = math.tanh %38 : vector<2x32xf32>
    %cst_19 = arith.constant 1.000000e+00 : f32
    %40 = vector.broadcast %cst_19 : f32 to vector<2x32xf32>
    %41 = arith.subf %40, %34 : vector<2x32xf32>
    %42 = arith.mulf %41, %39 : vector<2x32xf32>
    %43 = arith.mulf %34, %9 : vector<2x32xf32>
    %44 = arith.addf %42, %43 : vector<2x32xf32>
    %45 = vector.extract_strided_slice %0 {offsets = [0, 1], sizes = [2, 1], strides = [1, 1]} : vector<2x8xi32> to vector<2x1xi32>
    %46 = vector.broadcast %45 : vector<2x1xi32> to vector<2x16xi32>
    %47 = arith.cmpi eq, %8, %46 : vector<2x16xi32>
    %48 = arith.extui %47 : vector<2x16xi1> to vector<2x16xi32>
    %49 = arith.sitofp %48 : vector<2x16xi32> to vector<2x16xf32>
    %cst_20 = arith.constant dense<0.000000e+00> : vector<2x128xf32>
    %50 = tpu.matmul %49, %1, %cst_20 {dimension_numbers = #tpu.dot_dimension_numbers<[1], [0], [0], [1], [0, 0, 1, 1], [], []>} : vector<2x16xf32>, vector<16x128xf32>, vector<2x128xf32> -> vector<2x128xf32>
    %cst_21 = arith.constant dense<0.000000e+00> : vector<2x128xf32>
    %51 = tpu.matmul %44, %2, %cst_21 {dimension_numbers = #tpu.dot_dimension_numbers<[1], [0], [0], [1], [0, 0, 1, 1], [], []>} : vector<2x32xf32>, vector<32x128xf32>, vector<2x128xf32> -> vector<2x128xf32>
    %52 = vector.extract_strided_slice %50 {offsets = [0, 0], sizes = [2, 32], strides = [1, 1]} : vector<2x128xf32> to vector<2x32xf32>
    %53 = vector.extract_strided_slice %51 {offsets = [0, 0], sizes = [2, 32], strides = [1, 1]} : vector<2x128xf32> to vector<2x32xf32>
    %54 = arith.addf %52, %53 : vector<2x32xf32>
    %55 = vector.extract_strided_slice %50 {offsets = [0, 32], sizes = [2, 32], strides = [1, 1]} : vector<2x128xf32> to vector<2x32xf32>
    %56 = vector.extract_strided_slice %51 {offsets = [0, 32], sizes = [2, 32], strides = [1, 1]} : vector<2x128xf32> to vector<2x32xf32>
    %57 = arith.addf %55, %56 : vector<2x32xf32>
    %58 = vector.extract_strided_slice %50 {offsets = [0, 64], sizes = [2, 32], strides = [1, 1]} : vector<2x128xf32> to vector<2x32xf32>
    %59 = vector.extract_strided_slice %51 {offsets = [0, 64], sizes = [2, 32], strides = [1, 1]} : vector<2x128xf32> to vector<2x32xf32>
    %60 = arith.negf %54 : vector<2x32xf32>
    %61 = math.exp %60 : vector<2x32xf32>
    %cst_22 = arith.constant 1.000000e+00 : f32
    %62 = vector.broadcast %cst_22 : f32 to vector<2x32xf32>
    %63 = arith.addf %62, %61 : vector<2x32xf32>
    %64 = arith.divf %62, %63 : vector<2x32xf32>
    %65 = arith.negf %57 : vector<2x32xf32>
    %66 = math.exp %65 : vector<2x32xf32>
    %cst_23 = arith.constant 1.000000e+00 : f32
    %67 = vector.broadcast %cst_23 : f32 to vector<2x32xf32>
    %68 = arith.addf %67, %66 : vector<2x32xf32>
    %69 = arith.divf %67, %68 : vector<2x32xf32>
    %70 = vector.broadcast %3 : vector<1x32xf32> to vector<2x32xf32>
    %71 = arith.addf %59, %70 : vector<2x32xf32>
    %72 = arith.mulf %64, %71 : vector<2x32xf32>
    %73 = arith.addf %58, %72 : vector<2x32xf32>
    %74 = math.tanh %73 : vector<2x32xf32>
    %cst_24 = arith.constant 1.000000e+00 : f32
    %75 = vector.broadcast %cst_24 : f32 to vector<2x32xf32>
    %76 = arith.subf %75, %69 : vector<2x32xf32>
    %77 = arith.mulf %76, %74 : vector<2x32xf32>
    %78 = arith.mulf %69, %44 : vector<2x32xf32>
    %79 = arith.addf %77, %78 : vector<2x32xf32>
    %80 = vector.extract_strided_slice %0 {offsets = [0, 2], sizes = [2, 1], strides = [1, 1]} : vector<2x8xi32> to vector<2x1xi32>
    %81 = vector.broadcast %80 : vector<2x1xi32> to vector<2x16xi32>
    %82 = arith.cmpi eq, %8, %81 : vector<2x16xi32>
    %83 = arith.extui %82 : vector<2x16xi1> to vector<2x16xi32>
    %84 = arith.sitofp %83 : vector<2x16xi32> to vector<2x16xf32>
    %cst_25 = arith.constant dense<0.000000e+00> : vector<2x128xf32>
    %85 = tpu.matmul %84, %1, %cst_25 {dimension_numbers = #tpu.dot_dimension_numbers<[1], [0], [0], [1], [0, 0, 1, 1], [], []>} : vector<2x16xf32>, vector<16x128xf32>, vector<2x128xf32> -> vector<2x128xf32>
    %cst_26 = arith.constant dense<0.000000e+00> : vector<2x128xf32>
    %86 = tpu.matmul %79, %2, %cst_26 {dimension_numbers = #tpu.dot_dimension_numbers<[1], [0], [0], [1], [0, 0, 1, 1], [], []>} : vector<2x32xf32>, vector<32x128xf32>, vector<2x128xf32> -> vector<2x128xf32>
    %87 = vector.extract_strided_slice %85 {offsets = [0, 0], sizes = [2, 32], strides = [1, 1]} : vector<2x128xf32> to vector<2x32xf32>
    %88 = vector.extract_strided_slice %86 {offsets = [0, 0], sizes = [2, 32], strides = [1, 1]} : vector<2x128xf32> to vector<2x32xf32>
    %89 = arith.addf %87, %88 : vector<2x32xf32>
    %90 = vector.extract_strided_slice %85 {offsets = [0, 32], sizes = [2, 32], strides = [1, 1]} : vector<2x128xf32> to vector<2x32xf32>
    %91 = vector.extract_strided_slice %86 {offsets = [0, 32], sizes = [2, 32], strides = [1, 1]} : vector<2x128xf32> to vector<2x32xf32>
    %92 = arith.addf %90, %91 : vector<2x32xf32>
    %93 = vector.extract_strided_slice %85 {offsets = [0, 64], sizes = [2, 32], strides = [1, 1]} : vector<2x128xf32> to vector<2x32xf32>
    %94 = vector.extract_strided_slice %86 {offsets = [0, 64], sizes = [2, 32], strides = [1, 1]} : vector<2x128xf32> to vector<2x32xf32>
    %95 = arith.negf %89 : vector<2x32xf32>
    %96 = math.exp %95 : vector<2x32xf32>
    %cst_27 = arith.constant 1.000000e+00 : f32
    %97 = vector.broadcast %cst_27 : f32 to vector<2x32xf32>
    %98 = arith.addf %97, %96 : vector<2x32xf32>
    %99 = arith.divf %97, %98 : vector<2x32xf32>
    %100 = arith.negf %92 : vector<2x32xf32>
    %101 = math.exp %100 : vector<2x32xf32>
    %cst_28 = arith.constant 1.000000e+00 : f32
    %102 = vector.broadcast %cst_28 : f32 to vector<2x32xf32>
    %103 = arith.addf %102, %101 : vector<2x32xf32>
    %104 = arith.divf %102, %103 : vector<2x32xf32>
    %105 = vector.broadcast %3 : vector<1x32xf32> to vector<2x32xf32>
    %106 = arith.addf %94, %105 : vector<2x32xf32>
    %107 = arith.mulf %99, %106 : vector<2x32xf32>
    %108 = arith.addf %93, %107 : vector<2x32xf32>
    %109 = math.tanh %108 : vector<2x32xf32>
    %cst_29 = arith.constant 1.000000e+00 : f32
    %110 = vector.broadcast %cst_29 : f32 to vector<2x32xf32>
    %111 = arith.subf %110, %104 : vector<2x32xf32>
    %112 = arith.mulf %111, %109 : vector<2x32xf32>
    %113 = arith.mulf %104, %79 : vector<2x32xf32>
    %114 = arith.addf %112, %113 : vector<2x32xf32>
    %115 = vector.extract_strided_slice %0 {offsets = [0, 3], sizes = [2, 1], strides = [1, 1]} : vector<2x8xi32> to vector<2x1xi32>
    %116 = vector.broadcast %115 : vector<2x1xi32> to vector<2x16xi32>
    %117 = arith.cmpi eq, %8, %116 : vector<2x16xi32>
    %118 = arith.extui %117 : vector<2x16xi1> to vector<2x16xi32>
    %119 = arith.sitofp %118 : vector<2x16xi32> to vector<2x16xf32>
    %cst_30 = arith.constant dense<0.000000e+00> : vector<2x128xf32>
    %120 = tpu.matmul %119, %1, %cst_30 {dimension_numbers = #tpu.dot_dimension_numbers<[1], [0], [0], [1], [0, 0, 1, 1], [], []>} : vector<2x16xf32>, vector<16x128xf32>, vector<2x128xf32> -> vector<2x128xf32>
    %cst_31 = arith.constant dense<0.000000e+00> : vector<2x128xf32>
    %121 = tpu.matmul %114, %2, %cst_31 {dimension_numbers = #tpu.dot_dimension_numbers<[1], [0], [0], [1], [0, 0, 1, 1], [], []>} : vector<2x32xf32>, vector<32x128xf32>, vector<2x128xf32> -> vector<2x128xf32>
    %122 = vector.extract_strided_slice %120 {offsets = [0, 0], sizes = [2, 32], strides = [1, 1]} : vector<2x128xf32> to vector<2x32xf32>
    %123 = vector.extract_strided_slice %121 {offsets = [0, 0], sizes = [2, 32], strides = [1, 1]} : vector<2x128xf32> to vector<2x32xf32>
    %124 = arith.addf %122, %123 : vector<2x32xf32>
    %125 = vector.extract_strided_slice %120 {offsets = [0, 32], sizes = [2, 32], strides = [1, 1]} : vector<2x128xf32> to vector<2x32xf32>
    %126 = vector.extract_strided_slice %121 {offsets = [0, 32], sizes = [2, 32], strides = [1, 1]} : vector<2x128xf32> to vector<2x32xf32>
    %127 = arith.addf %125, %126 : vector<2x32xf32>
    %128 = vector.extract_strided_slice %120 {offsets = [0, 64], sizes = [2, 32], strides = [1, 1]} : vector<2x128xf32> to vector<2x32xf32>
    %129 = vector.extract_strided_slice %121 {offsets = [0, 64], sizes = [2, 32], strides = [1, 1]} : vector<2x128xf32> to vector<2x32xf32>
    %130 = arith.negf %124 : vector<2x32xf32>
    %131 = math.exp %130 : vector<2x32xf32>
    %cst_32 = arith.constant 1.000000e+00 : f32
    %132 = vector.broadcast %cst_32 : f32 to vector<2x32xf32>
    %133 = arith.addf %132, %131 : vector<2x32xf32>
    %134 = arith.divf %132, %133 : vector<2x32xf32>
    %135 = arith.negf %127 : vector<2x32xf32>
    %136 = math.exp %135 : vector<2x32xf32>
    %cst_33 = arith.constant 1.000000e+00 : f32
    %137 = vector.broadcast %cst_33 : f32 to vector<2x32xf32>
    %138 = arith.addf %137, %136 : vector<2x32xf32>
    %139 = arith.divf %137, %138 : vector<2x32xf32>
    %140 = vector.broadcast %3 : vector<1x32xf32> to vector<2x32xf32>
    %141 = arith.addf %129, %140 : vector<2x32xf32>
    %142 = arith.mulf %134, %141 : vector<2x32xf32>
    %143 = arith.addf %128, %142 : vector<2x32xf32>
    %144 = math.tanh %143 : vector<2x32xf32>
    %cst_34 = arith.constant 1.000000e+00 : f32
    %145 = vector.broadcast %cst_34 : f32 to vector<2x32xf32>
    %146 = arith.subf %145, %139 : vector<2x32xf32>
    %147 = arith.mulf %146, %144 : vector<2x32xf32>
    %148 = arith.mulf %139, %114 : vector<2x32xf32>
    %149 = arith.addf %147, %148 : vector<2x32xf32>
    %150 = vector.extract_strided_slice %0 {offsets = [0, 4], sizes = [2, 1], strides = [1, 1]} : vector<2x8xi32> to vector<2x1xi32>
    %151 = vector.broadcast %150 : vector<2x1xi32> to vector<2x16xi32>
    %152 = arith.cmpi eq, %8, %151 : vector<2x16xi32>
    %153 = arith.extui %152 : vector<2x16xi1> to vector<2x16xi32>
    %154 = arith.sitofp %153 : vector<2x16xi32> to vector<2x16xf32>
    %cst_35 = arith.constant dense<0.000000e+00> : vector<2x128xf32>
    %155 = tpu.matmul %154, %1, %cst_35 {dimension_numbers = #tpu.dot_dimension_numbers<[1], [0], [0], [1], [0, 0, 1, 1], [], []>} : vector<2x16xf32>, vector<16x128xf32>, vector<2x128xf32> -> vector<2x128xf32>
    %cst_36 = arith.constant dense<0.000000e+00> : vector<2x128xf32>
    %156 = tpu.matmul %149, %2, %cst_36 {dimension_numbers = #tpu.dot_dimension_numbers<[1], [0], [0], [1], [0, 0, 1, 1], [], []>} : vector<2x32xf32>, vector<32x128xf32>, vector<2x128xf32> -> vector<2x128xf32>
    %157 = vector.extract_strided_slice %155 {offsets = [0, 0], sizes = [2, 32], strides = [1, 1]} : vector<2x128xf32> to vector<2x32xf32>
    %158 = vector.extract_strided_slice %156 {offsets = [0, 0], sizes = [2, 32], strides = [1, 1]} : vector<2x128xf32> to vector<2x32xf32>
    %159 = arith.addf %157, %158 : vector<2x32xf32>
    %160 = vector.extract_strided_slice %155 {offsets = [0, 32], sizes = [2, 32], strides = [1, 1]} : vector<2x128xf32> to vector<2x32xf32>
    %161 = vector.extract_strided_slice %156 {offsets = [0, 32], sizes = [2, 32], strides = [1, 1]} : vector<2x128xf32> to vector<2x32xf32>
    %162 = arith.addf %160, %161 : vector<2x32xf32>
    %163 = vector.extract_strided_slice %155 {offsets = [0, 64], sizes = [2, 32], strides = [1, 1]} : vector<2x128xf32> to vector<2x32xf32>
    %164 = vector.extract_strided_slice %156 {offsets = [0, 64], sizes = [2, 32], strides = [1, 1]} : vector<2x128xf32> to vector<2x32xf32>
    %165 = arith.negf %159 : vector<2x32xf32>
    %166 = math.exp %165 : vector<2x32xf32>
    %cst_37 = arith.constant 1.000000e+00 : f32
    %167 = vector.broadcast %cst_37 : f32 to vector<2x32xf32>
    %168 = arith.addf %167, %166 : vector<2x32xf32>
    %169 = arith.divf %167, %168 : vector<2x32xf32>
    %170 = arith.negf %162 : vector<2x32xf32>
    %171 = math.exp %170 : vector<2x32xf32>
    %cst_38 = arith.constant 1.000000e+00 : f32
    %172 = vector.broadcast %cst_38 : f32 to vector<2x32xf32>
    %173 = arith.addf %172, %171 : vector<2x32xf32>
    %174 = arith.divf %172, %173 : vector<2x32xf32>
    %175 = vector.broadcast %3 : vector<1x32xf32> to vector<2x32xf32>
    %176 = arith.addf %164, %175 : vector<2x32xf32>
    %177 = arith.mulf %169, %176 : vector<2x32xf32>
    %178 = arith.addf %163, %177 : vector<2x32xf32>
    %179 = math.tanh %178 : vector<2x32xf32>
    %cst_39 = arith.constant 1.000000e+00 : f32
    %180 = vector.broadcast %cst_39 : f32 to vector<2x32xf32>
    %181 = arith.subf %180, %174 : vector<2x32xf32>
    %182 = arith.mulf %181, %179 : vector<2x32xf32>
    %183 = arith.mulf %174, %149 : vector<2x32xf32>
    %184 = arith.addf %182, %183 : vector<2x32xf32>
    %185 = vector.extract_strided_slice %0 {offsets = [0, 5], sizes = [2, 1], strides = [1, 1]} : vector<2x8xi32> to vector<2x1xi32>
    %186 = vector.broadcast %185 : vector<2x1xi32> to vector<2x16xi32>
    %187 = arith.cmpi eq, %8, %186 : vector<2x16xi32>
    %188 = arith.extui %187 : vector<2x16xi1> to vector<2x16xi32>
    %189 = arith.sitofp %188 : vector<2x16xi32> to vector<2x16xf32>
    %cst_40 = arith.constant dense<0.000000e+00> : vector<2x128xf32>
    %190 = tpu.matmul %189, %1, %cst_40 {dimension_numbers = #tpu.dot_dimension_numbers<[1], [0], [0], [1], [0, 0, 1, 1], [], []>} : vector<2x16xf32>, vector<16x128xf32>, vector<2x128xf32> -> vector<2x128xf32>
    %cst_41 = arith.constant dense<0.000000e+00> : vector<2x128xf32>
    %191 = tpu.matmul %184, %2, %cst_41 {dimension_numbers = #tpu.dot_dimension_numbers<[1], [0], [0], [1], [0, 0, 1, 1], [], []>} : vector<2x32xf32>, vector<32x128xf32>, vector<2x128xf32> -> vector<2x128xf32>
    %192 = vector.extract_strided_slice %190 {offsets = [0, 0], sizes = [2, 32], strides = [1, 1]} : vector<2x128xf32> to vector<2x32xf32>
    %193 = vector.extract_strided_slice %191 {offsets = [0, 0], sizes = [2, 32], strides = [1, 1]} : vector<2x128xf32> to vector<2x32xf32>
    %194 = arith.addf %192, %193 : vector<2x32xf32>
    %195 = vector.extract_strided_slice %190 {offsets = [0, 32], sizes = [2, 32], strides = [1, 1]} : vector<2x128xf32> to vector<2x32xf32>
    %196 = vector.extract_strided_slice %191 {offsets = [0, 32], sizes = [2, 32], strides = [1, 1]} : vector<2x128xf32> to vector<2x32xf32>
    %197 = arith.addf %195, %196 : vector<2x32xf32>
    %198 = vector.extract_strided_slice %190 {offsets = [0, 64], sizes = [2, 32], strides = [1, 1]} : vector<2x128xf32> to vector<2x32xf32>
    %199 = vector.extract_strided_slice %191 {offsets = [0, 64], sizes = [2, 32], strides = [1, 1]} : vector<2x128xf32> to vector<2x32xf32>
    %200 = arith.negf %194 : vector<2x32xf32>
    %201 = math.exp %200 : vector<2x32xf32>
    %cst_42 = arith.constant 1.000000e+00 : f32
    %202 = vector.broadcast %cst_42 : f32 to vector<2x32xf32>
    %203 = arith.addf %202, %201 : vector<2x32xf32>
    %204 = arith.divf %202, %203 : vector<2x32xf32>
    %205 = arith.negf %197 : vector<2x32xf32>
    %206 = math.exp %205 : vector<2x32xf32>
    %cst_43 = arith.constant 1.000000e+00 : f32
    %207 = vector.broadcast %cst_43 : f32 to vector<2x32xf32>
    %208 = arith.addf %207, %206 : vector<2x32xf32>
    %209 = arith.divf %207, %208 : vector<2x32xf32>
    %210 = vector.broadcast %3 : vector<1x32xf32> to vector<2x32xf32>
    %211 = arith.addf %199, %210 : vector<2x32xf32>
    %212 = arith.mulf %204, %211 : vector<2x32xf32>
    %213 = arith.addf %198, %212 : vector<2x32xf32>
    %214 = math.tanh %213 : vector<2x32xf32>
    %cst_44 = arith.constant 1.000000e+00 : f32
    %215 = vector.broadcast %cst_44 : f32 to vector<2x32xf32>
    %216 = arith.subf %215, %209 : vector<2x32xf32>
    %217 = arith.mulf %216, %214 : vector<2x32xf32>
    %218 = arith.mulf %209, %184 : vector<2x32xf32>
    %219 = arith.addf %217, %218 : vector<2x32xf32>
    %220 = vector.extract_strided_slice %0 {offsets = [0, 6], sizes = [2, 1], strides = [1, 1]} : vector<2x8xi32> to vector<2x1xi32>
    %221 = vector.broadcast %220 : vector<2x1xi32> to vector<2x16xi32>
    %222 = arith.cmpi eq, %8, %221 : vector<2x16xi32>
    %223 = arith.extui %222 : vector<2x16xi1> to vector<2x16xi32>
    %224 = arith.sitofp %223 : vector<2x16xi32> to vector<2x16xf32>
    %cst_45 = arith.constant dense<0.000000e+00> : vector<2x128xf32>
    %225 = tpu.matmul %224, %1, %cst_45 {dimension_numbers = #tpu.dot_dimension_numbers<[1], [0], [0], [1], [0, 0, 1, 1], [], []>} : vector<2x16xf32>, vector<16x128xf32>, vector<2x128xf32> -> vector<2x128xf32>
    %cst_46 = arith.constant dense<0.000000e+00> : vector<2x128xf32>
    %226 = tpu.matmul %219, %2, %cst_46 {dimension_numbers = #tpu.dot_dimension_numbers<[1], [0], [0], [1], [0, 0, 1, 1], [], []>} : vector<2x32xf32>, vector<32x128xf32>, vector<2x128xf32> -> vector<2x128xf32>
    %227 = vector.extract_strided_slice %225 {offsets = [0, 0], sizes = [2, 32], strides = [1, 1]} : vector<2x128xf32> to vector<2x32xf32>
    %228 = vector.extract_strided_slice %226 {offsets = [0, 0], sizes = [2, 32], strides = [1, 1]} : vector<2x128xf32> to vector<2x32xf32>
    %229 = arith.addf %227, %228 : vector<2x32xf32>
    %230 = vector.extract_strided_slice %225 {offsets = [0, 32], sizes = [2, 32], strides = [1, 1]} : vector<2x128xf32> to vector<2x32xf32>
    %231 = vector.extract_strided_slice %226 {offsets = [0, 32], sizes = [2, 32], strides = [1, 1]} : vector<2x128xf32> to vector<2x32xf32>
    %232 = arith.addf %230, %231 : vector<2x32xf32>
    %233 = vector.extract_strided_slice %225 {offsets = [0, 64], sizes = [2, 32], strides = [1, 1]} : vector<2x128xf32> to vector<2x32xf32>
    %234 = vector.extract_strided_slice %226 {offsets = [0, 64], sizes = [2, 32], strides = [1, 1]} : vector<2x128xf32> to vector<2x32xf32>
    %235 = arith.negf %229 : vector<2x32xf32>
    %236 = math.exp %235 : vector<2x32xf32>
    %cst_47 = arith.constant 1.000000e+00 : f32
    %237 = vector.broadcast %cst_47 : f32 to vector<2x32xf32>
    %238 = arith.addf %237, %236 : vector<2x32xf32>
    %239 = arith.divf %237, %238 : vector<2x32xf32>
    %240 = arith.negf %232 : vector<2x32xf32>
    %241 = math.exp %240 : vector<2x32xf32>
    %cst_48 = arith.constant 1.000000e+00 : f32
    %242 = vector.broadcast %cst_48 : f32 to vector<2x32xf32>
    %243 = arith.addf %242, %241 : vector<2x32xf32>
    %244 = arith.divf %242, %243 : vector<2x32xf32>
    %245 = vector.broadcast %3 : vector<1x32xf32> to vector<2x32xf32>
    %246 = arith.addf %234, %245 : vector<2x32xf32>
    %247 = arith.mulf %239, %246 : vector<2x32xf32>
    %248 = arith.addf %233, %247 : vector<2x32xf32>
    %249 = math.tanh %248 : vector<2x32xf32>
    %cst_49 = arith.constant 1.000000e+00 : f32
    %250 = vector.broadcast %cst_49 : f32 to vector<2x32xf32>
    %251 = arith.subf %250, %244 : vector<2x32xf32>
    %252 = arith.mulf %251, %249 : vector<2x32xf32>
    %253 = arith.mulf %244, %219 : vector<2x32xf32>
    %254 = arith.addf %252, %253 : vector<2x32xf32>
    %255 = vector.extract_strided_slice %0 {offsets = [0, 7], sizes = [2, 1], strides = [1, 1]} : vector<2x8xi32> to vector<2x1xi32>
    %256 = vector.broadcast %255 : vector<2x1xi32> to vector<2x16xi32>
    %257 = arith.cmpi eq, %8, %256 : vector<2x16xi32>
    %258 = arith.extui %257 : vector<2x16xi1> to vector<2x16xi32>
    %259 = arith.sitofp %258 : vector<2x16xi32> to vector<2x16xf32>
    %cst_50 = arith.constant dense<0.000000e+00> : vector<2x128xf32>
    %260 = tpu.matmul %259, %1, %cst_50 {dimension_numbers = #tpu.dot_dimension_numbers<[1], [0], [0], [1], [0, 0, 1, 1], [], []>} : vector<2x16xf32>, vector<16x128xf32>, vector<2x128xf32> -> vector<2x128xf32>
    %cst_51 = arith.constant dense<0.000000e+00> : vector<2x128xf32>
    %261 = tpu.matmul %254, %2, %cst_51 {dimension_numbers = #tpu.dot_dimension_numbers<[1], [0], [0], [1], [0, 0, 1, 1], [], []>} : vector<2x32xf32>, vector<32x128xf32>, vector<2x128xf32> -> vector<2x128xf32>
    %262 = vector.extract_strided_slice %260 {offsets = [0, 0], sizes = [2, 32], strides = [1, 1]} : vector<2x128xf32> to vector<2x32xf32>
    %263 = vector.extract_strided_slice %261 {offsets = [0, 0], sizes = [2, 32], strides = [1, 1]} : vector<2x128xf32> to vector<2x32xf32>
    %264 = arith.addf %262, %263 : vector<2x32xf32>
    %265 = vector.extract_strided_slice %260 {offsets = [0, 32], sizes = [2, 32], strides = [1, 1]} : vector<2x128xf32> to vector<2x32xf32>
    %266 = vector.extract_strided_slice %261 {offsets = [0, 32], sizes = [2, 32], strides = [1, 1]} : vector<2x128xf32> to vector<2x32xf32>
    %267 = arith.addf %265, %266 : vector<2x32xf32>
    %268 = vector.extract_strided_slice %260 {offsets = [0, 64], sizes = [2, 32], strides = [1, 1]} : vector<2x128xf32> to vector<2x32xf32>
    %269 = vector.extract_strided_slice %261 {offsets = [0, 64], sizes = [2, 32], strides = [1, 1]} : vector<2x128xf32> to vector<2x32xf32>
    %270 = arith.negf %264 : vector<2x32xf32>
    %271 = math.exp %270 : vector<2x32xf32>
    %cst_52 = arith.constant 1.000000e+00 : f32
    %272 = vector.broadcast %cst_52 : f32 to vector<2x32xf32>
    %273 = arith.addf %272, %271 : vector<2x32xf32>
    %274 = arith.divf %272, %273 : vector<2x32xf32>
    %275 = arith.negf %267 : vector<2x32xf32>
    %276 = math.exp %275 : vector<2x32xf32>
    %cst_53 = arith.constant 1.000000e+00 : f32
    %277 = vector.broadcast %cst_53 : f32 to vector<2x32xf32>
    %278 = arith.addf %277, %276 : vector<2x32xf32>
    %279 = arith.divf %277, %278 : vector<2x32xf32>
    %280 = vector.broadcast %3 : vector<1x32xf32> to vector<2x32xf32>
    %281 = arith.addf %269, %280 : vector<2x32xf32>
    %282 = arith.mulf %274, %281 : vector<2x32xf32>
    %283 = arith.addf %268, %282 : vector<2x32xf32>
    %284 = math.tanh %283 : vector<2x32xf32>
    %cst_54 = arith.constant 1.000000e+00 : f32
    %285 = vector.broadcast %cst_54 : f32 to vector<2x32xf32>
    %286 = arith.subf %285, %279 : vector<2x32xf32>
    %287 = arith.mulf %286, %284 : vector<2x32xf32>
    %288 = arith.mulf %279, %254 : vector<2x32xf32>
    %289 = arith.addf %287, %288 : vector<2x32xf32>
    %c0_i32 = arith.constant 0 : i32
    %290 = vector.broadcast %c0_i32 : i32 to vector<2x16xi32>
    %291 = arith.cmpi eq, %8, %290 : vector<2x16xi32>
    %292 = arith.extui %291 : vector<2x16xi1> to vector<2x16xi32>
    %293 = arith.sitofp %292 : vector<2x16xi32> to vector<2x16xf32>
    %294 = tpu.concatenate %293, %289 in 1 : vector<2x16xf32>, vector<2x32xf32> -> vector<2x48xf32>
    %cst_55 = arith.constant dense<0.000000e+00> : vector<2x128xf32>
    %295 = tpu.matmul %294, %4, %cst_55 {dimension_numbers = #tpu.dot_dimension_numbers<[1], [0], [0], [1], [0, 0, 1, 1], [], []>} : vector<2x48xf32>, vector<48x128xf32>, vector<2x128xf32> -> vector<2x128xf32>
    %296 = vector.extract_strided_slice %295 {offsets = [0, 0], sizes = [2, 32], strides = [1, 1]} : vector<2x128xf32> to vector<2x32xf32>
    %297 = vector.extract_strided_slice %295 {offsets = [0, 32], sizes = [2, 32], strides = [1, 1]} : vector<2x128xf32> to vector<2x32xf32>
    %298 = vector.extract_strided_slice %295 {offsets = [0, 64], sizes = [2, 32], strides = [1, 1]} : vector<2x128xf32> to vector<2x32xf32>
    %299 = vector.extract_strided_slice %295 {offsets = [0, 96], sizes = [2, 32], strides = [1, 1]} : vector<2x128xf32> to vector<2x32xf32>
    %300 = arith.negf %296 : vector<2x32xf32>
    %301 = math.exp %300 : vector<2x32xf32>
    %cst_56 = arith.constant 1.000000e+00 : f32
    %302 = vector.broadcast %cst_56 : f32 to vector<2x32xf32>
    %303 = arith.addf %302, %301 : vector<2x32xf32>
    %304 = arith.divf %302, %303 : vector<2x32xf32>
    %305 = arith.negf %297 : vector<2x32xf32>
    %306 = math.exp %305 : vector<2x32xf32>
    %cst_57 = arith.constant 1.000000e+00 : f32
    %307 = vector.broadcast %cst_57 : f32 to vector<2x32xf32>
    %308 = arith.addf %307, %306 : vector<2x32xf32>
    %309 = arith.divf %307, %308 : vector<2x32xf32>
    %310 = vector.broadcast %5 : vector<1x32xf32> to vector<2x32xf32>
    %311 = arith.addf %299, %310 : vector<2x32xf32>
    %312 = arith.mulf %304, %311 : vector<2x32xf32>
    %313 = arith.addf %298, %312 : vector<2x32xf32>
    %314 = math.tanh %313 : vector<2x32xf32>
    %cst_58 = arith.constant 1.000000e+00 : f32
    %315 = vector.broadcast %cst_58 : f32 to vector<2x32xf32>
    %316 = arith.subf %315, %309 : vector<2x32xf32>
    %317 = arith.mulf %316, %314 : vector<2x32xf32>
    %318 = arith.mulf %309, %289 : vector<2x32xf32>
    %319 = arith.addf %317, %318 : vector<2x32xf32>
    %cst_59 = arith.constant dense<0.000000e+00> : vector<2x16xf32>
    %320 = tpu.matmul %319, %6, %cst_59 {dimension_numbers = #tpu.dot_dimension_numbers<[1], [0], [0], [1], [0, 0, 1, 1], [], []>} : vector<2x32xf32>, vector<32x16xf32>, vector<2x16xf32> -> vector<2x16xf32>
    %321 = vector.broadcast %7 : vector<1x16xf32> to vector<2x16xf32>
    %322 = arith.addf %320, %321 : vector<2x16xf32>
    %cst_60 = arith.constant dense<0xFF800000> : vector<2xf32>
    %323 = vector.multi_reduction <maximumf>, %322, %cst_60 [1] : vector<2x16xf32> to vector<2xf32>
    %324 = vector.shape_cast %323 : vector<2xf32> to vector<2x1xf32>
    %325 = vector.broadcast %324 : vector<2x1xf32> to vector<2x16xf32>
    %326 = arith.subf %322, %325 : vector<2x16xf32>
    %327 = math.exp %326 : vector<2x16xf32>
    %cst_61 = arith.constant dense<0.000000e+00> : vector<2xf32>
    %328 = vector.multi_reduction <add>, %327, %cst_61 [1] : vector<2x16xf32> to vector<2xf32>
    %329 = vector.shape_cast %328 : vector<2xf32> to vector<2x1xf32>
    %330 = math.log %329 : vector<2x1xf32>
    %331 = arith.addf %330, %324 : vector<2x1xf32>
    %332 = vector.broadcast %331 : vector<2x1xf32> to vector<2x16xf32>
    %333 = arith.subf %322, %332 : vector<2x16xf32>
    %c0_62 = arith.constant 0 : index
    %c0_63 = arith.constant 0 : index
    %334 = vector.load %arg8[%c0_62, %c0_63] : memref<2x128xf32, #tpu.memory_space<vmem>>, vector<2x16xf32>
    tpu.vector_store %arg8[%c0_62, %c0_63], %333 {strides = array<i32>} : memref<2x128xf32, #tpu.memory_space<vmem>>, vector<2x16xf32>,
    %335 = vector.broadcast %324 : vector<2x1xf32> to vector<2x16xf32>
    %336 = arith.cmpf oeq, %322, %335 : vector<2x16xf32>
    %c16_i32 = arith.constant 16 : i32
    %337 = vector.broadcast %c16_i32 : i32 to vector<2x16xi32>
    %338 = arith.select %336, %8, %337 : vector<2x16xi1>, vector<2x16xi32>
    %cst_64 = arith.constant dense<2147483647> : vector<2xi32>
    %339 = vector.multi_reduction <minsi>, %338, %cst_64 [1] : vector<2x16xi32> to vector<2xi32>
    %340 = vector.shape_cast %339 : vector<2xi32> to vector<2x1xi32>
    %341 = vector.broadcast %340 : vector<2x1xi32> to vector<2x16xi32>
    %342 = arith.cmpi eq, %8, %341 : vector<2x16xi32>
    %343 = arith.extui %342 : vector<2x16xi1> to vector<2x16xi32>
    %344 = arith.sitofp %343 : vector<2x16xi32> to vector<2x16xf32>
    %345 = tpu.concatenate %344, %319 in 1 : vector<2x16xf32>, vector<2x32xf32> -> vector<2x48xf32>
    %cst_65 = arith.constant dense<0.000000e+00> : vector<2x128xf32>
    %346 = tpu.matmul %345, %4, %cst_65 {dimension_numbers = #tpu.dot_dimension_numbers<[1], [0], [0], [1], [0, 0, 1, 1], [], []>} : vector<2x48xf32>, vector<48x128xf32>, vector<2x128xf32> -> vector<2x128xf32>
    %347 = vector.extract_strided_slice %346 {offsets = [0, 0], sizes = [2, 32], strides = [1, 1]} : vector<2x128xf32> to vector<2x32xf32>
    %348 = vector.extract_strided_slice %346 {offsets = [0, 32], sizes = [2, 32], strides = [1, 1]} : vector<2x128xf32> to vector<2x32xf32>
    %349 = vector.extract_strided_slice %346 {offsets = [0, 64], sizes = [2, 32], strides = [1, 1]} : vector<2x128xf32> to vector<2x32xf32>
    %350 = vector.extract_strided_slice %346 {offsets = [0, 96], sizes = [2, 32], strides = [1, 1]} : vector<2x128xf32> to vector<2x32xf32>
    %351 = arith.negf %347 : vector<2x32xf32>
    %352 = math.exp %351 : vector<2x32xf32>
    %cst_66 = arith.constant 1.000000e+00 : f32
    %353 = vector.broadcast %cst_66 : f32 to vector<2x32xf32>
    %354 = arith.addf %353, %352 : vector<2x32xf32>
    %355 = arith.divf %353, %354 : vector<2x32xf32>
    %356 = arith.negf %348 : vector<2x32xf32>
    %357 = math.exp %356 : vector<2x32xf32>
    %cst_67 = arith.constant 1.000000e+00 : f32
    %358 = vector.broadcast %cst_67 : f32 to vector<2x32xf32>
    %359 = arith.addf %358, %357 : vector<2x32xf32>
    %360 = arith.divf %358, %359 : vector<2x32xf32>
    %361 = vector.broadcast %5 : vector<1x32xf32> to vector<2x32xf32>
    %362 = arith.addf %350, %361 : vector<2x32xf32>
    %363 = arith.mulf %355, %362 : vector<2x32xf32>
    %364 = arith.addf %349, %363 : vector<2x32xf32>
    %365 = math.tanh %364 : vector<2x32xf32>
    %cst_68 = arith.constant 1.000000e+00 : f32
    %366 = vector.broadcast %cst_68 : f32 to vector<2x32xf32>
    %367 = arith.subf %366, %360 : vector<2x32xf32>
    %368 = arith.mulf %367, %365 : vector<2x32xf32>
    %369 = arith.mulf %360, %319 : vector<2x32xf32>
    %370 = arith.addf %368, %369 : vector<2x32xf32>
    %cst_69 = arith.constant dense<0.000000e+00> : vector<2x16xf32>
    %371 = tpu.matmul %370, %6, %cst_69 {dimension_numbers = #tpu.dot_dimension_numbers<[1], [0], [0], [1], [0, 0, 1, 1], [], []>} : vector<2x32xf32>, vector<32x16xf32>, vector<2x16xf32> -> vector<2x16xf32>
    %372 = vector.broadcast %7 : vector<1x16xf32> to vector<2x16xf32>
    %373 = arith.addf %371, %372 : vector<2x16xf32>
    %cst_70 = arith.constant dense<0xFF800000> : vector<2xf32>
    %374 = vector.multi_reduction <maximumf>, %373, %cst_70 [1] : vector<2x16xf32> to vector<2xf32>
    %375 = vector.shape_cast %374 : vector<2xf32> to vector<2x1xf32>
    %376 = vector.broadcast %375 : vector<2x1xf32> to vector<2x16xf32>
    %377 = arith.subf %373, %376 : vector<2x16xf32>
    %378 = math.exp %377 : vector<2x16xf32>
    %cst_71 = arith.constant dense<0.000000e+00> : vector<2xf32>
    %379 = vector.multi_reduction <add>, %378, %cst_71 [1] : vector<2x16xf32> to vector<2xf32>
    %380 = vector.shape_cast %379 : vector<2xf32> to vector<2x1xf32>
    %381 = math.log %380 : vector<2x1xf32>
    %382 = arith.addf %381, %375 : vector<2x1xf32>
    %383 = vector.broadcast %382 : vector<2x1xf32> to vector<2x16xf32>
    %384 = arith.subf %373, %383 : vector<2x16xf32>
    %c0_72 = arith.constant 0 : index
    %c16 = arith.constant 16 : index
    %385 = vector.load %arg8[%c0_72, %c16] : memref<2x128xf32, #tpu.memory_space<vmem>>, vector<2x16xf32>
    tpu.vector_store %arg8[%c0_72, %c16], %384 {strides = array<i32>} : memref<2x128xf32, #tpu.memory_space<vmem>>, vector<2x16xf32>,
    %386 = vector.broadcast %375 : vector<2x1xf32> to vector<2x16xf32>
    %387 = arith.cmpf oeq, %373, %386 : vector<2x16xf32>
    %c16_i32_73 = arith.constant 16 : i32
    %388 = vector.broadcast %c16_i32_73 : i32 to vector<2x16xi32>
    %389 = arith.select %387, %8, %388 : vector<2x16xi1>, vector<2x16xi32>
    %cst_74 = arith.constant dense<2147483647> : vector<2xi32>
    %390 = vector.multi_reduction <minsi>, %389, %cst_74 [1] : vector<2x16xi32> to vector<2xi32>
    %391 = vector.shape_cast %390 : vector<2xi32> to vector<2x1xi32>
    %392 = vector.broadcast %391 : vector<2x1xi32> to vector<2x16xi32>
    %393 = arith.cmpi eq, %8, %392 : vector<2x16xi32>
    %394 = arith.extui %393 : vector<2x16xi1> to vector<2x16xi32>
    %395 = arith.sitofp %394 : vector<2x16xi32> to vector<2x16xf32>
    %396 = tpu.concatenate %395, %370 in 1 : vector<2x16xf32>, vector<2x32xf32> -> vector<2x48xf32>
    %cst_75 = arith.constant dense<0.000000e+00> : vector<2x128xf32>
    %397 = tpu.matmul %396, %4, %cst_75 {dimension_numbers = #tpu.dot_dimension_numbers<[1], [0], [0], [1], [0, 0, 1, 1], [], []>} : vector<2x48xf32>, vector<48x128xf32>, vector<2x128xf32> -> vector<2x128xf32>
    %398 = vector.extract_strided_slice %397 {offsets = [0, 0], sizes = [2, 32], strides = [1, 1]} : vector<2x128xf32> to vector<2x32xf32>
    %399 = vector.extract_strided_slice %397 {offsets = [0, 32], sizes = [2, 32], strides = [1, 1]} : vector<2x128xf32> to vector<2x32xf32>
    %400 = vector.extract_strided_slice %397 {offsets = [0, 64], sizes = [2, 32], strides = [1, 1]} : vector<2x128xf32> to vector<2x32xf32>
    %401 = vector.extract_strided_slice %397 {offsets = [0, 96], sizes = [2, 32], strides = [1, 1]} : vector<2x128xf32> to vector<2x32xf32>
    %402 = arith.negf %398 : vector<2x32xf32>
    %403 = math.exp %402 : vector<2x32xf32>
    %cst_76 = arith.constant 1.000000e+00 : f32
    %404 = vector.broadcast %cst_76 : f32 to vector<2x32xf32>
    %405 = arith.addf %404, %403 : vector<2x32xf32>
    %406 = arith.divf %404, %405 : vector<2x32xf32>
    %407 = arith.negf %399 : vector<2x32xf32>
    %408 = math.exp %407 : vector<2x32xf32>
    %cst_77 = arith.constant 1.000000e+00 : f32
    %409 = vector.broadcast %cst_77 : f32 to vector<2x32xf32>
    %410 = arith.addf %409, %408 : vector<2x32xf32>
    %411 = arith.divf %409, %410 : vector<2x32xf32>
    %412 = vector.broadcast %5 : vector<1x32xf32> to vector<2x32xf32>
    %413 = arith.addf %401, %412 : vector<2x32xf32>
    %414 = arith.mulf %406, %413 : vector<2x32xf32>
    %415 = arith.addf %400, %414 : vector<2x32xf32>
    %416 = math.tanh %415 : vector<2x32xf32>
    %cst_78 = arith.constant 1.000000e+00 : f32
    %417 = vector.broadcast %cst_78 : f32 to vector<2x32xf32>
    %418 = arith.subf %417, %411 : vector<2x32xf32>
    %419 = arith.mulf %418, %416 : vector<2x32xf32>
    %420 = arith.mulf %411, %370 : vector<2x32xf32>
    %421 = arith.addf %419, %420 : vector<2x32xf32>
    %cst_79 = arith.constant dense<0.000000e+00> : vector<2x16xf32>
    %422 = tpu.matmul %421, %6, %cst_79 {dimension_numbers = #tpu.dot_dimension_numbers<[1], [0], [0], [1], [0, 0, 1, 1], [], []>} : vector<2x32xf32>, vector<32x16xf32>, vector<2x16xf32> -> vector<2x16xf32>
    %423 = vector.broadcast %7 : vector<1x16xf32> to vector<2x16xf32>
    %424 = arith.addf %422, %423 : vector<2x16xf32>
    %cst_80 = arith.constant dense<0xFF800000> : vector<2xf32>
    %425 = vector.multi_reduction <maximumf>, %424, %cst_80 [1] : vector<2x16xf32> to vector<2xf32>
    %426 = vector.shape_cast %425 : vector<2xf32> to vector<2x1xf32>
    %427 = vector.broadcast %426 : vector<2x1xf32> to vector<2x16xf32>
    %428 = arith.subf %424, %427 : vector<2x16xf32>
    %429 = math.exp %428 : vector<2x16xf32>
    %cst_81 = arith.constant dense<0.000000e+00> : vector<2xf32>
    %430 = vector.multi_reduction <add>, %429, %cst_81 [1] : vector<2x16xf32> to vector<2xf32>
    %431 = vector.shape_cast %430 : vector<2xf32> to vector<2x1xf32>
    %432 = math.log %431 : vector<2x1xf32>
    %433 = arith.addf %432, %426 : vector<2x1xf32>
    %434 = vector.broadcast %433 : vector<2x1xf32> to vector<2x16xf32>
    %435 = arith.subf %424, %434 : vector<2x16xf32>
    %c0_82 = arith.constant 0 : index
    %c32 = arith.constant 32 : index
    %436 = vector.load %arg8[%c0_82, %c32] : memref<2x128xf32, #tpu.memory_space<vmem>>, vector<2x16xf32>
    tpu.vector_store %arg8[%c0_82, %c32], %435 {strides = array<i32>} : memref<2x128xf32, #tpu.memory_space<vmem>>, vector<2x16xf32>,
    %437 = vector.broadcast %426 : vector<2x1xf32> to vector<2x16xf32>
    %438 = arith.cmpf oeq, %424, %437 : vector<2x16xf32>
    %c16_i32_83 = arith.constant 16 : i32
    %439 = vector.broadcast %c16_i32_83 : i32 to vector<2x16xi32>
    %440 = arith.select %438, %8, %439 : vector<2x16xi1>, vector<2x16xi32>
    %cst_84 = arith.constant dense<2147483647> : vector<2xi32>
    %441 = vector.multi_reduction <minsi>, %440, %cst_84 [1] : vector<2x16xi32> to vector<2xi32>
    %442 = vector.shape_cast %441 : vector<2xi32> to vector<2x1xi32>
    %443 = vector.broadcast %442 : vector<2x1xi32> to vector<2x16xi32>
    %444 = arith.cmpi eq, %8, %443 : vector<2x16xi32>
    %445 = arith.extui %444 : vector<2x16xi1> to vector<2x16xi32>
    %446 = arith.sitofp %445 : vector<2x16xi32> to vector<2x16xf32>
    %447 = tpu.concatenate %446, %421 in 1 : vector<2x16xf32>, vector<2x32xf32> -> vector<2x48xf32>
    %cst_85 = arith.constant dense<0.000000e+00> : vector<2x128xf32>
    %448 = tpu.matmul %447, %4, %cst_85 {dimension_numbers = #tpu.dot_dimension_numbers<[1], [0], [0], [1], [0, 0, 1, 1], [], []>} : vector<2x48xf32>, vector<48x128xf32>, vector<2x128xf32> -> vector<2x128xf32>
    %449 = vector.extract_strided_slice %448 {offsets = [0, 0], sizes = [2, 32], strides = [1, 1]} : vector<2x128xf32> to vector<2x32xf32>
    %450 = vector.extract_strided_slice %448 {offsets = [0, 32], sizes = [2, 32], strides = [1, 1]} : vector<2x128xf32> to vector<2x32xf32>
    %451 = vector.extract_strided_slice %448 {offsets = [0, 64], sizes = [2, 32], strides = [1, 1]} : vector<2x128xf32> to vector<2x32xf32>
    %452 = vector.extract_strided_slice %448 {offsets = [0, 96], sizes = [2, 32], strides = [1, 1]} : vector<2x128xf32> to vector<2x32xf32>
    %453 = arith.negf %449 : vector<2x32xf32>
    %454 = math.exp %453 : vector<2x32xf32>
    %cst_86 = arith.constant 1.000000e+00 : f32
    %455 = vector.broadcast %cst_86 : f32 to vector<2x32xf32>
    %456 = arith.addf %455, %454 : vector<2x32xf32>
    %457 = arith.divf %455, %456 : vector<2x32xf32>
    %458 = arith.negf %450 : vector<2x32xf32>
    %459 = math.exp %458 : vector<2x32xf32>
    %cst_87 = arith.constant 1.000000e+00 : f32
    %460 = vector.broadcast %cst_87 : f32 to vector<2x32xf32>
    %461 = arith.addf %460, %459 : vector<2x32xf32>
    %462 = arith.divf %460, %461 : vector<2x32xf32>
    %463 = vector.broadcast %5 : vector<1x32xf32> to vector<2x32xf32>
    %464 = arith.addf %452, %463 : vector<2x32xf32>
    %465 = arith.mulf %457, %464 : vector<2x32xf32>
    %466 = arith.addf %451, %465 : vector<2x32xf32>
    %467 = math.tanh %466 : vector<2x32xf32>
    %cst_88 = arith.constant 1.000000e+00 : f32
    %468 = vector.broadcast %cst_88 : f32 to vector<2x32xf32>
    %469 = arith.subf %468, %462 : vector<2x32xf32>
    %470 = arith.mulf %469, %467 : vector<2x32xf32>
    %471 = arith.mulf %462, %421 : vector<2x32xf32>
    %472 = arith.addf %470, %471 : vector<2x32xf32>
    %cst_89 = arith.constant dense<0.000000e+00> : vector<2x16xf32>
    %473 = tpu.matmul %472, %6, %cst_89 {dimension_numbers = #tpu.dot_dimension_numbers<[1], [0], [0], [1], [0, 0, 1, 1], [], []>} : vector<2x32xf32>, vector<32x16xf32>, vector<2x16xf32> -> vector<2x16xf32>
    %474 = vector.broadcast %7 : vector<1x16xf32> to vector<2x16xf32>
    %475 = arith.addf %473, %474 : vector<2x16xf32>
    %cst_90 = arith.constant dense<0xFF800000> : vector<2xf32>
    %476 = vector.multi_reduction <maximumf>, %475, %cst_90 [1] : vector<2x16xf32> to vector<2xf32>
    %477 = vector.shape_cast %476 : vector<2xf32> to vector<2x1xf32>
    %478 = vector.broadcast %477 : vector<2x1xf32> to vector<2x16xf32>
    %479 = arith.subf %475, %478 : vector<2x16xf32>
    %480 = math.exp %479 : vector<2x16xf32>
    %cst_91 = arith.constant dense<0.000000e+00> : vector<2xf32>
    %481 = vector.multi_reduction <add>, %480, %cst_91 [1] : vector<2x16xf32> to vector<2xf32>
    %482 = vector.shape_cast %481 : vector<2xf32> to vector<2x1xf32>
    %483 = math.log %482 : vector<2x1xf32>
    %484 = arith.addf %483, %477 : vector<2x1xf32>
    %485 = vector.broadcast %484 : vector<2x1xf32> to vector<2x16xf32>
    %486 = arith.subf %475, %485 : vector<2x16xf32>
    %c0_92 = arith.constant 0 : index
    %c48 = arith.constant 48 : index
    %487 = vector.load %arg8[%c0_92, %c48] : memref<2x128xf32, #tpu.memory_space<vmem>>, vector<2x16xf32>
    tpu.vector_store %arg8[%c0_92, %c48], %486 {strides = array<i32>} : memref<2x128xf32, #tpu.memory_space<vmem>>, vector<2x16xf32>,
    %488 = vector.broadcast %477 : vector<2x1xf32> to vector<2x16xf32>
    %489 = arith.cmpf oeq, %475, %488 : vector<2x16xf32>
    %c16_i32_93 = arith.constant 16 : i32
    %490 = vector.broadcast %c16_i32_93 : i32 to vector<2x16xi32>
    %491 = arith.select %489, %8, %490 : vector<2x16xi1>, vector<2x16xi32>
    %cst_94 = arith.constant dense<2147483647> : vector<2xi32>
    %492 = vector.multi_reduction <minsi>, %491, %cst_94 [1] : vector<2x16xi32> to vector<2xi32>
    %493 = vector.shape_cast %492 : vector<2xi32> to vector<2x1xi32>
    %494 = vector.broadcast %493 : vector<2x1xi32> to vector<2x16xi32>
    %495 = arith.cmpi eq, %8, %494 : vector<2x16xi32>
    %496 = arith.extui %495 : vector<2x16xi1> to vector<2x16xi32>
    %497 = arith.sitofp %496 : vector<2x16xi32> to vector<2x16xf32>
    %498 = tpu.concatenate %497, %472 in 1 : vector<2x16xf32>, vector<2x32xf32> -> vector<2x48xf32>
    %cst_95 = arith.constant dense<0.000000e+00> : vector<2x128xf32>
    %499 = tpu.matmul %498, %4, %cst_95 {dimension_numbers = #tpu.dot_dimension_numbers<[1], [0], [0], [1], [0, 0, 1, 1], [], []>} : vector<2x48xf32>, vector<48x128xf32>, vector<2x128xf32> -> vector<2x128xf32>
    %500 = vector.extract_strided_slice %499 {offsets = [0, 0], sizes = [2, 32], strides = [1, 1]} : vector<2x128xf32> to vector<2x32xf32>
    %501 = vector.extract_strided_slice %499 {offsets = [0, 32], sizes = [2, 32], strides = [1, 1]} : vector<2x128xf32> to vector<2x32xf32>
    %502 = vector.extract_strided_slice %499 {offsets = [0, 64], sizes = [2, 32], strides = [1, 1]} : vector<2x128xf32> to vector<2x32xf32>
    %503 = vector.extract_strided_slice %499 {offsets = [0, 96], sizes = [2, 32], strides = [1, 1]} : vector<2x128xf32> to vector<2x32xf32>
    %504 = arith.negf %500 : vector<2x32xf32>
    %505 = math.exp %504 : vector<2x32xf32>
    %cst_96 = arith.constant 1.000000e+00 : f32
    %506 = vector.broadcast %cst_96 : f32 to vector<2x32xf32>
    %507 = arith.addf %506, %505 : vector<2x32xf32>
    %508 = arith.divf %506, %507 : vector<2x32xf32>
    %509 = arith.negf %501 : vector<2x32xf32>
    %510 = math.exp %509 : vector<2x32xf32>
    %cst_97 = arith.constant 1.000000e+00 : f32
    %511 = vector.broadcast %cst_97 : f32 to vector<2x32xf32>
    %512 = arith.addf %511, %510 : vector<2x32xf32>
    %513 = arith.divf %511, %512 : vector<2x32xf32>
    %514 = vector.broadcast %5 : vector<1x32xf32> to vector<2x32xf32>
    %515 = arith.addf %503, %514 : vector<2x32xf32>
    %516 = arith.mulf %508, %515 : vector<2x32xf32>
    %517 = arith.addf %502, %516 : vector<2x32xf32>
    %518 = math.tanh %517 : vector<2x32xf32>
    %cst_98 = arith.constant 1.000000e+00 : f32
    %519 = vector.broadcast %cst_98 : f32 to vector<2x32xf32>
    %520 = arith.subf %519, %513 : vector<2x32xf32>
    %521 = arith.mulf %520, %518 : vector<2x32xf32>
    %522 = arith.mulf %513, %472 : vector<2x32xf32>
    %523 = arith.addf %521, %522 : vector<2x32xf32>
    %cst_99 = arith.constant dense<0.000000e+00> : vector<2x16xf32>
    %524 = tpu.matmul %523, %6, %cst_99 {dimension_numbers = #tpu.dot_dimension_numbers<[1], [0], [0], [1], [0, 0, 1, 1], [], []>} : vector<2x32xf32>, vector<32x16xf32>, vector<2x16xf32> -> vector<2x16xf32>
    %525 = vector.broadcast %7 : vector<1x16xf32> to vector<2x16xf32>
    %526 = arith.addf %524, %525 : vector<2x16xf32>
    %cst_100 = arith.constant dense<0xFF800000> : vector<2xf32>
    %527 = vector.multi_reduction <maximumf>, %526, %cst_100 [1] : vector<2x16xf32> to vector<2xf32>
    %528 = vector.shape_cast %527 : vector<2xf32> to vector<2x1xf32>
    %529 = vector.broadcast %528 : vector<2x1xf32> to vector<2x16xf32>
    %530 = arith.subf %526, %529 : vector<2x16xf32>
    %531 = math.exp %530 : vector<2x16xf32>
    %cst_101 = arith.constant dense<0.000000e+00> : vector<2xf32>
    %532 = vector.multi_reduction <add>, %531, %cst_101 [1] : vector<2x16xf32> to vector<2xf32>
    %533 = vector.shape_cast %532 : vector<2xf32> to vector<2x1xf32>
    %534 = math.log %533 : vector<2x1xf32>
    %535 = arith.addf %534, %528 : vector<2x1xf32>
    %536 = vector.broadcast %535 : vector<2x1xf32> to vector<2x16xf32>
    %537 = arith.subf %526, %536 : vector<2x16xf32>
    %c0_102 = arith.constant 0 : index
    %c64 = arith.constant 64 : index
    %538 = vector.load %arg8[%c0_102, %c64] : memref<2x128xf32, #tpu.memory_space<vmem>>, vector<2x16xf32>
    tpu.vector_store %arg8[%c0_102, %c64], %537 {strides = array<i32>} : memref<2x128xf32, #tpu.memory_space<vmem>>, vector<2x16xf32>,
    %539 = vector.broadcast %528 : vector<2x1xf32> to vector<2x16xf32>
    %540 = arith.cmpf oeq, %526, %539 : vector<2x16xf32>
    %c16_i32_103 = arith.constant 16 : i32
    %541 = vector.broadcast %c16_i32_103 : i32 to vector<2x16xi32>
    %542 = arith.select %540, %8, %541 : vector<2x16xi1>, vector<2x16xi32>
    %cst_104 = arith.constant dense<2147483647> : vector<2xi32>
    %543 = vector.multi_reduction <minsi>, %542, %cst_104 [1] : vector<2x16xi32> to vector<2xi32>
    %544 = vector.shape_cast %543 : vector<2xi32> to vector<2x1xi32>
    %545 = vector.broadcast %544 : vector<2x1xi32> to vector<2x16xi32>
    %546 = arith.cmpi eq, %8, %545 : vector<2x16xi32>
    %547 = arith.extui %546 : vector<2x16xi1> to vector<2x16xi32>
    %548 = arith.sitofp %547 : vector<2x16xi32> to vector<2x16xf32>
    %549 = tpu.concatenate %548, %523 in 1 : vector<2x16xf32>, vector<2x32xf32> -> vector<2x48xf32>
    %cst_105 = arith.constant dense<0.000000e+00> : vector<2x128xf32>
    %550 = tpu.matmul %549, %4, %cst_105 {dimension_numbers = #tpu.dot_dimension_numbers<[1], [0], [0], [1], [0, 0, 1, 1], [], []>} : vector<2x48xf32>, vector<48x128xf32>, vector<2x128xf32> -> vector<2x128xf32>
    %551 = vector.extract_strided_slice %550 {offsets = [0, 0], sizes = [2, 32], strides = [1, 1]} : vector<2x128xf32> to vector<2x32xf32>
    %552 = vector.extract_strided_slice %550 {offsets = [0, 32], sizes = [2, 32], strides = [1, 1]} : vector<2x128xf32> to vector<2x32xf32>
    %553 = vector.extract_strided_slice %550 {offsets = [0, 64], sizes = [2, 32], strides = [1, 1]} : vector<2x128xf32> to vector<2x32xf32>
    %554 = vector.extract_strided_slice %550 {offsets = [0, 96], sizes = [2, 32], strides = [1, 1]} : vector<2x128xf32> to vector<2x32xf32>
    %555 = arith.negf %551 : vector<2x32xf32>
    %556 = math.exp %555 : vector<2x32xf32>
    %cst_106 = arith.constant 1.000000e+00 : f32
    %557 = vector.broadcast %cst_106 : f32 to vector<2x32xf32>
    %558 = arith.addf %557, %556 : vector<2x32xf32>
    %559 = arith.divf %557, %558 : vector<2x32xf32>
    %560 = arith.negf %552 : vector<2x32xf32>
    %561 = math.exp %560 : vector<2x32xf32>
    %cst_107 = arith.constant 1.000000e+00 : f32
    %562 = vector.broadcast %cst_107 : f32 to vector<2x32xf32>
    %563 = arith.addf %562, %561 : vector<2x32xf32>
    %564 = arith.divf %562, %563 : vector<2x32xf32>
    %565 = vector.broadcast %5 : vector<1x32xf32> to vector<2x32xf32>
    %566 = arith.addf %554, %565 : vector<2x32xf32>
    %567 = arith.mulf %559, %566 : vector<2x32xf32>
    %568 = arith.addf %553, %567 : vector<2x32xf32>
    %569 = math.tanh %568 : vector<2x32xf32>
    %cst_108 = arith.constant 1.000000e+00 : f32
    %570 = vector.broadcast %cst_108 : f32 to vector<2x32xf32>
    %571 = arith.subf %570, %564 : vector<2x32xf32>
    %572 = arith.mulf %571, %569 : vector<2x32xf32>
    %573 = arith.mulf %564, %523 : vector<2x32xf32>
    %574 = arith.addf %572, %573 : vector<2x32xf32>
    %cst_109 = arith.constant dense<0.000000e+00> : vector<2x16xf32>
    %575 = tpu.matmul %574, %6, %cst_109 {dimension_numbers = #tpu.dot_dimension_numbers<[1], [0], [0], [1], [0, 0, 1, 1], [], []>} : vector<2x32xf32>, vector<32x16xf32>, vector<2x16xf32> -> vector<2x16xf32>
    %576 = vector.broadcast %7 : vector<1x16xf32> to vector<2x16xf32>
    %577 = arith.addf %575, %576 : vector<2x16xf32>
    %cst_110 = arith.constant dense<0xFF800000> : vector<2xf32>
    %578 = vector.multi_reduction <maximumf>, %577, %cst_110 [1] : vector<2x16xf32> to vector<2xf32>
    %579 = vector.shape_cast %578 : vector<2xf32> to vector<2x1xf32>
    %580 = vector.broadcast %579 : vector<2x1xf32> to vector<2x16xf32>
    %581 = arith.subf %577, %580 : vector<2x16xf32>
    %582 = math.exp %581 : vector<2x16xf32>
    %cst_111 = arith.constant dense<0.000000e+00> : vector<2xf32>
    %583 = vector.multi_reduction <add>, %582, %cst_111 [1] : vector<2x16xf32> to vector<2xf32>
    %584 = vector.shape_cast %583 : vector<2xf32> to vector<2x1xf32>
    %585 = math.log %584 : vector<2x1xf32>
    %586 = arith.addf %585, %579 : vector<2x1xf32>
    %587 = vector.broadcast %586 : vector<2x1xf32> to vector<2x16xf32>
    %588 = arith.subf %577, %587 : vector<2x16xf32>
    %c0_112 = arith.constant 0 : index
    %c80 = arith.constant 80 : index
    %589 = vector.load %arg8[%c0_112, %c80] : memref<2x128xf32, #tpu.memory_space<vmem>>, vector<2x16xf32>
    tpu.vector_store %arg8[%c0_112, %c80], %588 {strides = array<i32>} : memref<2x128xf32, #tpu.memory_space<vmem>>, vector<2x16xf32>,
    %590 = vector.broadcast %579 : vector<2x1xf32> to vector<2x16xf32>
    %591 = arith.cmpf oeq, %577, %590 : vector<2x16xf32>
    %c16_i32_113 = arith.constant 16 : i32
    %592 = vector.broadcast %c16_i32_113 : i32 to vector<2x16xi32>
    %593 = arith.select %591, %8, %592 : vector<2x16xi1>, vector<2x16xi32>
    %cst_114 = arith.constant dense<2147483647> : vector<2xi32>
    %594 = vector.multi_reduction <minsi>, %593, %cst_114 [1] : vector<2x16xi32> to vector<2xi32>
    %595 = vector.shape_cast %594 : vector<2xi32> to vector<2x1xi32>
    %596 = vector.broadcast %595 : vector<2x1xi32> to vector<2x16xi32>
    %597 = arith.cmpi eq, %8, %596 : vector<2x16xi32>
    %598 = arith.extui %597 : vector<2x16xi1> to vector<2x16xi32>
    %599 = arith.sitofp %598 : vector<2x16xi32> to vector<2x16xf32>
    %600 = tpu.concatenate %599, %574 in 1 : vector<2x16xf32>, vector<2x32xf32> -> vector<2x48xf32>
    %cst_115 = arith.constant dense<0.000000e+00> : vector<2x128xf32>
    %601 = tpu.matmul %600, %4, %cst_115 {dimension_numbers = #tpu.dot_dimension_numbers<[1], [0], [0], [1], [0, 0, 1, 1], [], []>} : vector<2x48xf32>, vector<48x128xf32>, vector<2x128xf32> -> vector<2x128xf32>
    %602 = vector.extract_strided_slice %601 {offsets = [0, 0], sizes = [2, 32], strides = [1, 1]} : vector<2x128xf32> to vector<2x32xf32>
    %603 = vector.extract_strided_slice %601 {offsets = [0, 32], sizes = [2, 32], strides = [1, 1]} : vector<2x128xf32> to vector<2x32xf32>
    %604 = vector.extract_strided_slice %601 {offsets = [0, 64], sizes = [2, 32], strides = [1, 1]} : vector<2x128xf32> to vector<2x32xf32>
    %605 = vector.extract_strided_slice %601 {offsets = [0, 96], sizes = [2, 32], strides = [1, 1]} : vector<2x128xf32> to vector<2x32xf32>
    %606 = arith.negf %602 : vector<2x32xf32>
    %607 = math.exp %606 : vector<2x32xf32>
    %cst_116 = arith.constant 1.000000e+00 : f32
    %608 = vector.broadcast %cst_116 : f32 to vector<2x32xf32>
    %609 = arith.addf %608, %607 : vector<2x32xf32>
    %610 = arith.divf %608, %609 : vector<2x32xf32>
    %611 = arith.negf %603 : vector<2x32xf32>
    %612 = math.exp %611 : vector<2x32xf32>
    %cst_117 = arith.constant 1.000000e+00 : f32
    %613 = vector.broadcast %cst_117 : f32 to vector<2x32xf32>
    %614 = arith.addf %613, %612 : vector<2x32xf32>
    %615 = arith.divf %613, %614 : vector<2x32xf32>
    %616 = vector.broadcast %5 : vector<1x32xf32> to vector<2x32xf32>
    %617 = arith.addf %605, %616 : vector<2x32xf32>
    %618 = arith.mulf %610, %617 : vector<2x32xf32>
    %619 = arith.addf %604, %618 : vector<2x32xf32>
    %620 = math.tanh %619 : vector<2x32xf32>
    %cst_118 = arith.constant 1.000000e+00 : f32
    %621 = vector.broadcast %cst_118 : f32 to vector<2x32xf32>
    %622 = arith.subf %621, %615 : vector<2x32xf32>
    %623 = arith.mulf %622, %620 : vector<2x32xf32>
    %624 = arith.mulf %615, %574 : vector<2x32xf32>
    %625 = arith.addf %623, %624 : vector<2x32xf32>
    %cst_119 = arith.constant dense<0.000000e+00> : vector<2x16xf32>
    %626 = tpu.matmul %625, %6, %cst_119 {dimension_numbers = #tpu.dot_dimension_numbers<[1], [0], [0], [1], [0, 0, 1, 1], [], []>} : vector<2x32xf32>, vector<32x16xf32>, vector<2x16xf32> -> vector<2x16xf32>
    %627 = vector.broadcast %7 : vector<1x16xf32> to vector<2x16xf32>
    %628 = arith.addf %626, %627 : vector<2x16xf32>
    %cst_120 = arith.constant dense<0xFF800000> : vector<2xf32>
    %629 = vector.multi_reduction <maximumf>, %628, %cst_120 [1] : vector<2x16xf32> to vector<2xf32>
    %630 = vector.shape_cast %629 : vector<2xf32> to vector<2x1xf32>
    %631 = vector.broadcast %630 : vector<2x1xf32> to vector<2x16xf32>
    %632 = arith.subf %628, %631 : vector<2x16xf32>
    %633 = math.exp %632 : vector<2x16xf32>
    %cst_121 = arith.constant dense<0.000000e+00> : vector<2xf32>
    %634 = vector.multi_reduction <add>, %633, %cst_121 [1] : vector<2x16xf32> to vector<2xf32>
    %635 = vector.shape_cast %634 : vector<2xf32> to vector<2x1xf32>
    %636 = math.log %635 : vector<2x1xf32>
    %637 = arith.addf %636, %630 : vector<2x1xf32>
    %638 = vector.broadcast %637 : vector<2x1xf32> to vector<2x16xf32>
    %639 = arith.subf %628, %638 : vector<2x16xf32>
    %c0_122 = arith.constant 0 : index
    %c96 = arith.constant 96 : index
    %640 = vector.load %arg8[%c0_122, %c96] : memref<2x128xf32, #tpu.memory_space<vmem>>, vector<2x16xf32>
    tpu.vector_store %arg8[%c0_122, %c96], %639 {strides = array<i32>} : memref<2x128xf32, #tpu.memory_space<vmem>>, vector<2x16xf32>,
    %641 = vector.broadcast %630 : vector<2x1xf32> to vector<2x16xf32>
    %642 = arith.cmpf oeq, %628, %641 : vector<2x16xf32>
    %c16_i32_123 = arith.constant 16 : i32
    %643 = vector.broadcast %c16_i32_123 : i32 to vector<2x16xi32>
    %644 = arith.select %642, %8, %643 : vector<2x16xi1>, vector<2x16xi32>
    %cst_124 = arith.constant dense<2147483647> : vector<2xi32>
    %645 = vector.multi_reduction <minsi>, %644, %cst_124 [1] : vector<2x16xi32> to vector<2xi32>
    %646 = vector.shape_cast %645 : vector<2xi32> to vector<2x1xi32>
    %647 = vector.broadcast %646 : vector<2x1xi32> to vector<2x16xi32>
    %648 = arith.cmpi eq, %8, %647 : vector<2x16xi32>
    %649 = arith.extui %648 : vector<2x16xi1> to vector<2x16xi32>
    %650 = arith.sitofp %649 : vector<2x16xi32> to vector<2x16xf32>
    %651 = tpu.concatenate %650, %625 in 1 : vector<2x16xf32>, vector<2x32xf32> -> vector<2x48xf32>
    %cst_125 = arith.constant dense<0.000000e+00> : vector<2x128xf32>
    %652 = tpu.matmul %651, %4, %cst_125 {dimension_numbers = #tpu.dot_dimension_numbers<[1], [0], [0], [1], [0, 0, 1, 1], [], []>} : vector<2x48xf32>, vector<48x128xf32>, vector<2x128xf32> -> vector<2x128xf32>
    %653 = vector.extract_strided_slice %652 {offsets = [0, 0], sizes = [2, 32], strides = [1, 1]} : vector<2x128xf32> to vector<2x32xf32>
    %654 = vector.extract_strided_slice %652 {offsets = [0, 32], sizes = [2, 32], strides = [1, 1]} : vector<2x128xf32> to vector<2x32xf32>
    %655 = vector.extract_strided_slice %652 {offsets = [0, 64], sizes = [2, 32], strides = [1, 1]} : vector<2x128xf32> to vector<2x32xf32>
    %656 = vector.extract_strided_slice %652 {offsets = [0, 96], sizes = [2, 32], strides = [1, 1]} : vector<2x128xf32> to vector<2x32xf32>
    %657 = arith.negf %653 : vector<2x32xf32>
    %658 = math.exp %657 : vector<2x32xf32>
    %cst_126 = arith.constant 1.000000e+00 : f32
    %659 = vector.broadcast %cst_126 : f32 to vector<2x32xf32>
    %660 = arith.addf %659, %658 : vector<2x32xf32>
    %661 = arith.divf %659, %660 : vector<2x32xf32>
    %662 = arith.negf %654 : vector<2x32xf32>
    %663 = math.exp %662 : vector<2x32xf32>
    %cst_127 = arith.constant 1.000000e+00 : f32
    %664 = vector.broadcast %cst_127 : f32 to vector<2x32xf32>
    %665 = arith.addf %664, %663 : vector<2x32xf32>
    %666 = arith.divf %664, %665 : vector<2x32xf32>
    %667 = vector.broadcast %5 : vector<1x32xf32> to vector<2x32xf32>
    %668 = arith.addf %656, %667 : vector<2x32xf32>
    %669 = arith.mulf %661, %668 : vector<2x32xf32>
    %670 = arith.addf %655, %669 : vector<2x32xf32>
    %671 = math.tanh %670 : vector<2x32xf32>
    %cst_128 = arith.constant 1.000000e+00 : f32
    %672 = vector.broadcast %cst_128 : f32 to vector<2x32xf32>
    %673 = arith.subf %672, %666 : vector<2x32xf32>
    %674 = arith.mulf %673, %671 : vector<2x32xf32>
    %675 = arith.mulf %666, %625 : vector<2x32xf32>
    %676 = arith.addf %674, %675 : vector<2x32xf32>
    %cst_129 = arith.constant dense<0.000000e+00> : vector<2x16xf32>
    %677 = tpu.matmul %676, %6, %cst_129 {dimension_numbers = #tpu.dot_dimension_numbers<[1], [0], [0], [1], [0, 0, 1, 1], [], []>} : vector<2x32xf32>, vector<32x16xf32>, vector<2x16xf32> -> vector<2x16xf32>
    %678 = vector.broadcast %7 : vector<1x16xf32> to vector<2x16xf32>
    %679 = arith.addf %677, %678 : vector<2x16xf32>
    %cst_130 = arith.constant dense<0xFF800000> : vector<2xf32>
    %680 = vector.multi_reduction <maximumf>, %679, %cst_130 [1] : vector<2x16xf32> to vector<2xf32>
    %681 = vector.shape_cast %680 : vector<2xf32> to vector<2x1xf32>
    %682 = vector.broadcast %681 : vector<2x1xf32> to vector<2x16xf32>
    %683 = arith.subf %679, %682 : vector<2x16xf32>
    %684 = math.exp %683 : vector<2x16xf32>
    %cst_131 = arith.constant dense<0.000000e+00> : vector<2xf32>
    %685 = vector.multi_reduction <add>, %684, %cst_131 [1] : vector<2x16xf32> to vector<2xf32>
    %686 = vector.shape_cast %685 : vector<2xf32> to vector<2x1xf32>
    %687 = math.log %686 : vector<2x1xf32>
    %688 = arith.addf %687, %681 : vector<2x1xf32>
    %689 = vector.broadcast %688 : vector<2x1xf32> to vector<2x16xf32>
    %690 = arith.subf %679, %689 : vector<2x16xf32>
    %c0_132 = arith.constant 0 : index
    %c112 = arith.constant 112 : index
    %691 = vector.load %arg8[%c0_132, %c112] : memref<2x128xf32, #tpu.memory_space<vmem>>, vector<2x16xf32>
    tpu.vector_store %arg8[%c0_132, %c112], %690 {strides = array<i32>} : memref<2x128xf32, #tpu.memory_space<vmem>>, vector<2x16xf32>,
    return
  }
}

</mosaic_0001>

<llo_original>
// kernel: translator_forward.1
$region0: #{translator_forward.1}
  #allocation0 [shape = 'u32[]', space=smem, size = 0x4, offset = 0x4, fixed_abs, tag = 'smem constant byte address 0x4 - core index']
  #allocation1 [shape = 'u32[144,128]{1,0:T(1,128)}', space=vmem, size = 0x12000, scoped, tag = 'internal scratch']
  %s0 = inlined_call_operand.hbm [shape: s32[2,8], index: 0, kind: input, shape index: {}]
  %s1 = inlined_call_operand.hbm [shape: f32[16,128], index: 1, kind: input, shape index: {}]
  %s2 = inlined_call_operand.hbm [shape: f32[32,128], index: 2, kind: input, shape index: {}]
  %s3 = inlined_call_operand.vmem [shape: f32[1,32], index: 3, kind: input, shape index: {}]
  %s4 = inlined_call_operand.hbm [shape: f32[48,128], index: 4, kind: input, shape index: {}]
  %s5 = inlined_call_operand.vmem [shape: f32[1,32], index: 5, kind: input, shape index: {}]
  %s6 = inlined_call_operand.hbm [shape: f32[32,16], index: 6, kind: input, shape index: {}]
  %s7 = inlined_call_operand.vmem [shape: f32[1,16], index: 7, kind: input, shape index: {}]
  %s8 = inlined_call_operand.vmem [shape: f32[2,128], index: 8, kind: output, shape index: {}]
  %s9 = sld [smem:[#allocation0]]
  $region62: #{translator_forward.1} parent=0
    _
  %s11 = ssub.s32 1, %s9
  %s12 = scalar_select 0, %s11, %s9
  $region1: #{translator_forward.1} parent=0
    #allocation2 [shape = 'u8[1024]{0}', space=vmem, size = 0x400, scoped, tag = 'input window, operand 0, single buffered']
    #allocation3 [shape = 's32[1]{0}', space=sflag, size = 0x4, scoped, tag = 'scoped memory for translator_forward.1']
    #allocation4 [shape = 'u8[8192]{0}', space=vmem, size = 0x2000, scoped, tag = 'input window, operand 1, single buffered']
    #allocation5 [shape = 's32[1]{0}', space=sflag, size = 0x4, scoped, tag = 'scoped memory for translator_forward.1']
    #allocation6 [shape = 'u8[16384]{0}', space=vmem, size = 0x4000, scoped, tag = 'input window, operand 2, single buffered']
    #allocation7 [shape = 'u8[24576]{0}', space=vmem, size = 0x6000, scoped, tag = 'input window, operand 4, single buffered']
    #allocation8 [shape = 's32[1]{0}', space=sflag, size = 0x4, scoped, tag = 'scoped memory for translator_forward.1']
    #allocation9 [shape = 'u8[16384]{0}', space=vmem, size = 0x4000, scoped, tag = 'input window, operand 6, single buffered']
    %13 = vsyncpa [#allocation3], 0
    %14 = vsyncpa [#allocation5], 0
    %15 = vsyncpa [#allocation8], 0
    // Predicated region
    $region2: #{translator_forward.1} parent=1 // pred_check
      _
    $region3: #{translator_forward.1} parent=1 // pred_check_branch
      %17 = sbr.rel (0) target = $region5
    $region4: #{translator_forward.1} parent=1 // pred_region
      %s19 = ssub.s32 32, 32
      %20 = vsyncadd [#allocation3], %s19
      %s22 = sshll.u32 [#allocation2], 4
      %s23 = int_to_ptr.vmem [resolvable:$true] %s22
      %25 = dma.hbm_to_vmem [thread:$0]  %s0, 32, %s23, [#allocation3]
    $region5: #{translator_forward.1} parent=1 // pred_fallthru
      _
    // Predicated region
    $region6: #{translator_forward.1} parent=1 // pred_check
      _
    $region7: #{translator_forward.1} parent=1 // pred_check_branch
      %27 = sbr.rel (0) target = $region9
    $region8: #{translator_forward.1} parent=1 // pred_region
      %s29 = ssub.s32 256, 256
      %30 = vsyncadd [#allocation5], %s29
      %s31 = sshll.u32 [#allocation4], 4
      %s32 = int_to_ptr.vmem [resolvable:$true] %s31
      %37 = dma.hbm_to_vmem [thread:$0]  %s1, 256, %s32, [#allocation5], 128, 128, 8
    $region9: #{translator_forward.1} parent=1 // pred_fallthru
      _
    // Predicated region
    $region10: #{translator_forward.1} parent=1 // pred_check
      _
    $region11: #{translator_forward.1} parent=1 // pred_check_branch
      %39 = sbr.rel (0) target = $region13
    $region12: #{translator_forward.1} parent=1 // pred_region
      %s41 = ssub.s32 512, 512
      %42 = vsyncadd [#allocation5], %s41
      %s43 = sshll.u32 [#allocation6], 4
      %s44 = int_to_ptr.vmem [resolvable:$true] %s43
      %49 = dma.hbm_to_vmem [thread:$0]  %s2, 512, %s44, [#allocation5], 128, 128, 8
    $region13: #{translator_forward.1} parent=1 // pred_fallthru
      _
    // Predicated region
    $region14: #{translator_forward.1} parent=1 // pred_check
      _
    $region15: #{translator_forward.1} parent=1 // pred_check_branch
      %51 = sbr.rel (0) target = $region17
    $region16: #{translator_forward.1} parent=1 // pred_region
      _
    $region17: #{translator_forward.1} parent=1 // pred_fallthru
      _
    // Predicated region
    $region18: #{translator_forward.1} parent=1 // pred_check
      _
    $region19: #{translator_forward.1} parent=1 // pred_check_branch
      %53 = sbr.rel (0) target = $region21
    $region20: #{translator_forward.1} parent=1 // pred_region
      %s55 = ssub.s32 768, 768
      %56 = vsyncadd [#allocation8], %s55
      %s57 = sshll.u32 [#allocation7], 4
      %s58 = int_to_ptr.vmem [resolvable:$true] %s57
      %63 = dma.hbm_to_vmem [thread:$0]  %s4, 768, %s58, [#allocation8], 128, 128, 8
    $region21: #{translator_forward.1} parent=1 // pred_fallthru
      _
    // Predicated region
    $region22: #{translator_forward.1} parent=1 // pred_check
      _
    $region23: #{translator_forward.1} parent=1 // pred_check_branch
      %65 = sbr.rel (0) target = $region25
    $region24: #{translator_forward.1} parent=1 // pred_region
      _
    $region25: #{translator_forward.1} parent=1 // pred_fallthru
      _
    // Predicated region
    $region26: #{translator_forward.1} parent=1 // pred_check
      _
    $region27: #{translator_forward.1} parent=1 // pred_check_branch
      %67 = sbr.rel (0) target = $region29
    $region28: #{translator_forward.1} parent=1 // pred_region
      %s69 = ssub.s32 512, 512
      %70 = vsyncadd [#allocation8], %s69
      %s71 = sshll.u32 [#allocation9], 4
      %s72 = int_to_ptr.vmem [resolvable:$true] %s71
      %77 = dma.hbm_to_vmem [thread:$0]  %s6, 512, %s72, [#allocation8], 128, 128, 8
    $region29: #{translator_forward.1} parent=1 // pred_fallthru
      _
    // Predicated region
    $region30: #{translator_forward.1} parent=1 // pred_check
      _
    $region31: #{translator_forward.1} parent=1 // pred_check_branch
      %79 = sbr.rel (0) target = $region33
    $region32: #{translator_forward.1} parent=1 // pred_region
      _
    $region33: #{translator_forward.1} parent=1 // pred_fallthru
      _
    // Predicated region
    $region34: #{translator_forward.1} parent=1 // pred_check
      _
    $region35: #{translator_forward.1} parent=1 // pred_check_branch
      %81 = sbr.rel (0) target = $region37
    $region36: #{translator_forward.1} parent=1 // pred_region
      %82 = dma.done [#allocation3], 32
    $region37: #{translator_forward.1} parent=1 // pred_fallthru
      _
    // Predicated region
    $region38: #{translator_forward.1} parent=1 // pred_check
      _
    $region39: #{translator_forward.1} parent=1 // pred_check_branch
      %84 = sbr.rel (0) target = $region41
    $region40: #{translator_forward.1} parent=1 // pred_region
      %85 = dma.done [#allocation5], 256
    $region41: #{translator_forward.1} parent=1 // pred_fallthru
      _
    // Predicated region
    $region42: #{translator_forward.1} parent=1 // pred_check
      _
    $region43: #{translator_forward.1} parent=1 // pred_check_branch
      %87 = sbr.rel (0) target = $region45
    $region44: #{translator_forward.1} parent=1 // pred_region
      %88 = dma.done [#allocation5], 512
    $region45: #{translator_forward.1} parent=1 // pred_fallthru
      _
    // Predicated region
    $region46: #{translator_forward.1} parent=1 // pred_check
      _
    $region47: #{translator_forward.1} parent=1 // pred_check_branch
      %90 = sbr.rel (0) target = $region49
    $region48: #{translator_forward.1} parent=1 // pred_region
      %91 = dma.done [#allocation8], 768
    $region49: #{translator_forward.1} parent=1 // pred_fallthru
      _
    // Predicated region
    $region50: #{translator_forward.1} parent=1 // pred_check
      _
    $region51: #{translator_forward.1} parent=1 // pred_check_branch
      %93 = sbr.rel (0) target = $region53
    $region52: #{translator_forward.1} parent=1 // pred_region
      %94 = dma.done [#allocation8], 512
    $region53: #{translator_forward.1} parent=1 // pred_fallthru
      _
    %v95 = vld [vmem:[#allocation2] sm:$0x3]
    %v96 = vld [vmem:[#allocation4] sm:$0xff]
    %v97 = vld [vmem:[#allocation4 + $0x8] sm:$0xff]
    %v98 = vld [vmem:[#allocation6] sm:$0xff]
    %v99 = vld [vmem:[#allocation6 + $0x8] sm:$0xff]
    %v100 = vld [vmem:[#allocation6 + $0x10] sm:$0xff]
    %v101 = vld [vmem:[#allocation6 + $0x18] sm:$0xff]
    %v102 = vld [vmem:[%s3] sm:$0x1]
    %v103 = vld [vmem:[#allocation7] sm:$0xff]
    %v104 = vld [vmem:[#allocation7 + $0x8] sm:$0xff]
    %v105 = vld [vmem:[#allocation7 + $0x10] sm:$0xff]
    %v106 = vld [vmem:[#allocation7 + $0x18] sm:$0xff]
    %v107 = vld [vmem:[#allocation7 + $0x20] sm:$0xff]
    %v108 = vld [vmem:[#allocation7 + $0x28] sm:$0xff]
    %v109 = vld [vmem:[%s5] sm:$0x1]
    %v110 = vld [vmem:[#allocation9] sm:$0xff]
    %v111 = vld [vmem:[#allocation9 + $0x8] sm:$0xff]
    %v112 = vld [vmem:[#allocation9 + $0x10] sm:$0xff]
    %v113 = vld [vmem:[#allocation9 + $0x18] sm:$0xff]
    %v114 = vld [vmem:[%s7] sm:$0x1]
    %v115 = vlaneseq
    %v116 = vand.u32 %v115, 127
    %117 = vset.pattern.permute.xlu0 0
    %118 = vperm.xlu0 %117, %v95
    %v119 = vpop.permute.xlu0 %118
    %vm120 = vcmp.eq.s32.totalorder %v116, %v119
    %v121 = vsel %vm120, 1, 0
    %v122 = vcvt.s32.f32 %v121
    %vm123 = vcmask 130048
    %v125 = vsel %vm123, %v122, 0
    %127 = vmatprep.subr.mxu0 0.0
    %128 = vmatpush1.msra.mxu0 0.0
    %129 = vmatprep.subr.mxu0 0.0
    %130 = vmatpush1.msra.mxu0 0.0
    %131 = vmatprep.subr.mxu0 0.0
    %132 = vmatpush1.msra.mxu0 0.0
    %133 = vmatprep.subr.mxu0 0.0
    %134 = vmatpush1.msra.mxu0 0.0
    %135 = vmatprep.subr.mxu0 0.0
    %136 = vmatpush1.msra.mxu0 0.0
    %137 = vmatprep.subr.mxu0 0.0
    %138 = vmatpush1.msra.mxu0 0.0
    %139 = vmatprep.subr.mxu0 0.0
    %140 = vmatpush1.msra.mxu0 0.0
    %141 = vmatprep.subr.mxu0 0.0
    %142 = vmatpush1.msra.mxu0 0.0
    %143 = vmatprep.subr.mxu0 0.0
    %144 = vmatpush1.msra.mxu0 0.0
    %145 = vmatprep.subr.mxu0 0.0
    %146 = vmatpush1.msra.mxu0 0.0
    %147 = vmatprep.subr.mxu0 0.0
    %148 = vmatpush1.msra.mxu0 0.0
    %149 = vmatprep.subr.mxu0 0.0
    %150 = vmatpush1.msra.mxu0 0.0
    %151 = vmatprep.subr.mxu0 0.0
    %152 = vmatpush1.msra.mxu0 0.0
    %153 = vmatprep.subr.mxu0 0.0
    %154 = vmatpush1.msra.mxu0 0.0
    %155 = vmatprep.subr.mxu0 0.0
    %156 = vmatpush1.msra.mxu0 %v97
    %157 = vmatprep.subr.mxu0 0.0
    %158 = vmatpush1.msra.mxu0 %v96
    %159 = vmatprep.subr.mxu0 0.0
    %160 = vmatpush2.msra.mxu0 0.0
    %161 = vmatprep.subr.mxu0 0.0
    %162 = vmatpush2.msra.mxu0 0.0
    %163 = vmatprep.subr.mxu0 0.0
    %164 = vmatpush2.msra.mxu0 0.0
    %165 = vmatprep.subr.mxu0 0.0
    %166 = vmatpush2.msra.mxu0 0.0
    %167 = vmatprep.subr.mxu0 0.0
    %168 = vmatpush2.msra.mxu0 0.0
    %169 = vmatprep.subr.mxu0 0.0
    %170 = vmatpush2.msra.mxu0 0.0
    %171 = vmatprep.subr.mxu0 0.0
    %172 = vmatpush2.msra.mxu0 0.0
    %173 = vmatprep.subr.mxu0 0.0
    %174 = vmatpush2.msra.mxu0 0.0
    %175 = vmatprep.subr.mxu0 0.0
    %176 = vmatpush2.msra.mxu0 0.0
    %177 = vmatprep.subr.mxu0 0.0
    %178 = vmatpush2.msra.mxu0 0.0
    %179 = vmatprep.subr.mxu0 0.0
    %180 = vmatpush2.msra.mxu0 0.0
    %181 = vmatprep.subr.mxu0 0.0
    %182 = vmatpush2.msra.mxu0 0.0
    %183 = vmatprep.subr.mxu0 0.0
    %184 = vmatpush2.msra.mxu0 0.0
    %185 = vmatprep.subr.mxu0 0.0
    %186 = vmatpush2.msra.mxu0 0.0
    %187 = vmatprep.subr.mxu0 0.0
    %188 = vmatpush2.msra.mxu0 0.0
    %189 = vmatprep.subr.mxu0 0.0
    %190 = vmatpush2.msra.mxu0 0.0
    %191 = vmatprep.mubr.f32.mxu0 0.0
    %192 = vmatmul.mubr.f32.gmra.mxu0 %v125
    %v193 = vpop.f32.mrf.mxu0
    %v194 = vadd.f32 0.0, %v193
    %v195 = vpop.f32.mrf.mxu0
    %196 = vdwg.mxu0
    %vm197 = vcmask 261120
    %v199 = vsel %vm197, 0.0, 0
    %201 = vmatprep.subr.mxu0 0.0
    %202 = vmatpush1.msra.mxu0 0.0
    %203 = vmatprep.subr.mxu0 0.0
    %204 = vmatpush1.msra.mxu0 0.0
    %205 = vmatprep.subr.mxu0 0.0
    %206 = vmatpush1.msra.mxu0 0.0
    %207 = vmatprep.subr.mxu0 0.0
    %208 = vmatpush1.msra.mxu0 0.0
    %209 = vmatprep.subr.mxu0 0.0
    %210 = vmatpush1.msra.mxu0 0.0
    %211 = vmatprep.subr.mxu0 0.0
    %212 = vmatpush1.msra.mxu0 0.0
    %213 = vmatprep.subr.mxu0 0.0
    %214 = vmatpush1.msra.mxu0 0.0
    %215 = vmatprep.subr.mxu0 0.0
    %216 = vmatpush1.msra.mxu0 0.0
    %217 = vmatprep.subr.mxu0 0.0
    %218 = vmatpush1.msra.mxu0 0.0
    %219 = vmatprep.subr.mxu0 0.0
    %220 = vmatpush1.msra.mxu0 0.0
    %221 = vmatprep.subr.mxu0 0.0
    %222 = vmatpush1.msra.mxu0 0.0
    %223 = vmatprep.subr.mxu0 0.0
    %224 = vmatpush1.msra.mxu0 0.0
    %225 = vmatprep.subr.mxu0 0.0
    %226 = vmatpush1.msra.mxu0 %v101
    %227 = vmatprep.subr.mxu0 0.0
    %228 = vmatpush1.msra.mxu0 %v100
    %229 = vmatprep.subr.mxu0 0.0
    %230 = vmatpush1.msra.mxu0 %v99
    %231 = vmatprep.subr.mxu0 0.0
    %232 = vmatpush1.msra.mxu0 %v98
    %233 = vmatprep.subr.mxu0 0.0
    %234 = vmatpush2.msra.mxu0 0.0
    %235 = vmatprep.subr.mxu0 0.0
    %236 = vmatpush2.msra.mxu0 0.0
    %237 = vmatprep.subr.mxu0 0.0
    %238 = vmatpush2.msra.mxu0 0.0
    %239 = vmatprep.subr.mxu0 0.0
    %240 = vmatpush2.msra.mxu0 0.0
    %241 = vmatprep.subr.mxu0 0.0
    %242 = vmatpush2.msra.mxu0 0.0
    %243 = vmatprep.subr.mxu0 0.0
    %244 = vmatpush2.msra.mxu0 0.0
    %245 = vmatprep.subr.mxu0 0.0
    %246 = vmatpush2.msra.mxu0 0.0
    %247 = vmatprep.subr.mxu0 0.0
    %248 = vmatpush2.msra.mxu0 0.0
    %249 = vmatprep.subr.mxu0 0.0
    %250 = vmatpush2.msra.mxu0 0.0
    %251 = vmatprep.subr.mxu0 0.0
    %252 = vmatpush2.msra.mxu0 0.0
    %253 = vmatprep.subr.mxu0 0.0
    %254 = vmatpush2.msra.mxu0 0.0
    %255 = vmatprep.subr.mxu0 0.0
    %256 = vmatpush2.msra.mxu0 0.0
    %257 = vmatprep.subr.mxu0 0.0
    %258 = vmatpush2.msra.mxu0 0.0
    %259 = vmatprep.subr.mxu0 0.0
    %260 = vmatpush2.msra.mxu0 0.0
    %261 = vmatprep.subr.mxu0 0.0
    %262 = vmatpush2.msra.mxu0 0.0
    %263 = vmatprep.subr.mxu0 0.0
    %264 = vmatpush2.msra.mxu0 0.0
    %265 = vmatprep.mubr.f32.mxu0 0.0
    %266 = vmatmul.mubr.f32.gmra.mxu0 %v199
    %v267 = vpop.f32.mrf.mxu0
    %v268 = vadd.f32 0.0, %v267
    %v269 = vpop.f32.mrf.mxu0
    %270 = vdwg.mxu0
    %v271 = vadd.f32 %v194, %v268
    %v272 = vxor.u32 %v271, 2147483648
    %v273 = vmul.f32 %v272, 1.442695
    %v274 = vpow.pop %v273
    %v275 = vadd.f32 %v274, 1.0
    %v276 = vrcp.pop %v275
    %v277 = vmul.f32 1.0, %v276
    %v279 = vlaneseq
    %v280 = vshrl.u32 %v279, 7
    %v281 = vsub.s32 0, %v280
    %v282 = vrot.slane %v102, %v281
    %283 = vrot.lane.b32.xlu0 %v282, 64
    %v284 = vpop.permute.xlu0 %283
    %v286 = vadd.f32 %v268, %v284
    %288 = vrot.lane.b32.xlu0 %v286, 64
    %v289 = vpop.permute.xlu0 %288
    %v291 = vmul.f32 %v277, %v289
    %293 = vrot.lane.b32.xlu0 %v291, 64
    %v294 = vpop.permute.xlu0 %293
    %v296 = vadd.f32 %v194, %v294
    %v297 = vtanh.pop %v296
    %v298 = vsub.f32 1.0, %v277
    %300 = vrot.lane.b32.xlu0 %v297, 96
    %v301 = vpop.permute.xlu0 %300
    %v303 = vmul.f32 %v298, %v301
    %v304 = vmul.f32 %v277, 0.0
    %v305 = vadd.f32 %v303, %v304
    %306 = vset.pattern.permute.xlu0 1
    %307 = vperm.xlu0 %306, %v95
    %v308 = vpop.permute.xlu0 %307
    %vm309 = vcmp.eq.s32.totalorder %v116, %v308
    %v310 = vsel %vm309, 1, 0
    %v311 = vcvt.s32.f32 %v310
    %v313 = vsel %vm123, %v311, 0
    %315 = vmatprep.subr.mxu0 0.0
    %316 = vmatpush1.msra.mxu0 0.0
    %317 = vmatprep.subr.mxu0 0.0
    %318 = vmatpush1.msra.mxu0 0.0
    %319 = vmatprep.subr.mxu0 0.0
    %320 = vmatpush1.msra.mxu0 0.0
    %321 = vmatprep.subr.mxu0 0.0
    %322 = vmatpush1.msra.mxu0 0.0
    %323 = vmatprep.subr.mxu0 0.0
    %324 = vmatpush1.msra.mxu0 0.0
    %325 = vmatprep.subr.mxu0 0.0
    %326 = vmatpush1.msra.mxu0 0.0
    %327 = vmatprep.subr.mxu0 0.0
    %328 = vmatpush1.msra.mxu0 0.0
    %329 = vmatprep.subr.mxu0 0.0
    %330 = vmatpush1.msra.mxu0 0.0
    %331 = vmatprep.subr.mxu0 0.0
    %332 = vmatpush1.msra.mxu0 0.0
    %333 = vmatprep.subr.mxu0 0.0
    %334 = vmatpush1.msra.mxu0 0.0
    %335 = vmatprep.subr.mxu0 0.0
    %336 = vmatpush1.msra.mxu0 0.0
    %337 = vmatprep.subr.mxu0 0.0
    %338 = vmatpush1.msra.mxu0 0.0
    %339 = vmatprep.subr.mxu0 0.0
    %340 = vmatpush1.msra.mxu0 0.0
    %341 = vmatprep.subr.mxu0 0.0
    %342 = vmatpush1.msra.mxu0 0.0
    %343 = vmatprep.subr.mxu0 0.0
    %344 = vmatpush1.msra.mxu0 %v97
    %345 = vmatprep.subr.mxu0 0.0
    %346 = vmatpush1.msra.mxu0 %v96
    %347 = vmatprep.subr.mxu0 0.0
    %348 = vmatpush2.msra.mxu0 0.0
    %349 = vmatprep.subr.mxu0 0.0
    %350 = vmatpush2.msra.mxu0 0.0
    %351 = vmatprep.subr.mxu0 0.0
    %352 = vmatpush2.msra.mxu0 0.0
    %353 = vmatprep.subr.mxu0 0.0
    %354 = vmatpush2.msra.mxu0 0.0
    %355 = vmatprep.subr.mxu0 0.0
    %356 = vmatpush2.msra.mxu0 0.0
    %357 = vmatprep.subr.mxu0 0.0
    %358 = vmatpush2.msra.mxu0 0.0
    %359 = vmatprep.subr.mxu0 0.0
    %360 = vmatpush2.msra.mxu0 0.0
    %361 = vmatprep.subr.mxu0 0.0
    %362 = vmatpush2.msra.mxu0 0.0
    %363 = vmatprep.subr.mxu0 0.0
    %364 = vmatpush2.msra.mxu0 0.0
    %365 = vmatprep.subr.mxu0 0.0
    %366 = vmatpush2.msra.mxu0 0.0
    %367 = vmatprep.subr.mxu0 0.0
    %368 = vmatpush2.msra.mxu0 0.0
    %369 = vmatprep.subr.mxu0 0.0
    %370 = vmatpush2.msra.mxu0 0.0
    %371 = vmatprep.subr.mxu0 0.0
    %372 = vmatpush2.msra.mxu0 0.0
    %373 = vmatprep.subr.mxu0 0.0
    %374 = vmatpush2.msra.mxu0 0.0
    %375 = vmatprep.subr.mxu0 0.0
    %376 = vmatpush2.msra.mxu0 0.0
    %377 = vmatprep.subr.mxu0 0.0
    %378 = vmatpush2.msra.mxu0 0.0
    %379 = vmatprep.mubr.f32.mxu0 0.0
    %380 = vmatmul.mubr.f32.gmra.mxu0 %v313
    %v381 = vpop.f32.mrf.mxu0
    %v382 = vadd.f32 0.0, %v381
    %v383 = vpop.f32.mrf.mxu0
    %384 = vdwg.mxu0
    %386 = vrot.lane.b32.xlu0 %v305, 96
    %v387 = vpop.permute.xlu0 %386
    %v388 = vsel %vm197, %v387, 0
    %390 = vmatprep.subr.mxu0 0.0
    %391 = vmatpush1.msra.mxu0 0.0
    %392 = vmatprep.subr.mxu0 0.0
    %393 = vmatpush1.msra.mxu0 0.0
    %394 = vmatprep.subr.mxu0 0.0
    %395 = vmatpush1.msra.mxu0 0.0
    %396 = vmatprep.subr.mxu0 0.0
    %397 = vmatpush1.msra.mxu0 0.0
    %398 = vmatprep.subr.mxu0 0.0
    %399 = vmatpush1.msra.mxu0 0.0
    %400 = vmatprep.subr.mxu0 0.0
    %401 = vmatpush1.msra.mxu0 0.0
    %402 = vmatprep.subr.mxu0 0.0
    %403 = vmatpush1.msra.mxu0 0.0
    %404 = vmatprep.subr.mxu0 0.0
    %405 = vmatpush1.msra.mxu0 0.0
    %406 = vmatprep.subr.mxu0 0.0
    %407 = vmatpush1.msra.mxu0 0.0
    %408 = vmatprep.subr.mxu0 0.0
    %409 = vmatpush1.msra.mxu0 0.0
    %410 = vmatprep.subr.mxu0 0.0
    %411 = vmatpush1.msra.mxu0 0.0
    %412 = vmatprep.subr.mxu0 0.0
    %413 = vmatpush1.msra.mxu0 0.0
    %414 = vmatprep.subr.mxu0 0.0
    %415 = vmatpush1.msra.mxu0 %v101
    %416 = vmatprep.subr.mxu0 0.0
    %417 = vmatpush1.msra.mxu0 %v100
    %418 = vmatprep.subr.mxu0 0.0
    %419 = vmatpush1.msra.mxu0 %v99
    %420 = vmatprep.subr.mxu0 0.0
    %421 = vmatpush1.msra.mxu0 %v98
    %422 = vmatprep.subr.mxu0 0.0
    %423 = vmatpush2.msra.mxu0 0.0
    %424 = vmatprep.subr.mxu0 0.0
    %425 = vmatpush2.msra.mxu0 0.0
    %426 = vmatprep.subr.mxu0 0.0
    %427 = vmatpush2.msra.mxu0 0.0
    %428 = vmatprep.subr.mxu0 0.0
    %429 = vmatpush2.msra.mxu0 0.0
    %430 = vmatprep.subr.mxu0 0.0
    %431 = vmatpush2.msra.mxu0 0.0
    %432 = vmatprep.subr.mxu0 0.0
    %433 = vmatpush2.msra.mxu0 0.0
    %434 = vmatprep.subr.mxu0 0.0
    %435 = vmatpush2.msra.mxu0 0.0
    %436 = vmatprep.subr.mxu0 0.0
    %437 = vmatpush2.msra.mxu0 0.0
    %438 = vmatprep.subr.mxu0 0.0
    %439 = vmatpush2.msra.mxu0 0.0
    %440 = vmatprep.subr.mxu0 0.0
    %441 = vmatpush2.msra.mxu0 0.0
    %442 = vmatprep.subr.mxu0 0.0
    %443 = vmatpush2.msra.mxu0 0.0
    %444 = vmatprep.subr.mxu0 0.0
    %445 = vmatpush2.msra.mxu0 0.0
    %446 = vmatprep.subr.mxu0 0.0
    %447 = vmatpush2.msra.mxu0 0.0
    %448 = vmatprep.subr.mxu0 0.0
    %449 = vmatpush2.msra.mxu0 0.0
    %450 = vmatprep.subr.mxu0 0.0
    %451 = vmatpush2.msra.mxu0 0.0
    %452 = vmatprep.subr.mxu0 0.0
    %453 = vmatpush2.msra.mxu0 0.0
    %454 = vmatprep.mubr.f32.mxu0 0.0
    %455 = vmatmul.mubr.f32.gmra.mxu0 %v388
    %v456 = vpop.f32.mrf.mxu0
    %v457 = vadd.f32 0.0, %v456
    %v458 = vpop.f32.mrf.mxu0
    %459 = vdwg.mxu0
    %v460 = vadd.f32 %v382, %v457
    %v461 = vxor.u32 %v460, 2147483648
    %v462 = vmul.f32 %v461, 1.442695
    %v463 = vpow.pop %v462
    %v464 = vadd.f32 %v463, 1.0
    %v465 = vrcp.pop %v464
    %v466 = vmul.f32 1.0, %v465
    %v467 = vadd.f32 %v457, %v284
    %469 = vrot.lane.b32.xlu0 %v467, 64
    %v470 = vpop.permute.xlu0 %469
    %v472 = vmul.f32 %v466, %v470
    %474 = vrot.lane.b32.xlu0 %v472, 64
    %v475 = vpop.permute.xlu0 %474
    %v477 = vadd.f32 %v382, %v475
    %v478 = vtanh.pop %v477
    %v479 = vsub.f32 1.0, %v466
    %481 = vrot.lane.b32.xlu0 %v478, 96
    %v482 = vpop.permute.xlu0 %481
    %v484 = vmul.f32 %v479, %v482
    %v485 = vmul.f32 %v466, %v305
    %v486 = vadd.f32 %v484, %v485
    %487 = vset.pattern.permute.xlu0 2
    %488 = vperm.xlu0 %487, %v95
    %v489 = vpop.permute.xlu0 %488
    %vm490 = vcmp.eq.s32.totalorder %v116, %v489
    %v491 = vsel %vm490, 1, 0
    %v492 = vcvt.s32.f32 %v491
    %v494 = vsel %vm123, %v492, 0
    %496 = vmatprep.subr.mxu0 0.0
    %497 = vmatpush1.msra.mxu0 0.0
    %498 = vmatprep.subr.mxu0 0.0
    %499 = vmatpush1.msra.mxu0 0.0
    %500 = vmatprep.subr.mxu0 0.0
    %501 = vmatpush1.msra.mxu0 0.0
    %502 = vmatprep.subr.mxu0 0.0
    %503 = vmatpush1.msra.mxu0 0.0
    %504 = vmatprep.subr.mxu0 0.0
    %505 = vmatpush1.msra.mxu0 0.0
    %506 = vmatprep.subr.mxu0 0.0
    %507 = vmatpush1.msra.mxu0 0.0
    %508 = vmatprep.subr.mxu0 0.0
    %509 = vmatpush1.msra.mxu0 0.0
    %510 = vmatprep.subr.mxu0 0.0
    %511 = vmatpush1.msra.mxu0 0.0
    %512 = vmatprep.subr.mxu0 0.0
    %513 = vmatpush1.msra.mxu0 0.0
    %514 = vmatprep.subr.mxu0 0.0
    %515 = vmatpush1.msra.mxu0 0.0
    %516 = vmatprep.subr.mxu0 0.0
    %517 = vmatpush1.msra.mxu0 0.0
    %518 = vmatprep.subr.mxu0 0.0
    %519 = vmatpush1.msra.mxu0 0.0
    %520 = vmatprep.subr.mxu0 0.0
    %521 = vmatpush1.msra.mxu0 0.0
    %522 = vmatprep.subr.mxu0 0.0
    %523 = vmatpush1.msra.mxu0 0.0
    %524 = vmatprep.subr.mxu0 0.0
    %525 = vmatpush1.msra.mxu0 %v97
    %526 = vmatprep.subr.mxu0 0.0
    %527 = vmatpush1.msra.mxu0 %v96
    %528 = vmatprep.subr.mxu0 0.0
    %529 = vmatpush2.msra.mxu0 0.0
    %530 = vmatprep.subr.mxu0 0.0
    %531 = vmatpush2.msra.mxu0 0.0
    %532 = vmatprep.subr.mxu0 0.0
    %533 = vmatpush2.msra.mxu0 0.0
    %534 = vmatprep.subr.mxu0 0.0
    %535 = vmatpush2.msra.mxu0 0.0
    %536 = vmatprep.subr.mxu0 0.0
    %537 = vmatpush2.msra.mxu0 0.0
    %538 = vmatprep.subr.mxu0 0.0
    %539 = vmatpush2.msra.mxu0 0.0
    %540 = vmatprep.subr.mxu0 0.0
    %541 = vmatpush2.msra.mxu0 0.0
    %542 = vmatprep.subr.mxu0 0.0
    %543 = vmatpush2.msra.mxu0 0.0
    %544 = vmatprep.subr.mxu0 0.0
    %545 = vmatpush2.msra.mxu0 0.0
    %546 = vmatprep.subr.mxu0 0.0
    %547 = vmatpush2.msra.mxu0 0.0
    %548 = vmatprep.subr.mxu0 0.0
    %549 = vmatpush2.msra.mxu0 0.0
    %550 = vmatprep.subr.mxu0 0.0
    %551 = vmatpush2.msra.mxu0 0.0
    %552 = vmatprep.subr.mxu0 0.0
    %553 = vmatpush2.msra.mxu0 0.0
    %554 = vmatprep.subr.mxu0 0.0
    %555 = vmatpush2.msra.mxu0 0.0
    %556 = vmatprep.subr.mxu0 0.0
    %557 = vmatpush2.msra.mxu0 0.0
    %558 = vmatprep.subr.mxu0 0.0
    %559 = vmatpush2.msra.mxu0 0.0
    %560 = vmatprep.mubr.f32.mxu0 0.0
    %561 = vmatmul.mubr.f32.gmra.mxu0 %v494
    %v562 = vpop.f32.mrf.mxu0
    %v563 = vadd.f32 0.0, %v562
    %v564 = vpop.f32.mrf.mxu0
    %565 = vdwg.mxu0
    %567 = vrot.lane.b32.xlu0 %v486, 96
    %v568 = vpop.permute.xlu0 %567
    %v569 = vsel %vm197, %v568, 0
    %571 = vmatprep.subr.mxu0 0.0
    %572 = vmatpush1.msra.mxu0 0.0
    %573 = vmatprep.subr.mxu0 0.0
    %574 = vmatpush1.msra.mxu0 0.0
    %575 = vmatprep.subr.mxu0 0.0
    %576 = vmatpush1.msra.mxu0 0.0
    %577 = vmatprep.subr.mxu0 0.0
    %578 = vmatpush1.msra.mxu0 0.0
    %579 = vmatprep.subr.mxu0 0.0
    %580 = vmatpush1.msra.mxu0 0.0
    %581 = vmatprep.subr.mxu0 0.0
    %582 = vmatpush1.msra.mxu0 0.0
    %583 = vmatprep.subr.mxu0 0.0
    %584 = vmatpush1.msra.mxu0 0.0
    %585 = vmatprep.subr.mxu0 0.0
    %586 = vmatpush1.msra.mxu0 0.0
    %587 = vmatprep.subr.mxu0 0.0
    %588 = vmatpush1.msra.mxu0 0.0
    %589 = vmatprep.subr.mxu0 0.0
    %590 = vmatpush1.msra.mxu0 0.0
    %591 = vmatprep.subr.mxu0 0.0
    %592 = vmatpush1.msra.mxu0 0.0
    %593 = vmatprep.subr.mxu0 0.0
    %594 = vmatpush1.msra.mxu0 0.0
    %595 = vmatprep.subr.mxu0 0.0
    %596 = vmatpush1.msra.mxu0 %v101
    %597 = vmatprep.subr.mxu0 0.0
    %598 = vmatpush1.msra.mxu0 %v100
    %599 = vmatprep.subr.mxu0 0.0
    %600 = vmatpush1.msra.mxu0 %v99
    %601 = vmatprep.subr.mxu0 0.0
    %602 = vmatpush1.msra.mxu0 %v98
    %603 = vmatprep.subr.mxu0 0.0
    %604 = vmatpush2.msra.mxu0 0.0
    %605 = vmatprep.subr.mxu0 0.0
    %606 = vmatpush2.msra.mxu0 0.0
    %607 = vmatprep.subr.mxu0 0.0
    %608 = vmatpush2.msra.mxu0 0.0
    %609 = vmatprep.subr.mxu0 0.0
    %610 = vmatpush2.msra.mxu0 0.0
    %611 = vmatprep.subr.mxu0 0.0
    %612 = vmatpush2.msra.mxu0 0.0
    %613 = vmatprep.subr.mxu0 0.0
    %614 = vmatpush2.msra.mxu0 0.0
    %615 = vmatprep.subr.mxu0 0.0
    %616 = vmatpush2.msra.mxu0 0.0
    %617 = vmatprep.subr.mxu0 0.0
    %618 = vmatpush2.msra.mxu0 0.0
    %619 = vmatprep.subr.mxu0 0.0
    %620 = vmatpush2.msra.mxu0 0.0
    %621 = vmatprep.subr.mxu0 0.0
    %622 = vmatpush2.msra.mxu0 0.0
    %623 = vmatprep.subr.mxu0 0.0
    %624 = vmatpush2.msra.mxu0 0.0
    %625 = vmatprep.subr.mxu0 0.0
    %626 = vmatpush2.msra.mxu0 0.0
    %627 = vmatprep.subr.mxu0 0.0
    %628 = vmatpush2.msra.mxu0 0.0
    %629 = vmatprep.subr.mxu0 0.0
    %630 = vmatpush2.msra.mxu0 0.0
    %631 = vmatprep.subr.mxu0 0.0
    %632 = vmatpush2.msra.mxu0 0.0
    %633 = vmatprep.subr.mxu0 0.0
    %634 = vmatpush2.msra.mxu0 0.0
    %635 = vmatprep.mubr.f32.mxu0 0.0
    %636 = vmatmul.mubr.f32.gmra.mxu0 %v569
    %v637 = vpop.f32.mrf.mxu0
    %v638 = vadd.f32 0.0, %v637
    %v639 = vpop.f32.mrf.mxu0
    %640 = vdwg.mxu0
    %v641 = vadd.f32 %v563, %v638
    %v642 = vxor.u32 %v641, 2147483648
    %v643 = vmul.f32 %v642, 1.442695
    %v644 = vpow.pop %v643
    %v645 = vadd.f32 %v644, 1.0
    %v646 = vrcp.pop %v645
    %v647 = vmul.f32 1.0, %v646
    %v648 = vadd.f32 %v638, %v284
    %650 = vrot.lane.b32.xlu0 %v648, 64
    %v651 = vpop.permute.xlu0 %650
    %v653 = vmul.f32 %v647, %v651
    %655 = vrot.lane.b32.xlu0 %v653, 64
    %v656 = vpop.permute.xlu0 %655
    %v658 = vadd.f32 %v563, %v656
    %v659 = vtanh.pop %v658
    %v660 = vsub.f32 1.0, %v647
    %662 = vrot.lane.b32.xlu0 %v659, 96
    %v663 = vpop.permute.xlu0 %662
    %v665 = vmul.f32 %v660, %v663
    %v666 = vmul.f32 %v647, %v486
    %v667 = vadd.f32 %v665, %v666
    %668 = vset.pattern.permute.xlu0 3
    %669 = vperm.xlu0 %668, %v95
    %v670 = vpop.permute.xlu0 %669
    %vm671 = vcmp.eq.s32.totalorder %v116, %v670
    %v672 = vsel %vm671, 1, 0
    %v673 = vcvt.s32.f32 %v672
    %v675 = vsel %vm123, %v673, 0
    %677 = vmatprep.subr.mxu0 0.0
    %678 = vmatpush1.msra.mxu0 0.0
    %679 = vmatprep.subr.mxu0 0.0
    %680 = vmatpush1.msra.mxu0 0.0
    %681 = vmatprep.subr.mxu0 0.0
    %682 = vmatpush1.msra.mxu0 0.0
    %683 = vmatprep.subr.mxu0 0.0
    %684 = vmatpush1.msra.mxu0 0.0
    %685 = vmatprep.subr.mxu0 0.0
    %686 = vmatpush1.msra.mxu0 0.0
    %687 = vmatprep.subr.mxu0 0.0
    %688 = vmatpush1.msra.mxu0 0.0
    %689 = vmatprep.subr.mxu0 0.0
    %690 = vmatpush1.msra.mxu0 0.0
    %691 = vmatprep.subr.mxu0 0.0
    %692 = vmatpush1.msra.mxu0 0.0
    %693 = vmatprep.subr.mxu0 0.0
    %694 = vmatpush1.msra.mxu0 0.0
    %695 = vmatprep.subr.mxu0 0.0
    %696 = vmatpush1.msra.mxu0 0.0
    %697 = vmatprep.subr.mxu0 0.0
    %698 = vmatpush1.msra.mxu0 0.0
    %699 = vmatprep.subr.mxu0 0.0
    %700 = vmatpush1.msra.mxu0 0.0
    %701 = vmatprep.subr.mxu0 0.0
    %702 = vmatpush1.msra.mxu0 0.0
    %703 = vmatprep.subr.mxu0 0.0
    %704 = vmatpush1.msra.mxu0 0.0
    %705 = vmatprep.subr.mxu0 0.0
    %706 = vmatpush1.msra.mxu0 %v97
    %707 = vmatprep.subr.mxu0 0.0
    %708 = vmatpush1.msra.mxu0 %v96
    %709 = vmatprep.subr.mxu0 0.0
    %710 = vmatpush2.msra.mxu0 0.0
    %711 = vmatprep.subr.mxu0 0.0
    %712 = vmatpush2.msra.mxu0 0.0
    %713 = vmatprep.subr.mxu0 0.0
    %714 = vmatpush2.msra.mxu0 0.0
    %715 = vmatprep.subr.mxu0 0.0
    %716 = vmatpush2.msra.mxu0 0.0
    %717 = vmatprep.subr.mxu0 0.0
    %718 = vmatpush2.msra.mxu0 0.0
    %719 = vmatprep.subr.mxu0 0.0
    %720 = vmatpush2.msra.mxu0 0.0
    %721 = vmatprep.subr.mxu0 0.0
    %722 = vmatpush2.msra.mxu0 0.0
    %723 = vmatprep.subr.mxu0 0.0
    %724 = vmatpush2.msra.mxu0 0.0
    %725 = vmatprep.subr.mxu0 0.0
    %726 = vmatpush2.msra.mxu0 0.0
    %727 = vmatprep.subr.mxu0 0.0
    %728 = vmatpush2.msra.mxu0 0.0
    %729 = vmatprep.subr.mxu0 0.0
    %730 = vmatpush2.msra.mxu0 0.0
    %731 = vmatprep.subr.mxu0 0.0
    %732 = vmatpush2.msra.mxu0 0.0
    %733 = vmatprep.subr.mxu0 0.0
    %734 = vmatpush2.msra.mxu0 0.0
    %735 = vmatprep.subr.mxu0 0.0
    %736 = vmatpush2.msra.mxu0 0.0
    %737 = vmatprep.subr.mxu0 0.0
    %738 = vmatpush2.msra.mxu0 0.0
    %739 = vmatprep.subr.mxu0 0.0
    %740 = vmatpush2.msra.mxu0 0.0
    %741 = vmatprep.mubr.f32.mxu0 0.0
    %742 = vmatmul.mubr.f32.gmra.mxu0 %v675
    %v743 = vpop.f32.mrf.mxu0
    %v744 = vadd.f32 0.0, %v743
    %v745 = vpop.f32.mrf.mxu0
    %746 = vdwg.mxu0
    %748 = vrot.lane.b32.xlu0 %v667, 96
    %v749 = vpop.permute.xlu0 %748
    %v750 = vsel %vm197, %v749, 0
    %752 = vmatprep.subr.mxu0 0.0
    %753 = vmatpush1.msra.mxu0 0.0
    %754 = vmatprep.subr.mxu0 0.0
    %755 = vmatpush1.msra.mxu0 0.0
    %756 = vmatprep.subr.mxu0 0.0
    %757 = vmatpush1.msra.mxu0 0.0
    %758 = vmatprep.subr.mxu0 0.0
    %759 = vmatpush1.msra.mxu0 0.0
    %760 = vmatprep.subr.mxu0 0.0
    %761 = vmatpush1.msra.mxu0 0.0
    %762 = vmatprep.subr.mxu0 0.0
    %763 = vmatpush1.msra.mxu0 0.0
    %764 = vmatprep.subr.mxu0 0.0
    %765 = vmatpush1.msra.mxu0 0.0
    %766 = vmatprep.subr.mxu0 0.0
    %767 = vmatpush1.msra.mxu0 0.0
    %768 = vmatprep.subr.mxu0 0.0
    %769 = vmatpush1.msra.mxu0 0.0
    %770 = vmatprep.subr.mxu0 0.0
    %771 = vmatpush1.msra.mxu0 0.0
    %772 = vmatprep.subr.mxu0 0.0
    %773 = vmatpush1.msra.mxu0 0.0
    %774 = vmatprep.subr.mxu0 0.0
    %775 = vmatpush1.msra.mxu0 0.0
    %776 = vmatprep.subr.mxu0 0.0
    %777 = vmatpush1.msra.mxu0 %v101
    %778 = vmatprep.subr.mxu0 0.0
    %779 = vmatpush1.msra.mxu0 %v100
    %780 = vmatprep.subr.mxu0 0.0
    %781 = vmatpush1.msra.mxu0 %v99
    %782 = vmatprep.subr.mxu0 0.0
    %783 = vmatpush1.msra.mxu0 %v98
    %784 = vmatprep.subr.mxu0 0.0
    %785 = vmatpush2.msra.mxu0 0.0
    %786 = vmatprep.subr.mxu0 0.0
    %787 = vmatpush2.msra.mxu0 0.0
    %788 = vmatprep.subr.mxu0 0.0
    %789 = vmatpush2.msra.mxu0 0.0
    %790 = vmatprep.subr.mxu0 0.0
    %791 = vmatpush2.msra.mxu0 0.0
    %792 = vmatprep.subr.mxu0 0.0
    %793 = vmatpush2.msra.mxu0 0.0
    %794 = vmatprep.subr.mxu0 0.0
    %795 = vmatpush2.msra.mxu0 0.0
    %796 = vmatprep.subr.mxu0 0.0
    %797 = vmatpush2.msra.mxu0 0.0
    %798 = vmatprep.subr.mxu0 0.0
    %799 = vmatpush2.msra.mxu0 0.0
    %800 = vmatprep.subr.mxu0 0.0
    %801 = vmatpush2.msra.mxu0 0.0
    %802 = vmatprep.subr.mxu0 0.0
    %803 = vmatpush2.msra.mxu0 0.0
    %804 = vmatprep.subr.mxu0 0.0
    %805 = vmatpush2.msra.mxu0 0.0
    %806 = vmatprep.subr.mxu0 0.0
    %807 = vmatpush2.msra.mxu0 0.0
    %808 = vmatprep.subr.mxu0 0.0
    %809 = vmatpush2.msra.mxu0 0.0
    %810 = vmatprep.subr.mxu0 0.0
    %811 = vmatpush2.msra.mxu0 0.0
    %812 = vmatprep.subr.mxu0 0.0
    %813 = vmatpush2.msra.mxu0 0.0
    %814 = vmatprep.subr.mxu0 0.0
    %815 = vmatpush2.msra.mxu0 0.0
    %816 = vmatprep.mubr.f32.mxu0 0.0
    %817 = vmatmul.mubr.f32.gmra.mxu0 %v750
    %v818 = vpop.f32.mrf.mxu0
    %v819 = vadd.f32 0.0, %v818
    %v820 = vpop.f32.mrf.mxu0
    %821 = vdwg.mxu0
    %v822 = vadd.f32 %v744, %v819
    %v823 = vxor.u32 %v822, 2147483648
    %v824 = vmul.f32 %v823, 1.442695
    %v825 = vpow.pop %v824
    %v826 = vadd.f32 %v825, 1.0
    %v827 = vrcp.pop %v826
    %v828 = vmul.f32 1.0, %v827
    %v829 = vadd.f32 %v819, %v284
    %831 = vrot.lane.b32.xlu0 %v829, 64
    %v832 = vpop.permute.xlu0 %831
    %v834 = vmul.f32 %v828, %v832
    %836 = vrot.lane.b32.xlu0 %v834, 64
    %v837 = vpop.permute.xlu0 %836
    %v839 = vadd.f32 %v744, %v837
    %v840 = vtanh.pop %v839
    %v841 = vsub.f32 1.0, %v828
    %843 = vrot.lane.b32.xlu0 %v840, 96
    %v844 = vpop.permute.xlu0 %843
    %v846 = vmul.f32 %v841, %v844
    %v847 = vmul.f32 %v828, %v667
    %v848 = vadd.f32 %v846, %v847
    %849 = vset.pattern.permute.xlu0 4
    %850 = vperm.xlu0 %849, %v95
    %v851 = vpop.permute.xlu0 %850
    %vm852 = vcmp.eq.s32.totalorder %v116, %v851
    %v853 = vsel %vm852, 1, 0
    %v854 = vcvt.s32.f32 %v853
    %v856 = vsel %vm123, %v854, 0
    %858 = vmatprep.subr.mxu0 0.0
    %859 = vmatpush1.msra.mxu0 0.0
    %860 = vmatprep.subr.mxu0 0.0
    %861 = vmatpush1.msra.mxu0 0.0
    %862 = vmatprep.subr.mxu0 0.0
    %863 = vmatpush1.msra.mxu0 0.0
    %864 = vmatprep.subr.mxu0 0.0
    %865 = vmatpush1.msra.mxu0 0.0
    %866 = vmatprep.subr.mxu0 0.0
    %867 = vmatpush1.msra.mxu0 0.0
    %868 = vmatprep.subr.mxu0 0.0
    %869 = vmatpush1.msra.mxu0 0.0
    %870 = vmatprep.subr.mxu0 0.0
    %871 = vmatpush1.msra.mxu0 0.0
    %872 = vmatprep.subr.mxu0 0.0
    %873 = vmatpush1.msra.mxu0 0.0
    %874 = vmatprep.subr.mxu0 0.0
    %875 = vmatpush1.msra.mxu0 0.0
    %876 = vmatprep.subr.mxu0 0.0
    %877 = vmatpush1.msra.mxu0 0.0
    %878 = vmatprep.subr.mxu0 0.0
    %879 = vmatpush1.msra.mxu0 0.0
    %880 = vmatprep.subr.mxu0 0.0
    %881 = vmatpush1.msra.mxu0 0.0
    %882 = vmatprep.subr.mxu0 0.0
    %883 = vmatpush1.msra.mxu0 0.0
    %884 = vmatprep.subr.mxu0 0.0
    %885 = vmatpush1.msra.mxu0 0.0
    %886 = vmatprep.subr.mxu0 0.0
    %887 = vmatpush1.msra.mxu0 %v97
    %888 = vmatprep.subr.mxu0 0.0
    %889 = vmatpush1.msra.mxu0 %v96
    %890 = vmatprep.subr.mxu0 0.0
    %891 = vmatpush2.msra.mxu0 0.0
    %892 = vmatprep.subr.mxu0 0.0
    %893 = vmatpush2.msra.mxu0 0.0
    %894 = vmatprep.subr.mxu0 0.0
    %895 = vmatpush2.msra.mxu0 0.0
    %896 = vmatprep.subr.mxu0 0.0
    %897 = vmatpush2.msra.mxu0 0.0
    %898 = vmatprep.subr.mxu0 0.0
    %899 = vmatpush2.msra.mxu0 0.0
    %900 = vmatprep.subr.mxu0 0.0
    %901 = vmatpush2.msra.mxu0 0.0
    %902 = vmatprep.subr.mxu0 0.0
    %903 = vmatpush2.msra.mxu0 0.0
    %904 = vmatprep.subr.mxu0 0.0
    %905 = vmatpush2.msra.mxu0 0.0
    %906 = vmatprep.subr.mxu0 0.0
    %907 = vmatpush2.msra.mxu0 0.0
    %908 = vmatprep.subr.mxu0 0.0
    %909 = vmatpush2.msra.mxu0 0.0
    %910 = vmatprep.subr.mxu0 0.0
    %911 = vmatpush2.msra.mxu0 0.0
    %912 = vmatprep.subr.mxu0 0.0
    %913 = vmatpush2.msra.mxu0 0.0
    %914 = vmatprep.subr.mxu0 0.0
    %915 = vmatpush2.msra.mxu0 0.0
    %916 = vmatprep.subr.mxu0 0.0
    %917 = vmatpush2.msra.mxu0 0.0
    %918 = vmatprep.subr.mxu0 0.0
    %919 = vmatpush2.msra.mxu0 0.0
    %920 = vmatprep.subr.mxu0 0.0
    %921 = vmatpush2.msra.mxu0 0.0
    %922 = vmatprep.mubr.f32.mxu0 0.0
    %923 = vmatmul.mubr.f32.gmra.mxu0 %v856
    %v924 = vpop.f32.mrf.mxu0
    %v925 = vadd.f32 0.0, %v924
    %v926 = vpop.f32.mrf.mxu0
    %927 = vdwg.mxu0
    %929 = vrot.lane.b32.xlu0 %v848, 96
    %v930 = vpop.permute.xlu0 %929
    %v931 = vsel %vm197, %v930, 0
    %933 = vmatprep.subr.mxu0 0.0
    %934 = vmatpush1.msra.mxu0 0.0
    %935 = vmatprep.subr.mxu0 0.0
    %936 = vmatpush1.msra.mxu0 0.0
    %937 = vmatprep.subr.mxu0 0.0
    %938 = vmatpush1.msra.mxu0 0.0
    %939 = vmatprep.subr.mxu0 0.0
    %940 = vmatpush1.msra.mxu0 0.0
    %941 = vmatprep.subr.mxu0 0.0
    %942 = vmatpush1.msra.mxu0 0.0
    %943 = vmatprep.subr.mxu0 0.0
    %944 = vmatpush1.msra.mxu0 0.0
    %945 = vmatprep.subr.mxu0 0.0
    %946 = vmatpush1.msra.mxu0 0.0
    %947 = vmatprep.subr.mxu0 0.0
    %948 = vmatpush1.msra.mxu0 0.0
    %949 = vmatprep.subr.mxu0 0.0
    %950 = vmatpush1.msra.mxu0 0.0
    %951 = vmatprep.subr.mxu0 0.0
    %952 = vmatpush1.msra.mxu0 0.0
    %953 = vmatprep.subr.mxu0 0.0
    %954 = vmatpush1.msra.mxu0 0.0
    %955 = vmatprep.subr.mxu0 0.0
    %956 = vmatpush1.msra.mxu0 0.0
    %957 = vmatprep.subr.mxu0 0.0
    %958 = vmatpush1.msra.mxu0 %v101
    %959 = vmatprep.subr.mxu0 0.0
    %960 = vmatpush1.msra.mxu0 %v100
    %961 = vmatprep.subr.mxu0 0.0
    %962 = vmatpush1.msra.mxu0 %v99
    %963 = vmatprep.subr.mxu0 0.0
    %964 = vmatpush1.msra.mxu0 %v98
    %965 = vmatprep.subr.mxu0 0.0
    %966 = vmatpush2.msra.mxu0 0.0
    %967 = vmatprep.subr.mxu0 0.0
    %968 = vmatpush2.msra.mxu0 0.0
    %969 = vmatprep.subr.mxu0 0.0
    %970 = vmatpush2.msra.mxu0 0.0
    %971 = vmatprep.subr.mxu0 0.0
    %972 = vmatpush2.msra.mxu0 0.0
    %973 = vmatprep.subr.mxu0 0.0
    %974 = vmatpush2.msra.mxu0 0.0
    %975 = vmatprep.subr.mxu0 0.0
    %976 = vmatpush2.msra.mxu0 0.0
    %977 = vmatprep.subr.mxu0 0.0
    %978 = vmatpush2.msra.mxu0 0.0
    %979 = vmatprep.subr.mxu0 0.0
    %980 = vmatpush2.msra.mxu0 0.0
    %981 = vmatprep.subr.mxu0 0.0
    %982 = vmatpush2.msra.mxu0 0.0
    %983 = vmatprep.subr.mxu0 0.0
    %984 = vmatpush2.msra.mxu0 0.0
    %985 = vmatprep.subr.mxu0 0.0
    %986 = vmatpush2.msra.mxu0 0.0
    %987 = vmatprep.subr.mxu0 0.0
    %988 = vmatpush2.msra.mxu0 0.0
    %989 = vmatprep.subr.mxu0 0.0
    %990 = vmatpush2.msra.mxu0 0.0
    %991 = vmatprep.subr.mxu0 0.0
    %992 = vmatpush2.msra.mxu0 0.0
    %993 = vmatprep.subr.mxu0 0.0
    %994 = vmatpush2.msra.mxu0 0.0
    %995 = vmatprep.subr.mxu0 0.0
    %996 = vmatpush2.msra.mxu0 0.0
    %997 = vmatprep.mubr.f32.mxu0 0.0
    %998 = vmatmul.mubr.f32.gmra.mxu0 %v931
    %v999 = vpop.f32.mrf.mxu0
    %v1000 = vadd.f32 0.0, %v999
    %v1001 = vpop.f32.mrf.mxu0
    %1002 = vdwg.mxu0
    %v1003 = vadd.f32 %v925, %v1000
    %v1004 = vxor.u32 %v1003, 2147483648
    %v1005 = vmul.f32 %v1004, 1.442695
    %v1006 = vpow.pop %v1005
    %v1007 = vadd.f32 %v1006, 1.0
    %v1008 = vrcp.pop %v1007
    %v1009 = vmul.f32 1.0, %v1008
    %v1010 = vadd.f32 %v1000, %v284
    %1012 = vrot.lane.b32.xlu0 %v1010, 64
    %v1013 = vpop.permute.xlu0 %1012
    %v1015 = vmul.f32 %v1009, %v1013
    %1017 = vrot.lane.b32.xlu0 %v1015, 64
    %v1018 = vpop.permute.xlu0 %1017
    %v1020 = vadd.f32 %v925, %v1018
    %v1021 = vtanh.pop %v1020
    %v1022 = vsub.f32 1.0, %v1009
    %1024 = vrot.lane.b32.xlu0 %v1021, 96
    %v1025 = vpop.permute.xlu0 %1024
    %v1027 = vmul.f32 %v1022, %v1025
    %v1028 = vmul.f32 %v1009, %v848
    %v1029 = vadd.f32 %v1027, %v1028
    %1030 = vset.pattern.permute.xlu0 5
    %1031 = vperm.xlu0 %1030, %v95
    %v1032 = vpop.permute.xlu0 %1031
    %vm1033 = vcmp.eq.s32.totalorder %v116, %v1032
    %v1034 = vsel %vm1033, 1, 0
    %v1035 = vcvt.s32.f32 %v1034
    %v1037 = vsel %vm123, %v1035, 0
    %1039 = vmatprep.subr.mxu0 0.0
    %1040 = vmatpush1.msra.mxu0 0.0
    %1041 = vmatprep.subr.mxu0 0.0
    %1042 = vmatpush1.msra.mxu0 0.0
    %1043 = vmatprep.subr.mxu0 0.0
    %1044 = vmatpush1.msra.mxu0 0.0
    %1045 = vmatprep.subr.mxu0 0.0
    %1046 = vmatpush1.msra.mxu0 0.0
    %1047 = vmatprep.subr.mxu0 0.0
    %1048 = vmatpush1.msra.mxu0 0.0
    %1049 = vmatprep.subr.mxu0 0.0
    %1050 = vmatpush1.msra.mxu0 0.0
    %1051 = vmatprep.subr.mxu0 0.0
    %1052 = vmatpush1.msra.mxu0 0.0
    %1053 = vmatprep.subr.mxu0 0.0
    %1054 = vmatpush1.msra.mxu0 0.0
    %1055 = vmatprep.subr.mxu0 0.0
    %1056 = vmatpush1.msra.mxu0 0.0
    %1057 = vmatprep.subr.mxu0 0.0
    %1058 = vmatpush1.msra.mxu0 0.0
    %1059 = vmatprep.subr.mxu0 0.0
    %1060 = vmatpush1.msra.mxu0 0.0
    %1061 = vmatprep.subr.mxu0 0.0
    %1062 = vmatpush1.msra.mxu0 0.0
    %1063 = vmatprep.subr.mxu0 0.0
    %1064 = vmatpush1.msra.mxu0 0.0
    %1065 = vmatprep.subr.mxu0 0.0
    %1066 = vmatpush1.msra.mxu0 0.0
    %1067 = vmatprep.subr.mxu0 0.0
    %1068 = vmatpush1.msra.mxu0 %v97
    %1069 = vmatprep.subr.mxu0 0.0
    %1070 = vmatpush1.msra.mxu0 %v96
    %1071 = vmatprep.subr.mxu0 0.0
    %1072 = vmatpush2.msra.mxu0 0.0
    %1073 = vmatprep.subr.mxu0 0.0
    %1074 = vmatpush2.msra.mxu0 0.0
    %1075 = vmatprep.subr.mxu0 0.0
    %1076 = vmatpush2.msra.mxu0 0.0
    %1077 = vmatprep.subr.mxu0 0.0
    %1078 = vmatpush2.msra.mxu0 0.0
    %1079 = vmatprep.subr.mxu0 0.0
    %1080 = vmatpush2.msra.mxu0 0.0
    %1081 = vmatprep.subr.mxu0 0.0
    %1082 = vmatpush2.msra.mxu0 0.0
    %1083 = vmatprep.subr.mxu0 0.0
    %1084 = vmatpush2.msra.mxu0 0.0
    %1085 = vmatprep.subr.mxu0 0.0
    %1086 = vmatpush2.msra.mxu0 0.0
    %1087 = vmatprep.subr.mxu0 0.0
    %1088 = vmatpush2.msra.mxu0 0.0
    %1089 = vmatprep.subr.mxu0 0.0
    %1090 = vmatpush2.msra.mxu0 0.0
    %1091 = vmatprep.subr.mxu0 0.0
    %1092 = vmatpush2.msra.mxu0 0.0
    %1093 = vmatprep.subr.mxu0 0.0
    %1094 = vmatpush2.msra.mxu0 0.0
    %1095 = vmatprep.subr.mxu0 0.0
    %1096 = vmatpush2.msra.mxu0 0.0
    %1097 = vmatprep.subr.mxu0 0.0
    %1098 = vmatpush2.msra.mxu0 0.0
    %1099 = vmatprep.subr.mxu0 0.0
    %1100 = vmatpush2.msra.mxu0 0.0
    %1101 = vmatprep.subr.mxu0 0.0
    %1102 = vmatpush2.msra.mxu0 0.0
    %1103 = vmatprep.mubr.f32.mxu0 0.0
    %1104 = vmatmul.mubr.f32.gmra.mxu0 %v1037
    %v1105 = vpop.f32.mrf.mxu0
    %v1106 = vadd.f32 0.0, %v1105
    %v1107 = vpop.f32.mrf.mxu0
    %1108 = vdwg.mxu0
    %1110 = vrot.lane.b32.xlu0 %v1029, 96
    %v1111 = vpop.permute.xlu0 %1110
    %v1112 = vsel %vm197, %v1111, 0
    %1114 = vmatprep.subr.mxu0 0.0
    %1115 = vmatpush1.msra.mxu0 0.0
    %1116 = vmatprep.subr.mxu0 0.0
    %1117 = vmatpush1.msra.mxu0 0.0
    %1118 = vmatprep.subr.mxu0 0.0
    %1119 = vmatpush1.msra.mxu0 0.0
    %1120 = vmatprep.subr.mxu0 0.0
    %1121 = vmatpush1.msra.mxu0 0.0
    %1122 = vmatprep.subr.mxu0 0.0
    %1123 = vmatpush1.msra.mxu0 0.0
    %1124 = vmatprep.subr.mxu0 0.0
    %1125 = vmatpush1.msra.mxu0 0.0
    %1126 = vmatprep.subr.mxu0 0.0
    %1127 = vmatpush1.msra.mxu0 0.0
    %1128 = vmatprep.subr.mxu0 0.0
    %1129 = vmatpush1.msra.mxu0 0.0
    %1130 = vmatprep.subr.mxu0 0.0
    %1131 = vmatpush1.msra.mxu0 0.0
    %1132 = vmatprep.subr.mxu0 0.0
    %1133 = vmatpush1.msra.mxu0 0.0
    %1134 = vmatprep.subr.mxu0 0.0
    %1135 = vmatpush1.msra.mxu0 0.0
    %1136 = vmatprep.subr.mxu0 0.0
    %1137 = vmatpush1.msra.mxu0 0.0
    %1138 = vmatprep.subr.mxu0 0.0
    %1139 = vmatpush1.msra.mxu0 %v101
    %1140 = vmatprep.subr.mxu0 0.0
    %1141 = vmatpush1.msra.mxu0 %v100
    %1142 = vmatprep.subr.mxu0 0.0
    %1143 = vmatpush1.msra.mxu0 %v99
    %1144 = vmatprep.subr.mxu0 0.0
    %1145 = vmatpush1.msra.mxu0 %v98
    %1146 = vmatprep.subr.mxu0 0.0
    %1147 = vmatpush2.msra.mxu0 0.0
    %1148 = vmatprep.subr.mxu0 0.0
    %1149 = vmatpush2.msra.mxu0 0.0
    %1150 = vmatprep.subr.mxu0 0.0
    %1151 = vmatpush2.msra.mxu0 0.0
    %1152 = vmatprep.subr.mxu0 0.0
    %1153 = vmatpush2.msra.mxu0 0.0
    %1154 = vmatprep.subr.mxu0 0.0
    %1155 = vmatpush2.msra.mxu0 0.0
    %1156 = vmatprep.subr.mxu0 0.0
    %1157 = vmatpush2.msra.mxu0 0.0
    %1158 = vmatprep.subr.mxu0 0.0
    %1159 = vmatpush2.msra.mxu0 0.0
    %1160 = vmatprep.subr.mxu0 0.0
    %1161 = vmatpush2.msra.mxu0 0.0
    %1162 = vmatprep.subr.mxu0 0.0
    %1163 = vmatpush2.msra.mxu0 0.0
    %1164 = vmatprep.subr.mxu0 0.0
    %1165 = vmatpush2.msra.mxu0 0.0
    %1166 = vmatprep.subr.mxu0 0.0
    %1167 = vmatpush2.msra.mxu0 0.0
    %1168 = vmatprep.subr.mxu0 0.0
    %1169 = vmatpush2.msra.mxu0 0.0
    %1170 = vmatprep.subr.mxu0 0.0
    %1171 = vmatpush2.msra.mxu0 0.0
    %1172 = vmatprep.subr.mxu0 0.0
    %1173 = vmatpush2.msra.mxu0 0.0
    %1174 = vmatprep.subr.mxu0 0.0
    %1175 = vmatpush2.msra.mxu0 0.0
    %1176 = vmatprep.subr.mxu0 0.0
    %1177 = vmatpush2.msra.mxu0 0.0
    %1178 = vmatprep.mubr.f32.mxu0 0.0
    %1179 = vmatmul.mubr.f32.gmra.mxu0 %v1112
    %v1180 = vpop.f32.mrf.mxu0
    %v1181 = vadd.f32 0.0, %v1180
    %v1182 = vpop.f32.mrf.mxu0
    %1183 = vdwg.mxu0
    %v1184 = vadd.f32 %v1106, %v1181
    %v1185 = vxor.u32 %v1184, 2147483648
    %v1186 = vmul.f32 %v1185, 1.442695
    %v1187 = vpow.pop %v1186
    %v1188 = vadd.f32 %v1187, 1.0
    %v1189 = vrcp.pop %v1188
    %v1190 = vmul.f32 1.0, %v1189
    %v1191 = vadd.f32 %v1181, %v284
    %1193 = vrot.lane.b32.xlu0 %v1191, 64
    %v1194 = vpop.permute.xlu0 %1193
    %v1196 = vmul.f32 %v1190, %v1194
    %1198 = vrot.lane.b32.xlu0 %v1196, 64
    %v1199 = vpop.permute.xlu0 %1198
    %v1201 = vadd.f32 %v1106, %v1199
    %v1202 = vtanh.pop %v1201
    %v1203 = vsub.f32 1.0, %v1190
    %1205 = vrot.lane.b32.xlu0 %v1202, 96
    %v1206 = vpop.permute.xlu0 %1205
    %v1208 = vmul.f32 %v1203, %v1206
    %v1209 = vmul.f32 %v1190, %v1029
    %v1210 = vadd.f32 %v1208, %v1209
    %1211 = vset.pattern.permute.xlu0 6
    %1212 = vperm.xlu0 %1211, %v95
    %v1213 = vpop.permute.xlu0 %1212
    %vm1214 = vcmp.eq.s32.totalorder %v116, %v1213
    %v1215 = vsel %vm1214, 1, 0
    %v1216 = vcvt.s32.f32 %v1215
    %v1218 = vsel %vm123, %v1216, 0
    %1220 = vmatprep.subr.mxu0 0.0
    %1221 = vmatpush1.msra.mxu0 0.0
    %1222 = vmatprep.subr.mxu0 0.0
    %1223 = vmatpush1.msra.mxu0 0.0
    %1224 = vmatprep.subr.mxu0 0.0
    %1225 = vmatpush1.msra.mxu0 0.0
    %1226 = vmatprep.subr.mxu0 0.0
    %1227 = vmatpush1.msra.mxu0 0.0
    %1228 = vmatprep.subr.mxu0 0.0
    %1229 = vmatpush1.msra.mxu0 0.0
    %1230 = vmatprep.subr.mxu0 0.0
    %1231 = vmatpush1.msra.mxu0 0.0
    %1232 = vmatprep.subr.mxu0 0.0
    %1233 = vmatpush1.msra.mxu0 0.0
    %1234 = vmatprep.subr.mxu0 0.0
    %1235 = vmatpush1.msra.mxu0 0.0
    %1236 = vmatprep.subr.mxu0 0.0
    %1237 = vmatpush1.msra.mxu0 0.0
    %1238 = vmatprep.subr.mxu0 0.0
    %1239 = vmatpush1.msra.mxu0 0.0
    %1240 = vmatprep.subr.mxu0 0.0
    %1241 = vmatpush1.msra.mxu0 0.0
    %1242 = vmatprep.subr.mxu0 0.0
    %1243 = vmatpush1.msra.mxu0 0.0
    %1244 = vmatprep.subr.mxu0 0.0
    %1245 = vmatpush1.msra.mxu0 0.0
    %1246 = vmatprep.subr.mxu0 0.0
    %1247 = vmatpush1.msra.mxu0 0.0
    %1248 = vmatprep.subr.mxu0 0.0
    %1249 = vmatpush1.msra.mxu0 %v97
    %1250 = vmatprep.subr.mxu0 0.0
    %1251 = vmatpush1.msra.mxu0 %v96
    %1252 = vmatprep.subr.mxu0 0.0
    %1253 = vmatpush2.msra.mxu0 0.0
    %1254 = vmatprep.subr.mxu0 0.0
    %1255 = vmatpush2.msra.mxu0 0.0
    %1256 = vmatprep.subr.mxu0 0.0
    %1257 = vmatpush2.msra.mxu0 0.0
    %1258 = vmatprep.subr.mxu0 0.0
    %1259 = vmatpush2.msra.mxu0 0.0
    %1260 = vmatprep.subr.mxu0 0.0
    %1261 = vmatpush2.msra.mxu0 0.0
    %1262 = vmatprep.subr.mxu0 0.0
    %1263 = vmatpush2.msra.mxu0 0.0
    %1264 = vmatprep.subr.mxu0 0.0
    %1265 = vmatpush2.msra.mxu0 0.0
    %1266 = vmatprep.subr.mxu0 0.0
    %1267 = vmatpush2.msra.mxu0 0.0
    %1268 = vmatprep.subr.mxu0 0.0
    %1269 = vmatpush2.msra.mxu0 0.0
    %1270 = vmatprep.subr.mxu0 0.0
    %1271 = vmatpush2.msra.mxu0 0.0
    %1272 = vmatprep.subr.mxu0 0.0
    %1273 = vmatpush2.msra.mxu0 0.0
    %1274 = vmatprep.subr.mxu0 0.0
    %1275 = vmatpush2.msra.mxu0 0.0
    %1276 = vmatprep.subr.mxu0 0.0
    %1277 = vmatpush2.msra.mxu0 0.0
    %1278 = vmatprep.subr.mxu0 0.0
    %1279 = vmatpush2.msra.mxu0 0.0
    %1280 = vmatprep.subr.mxu0 0.0
    %1281 = vmatpush2.msra.mxu0 0.0
    %1282 = vmatprep.subr.mxu0 0.0
    %1283 = vmatpush2.msra.mxu0 0.0
    %1284 = vmatprep.mubr.f32.mxu0 0.0
    %1285 = vmatmul.mubr.f32.gmra.mxu0 %v1218
    %v1286 = vpop.f32.mrf.mxu0
    %v1287 = vadd.f32 0.0, %v1286
    %v1288 = vpop.f32.mrf.mxu0
    %1289 = vdwg.mxu0
    %1291 = vrot.lane.b32.xlu0 %v1210, 96
    %v1292 = vpop.permute.xlu0 %1291
    %v1293 = vsel %vm197, %v1292, 0
    %1295 = vmatprep.subr.mxu0 0.0
    %1296 = vmatpush1.msra.mxu0 0.0
    %1297 = vmatprep.subr.mxu0 0.0
    %1298 = vmatpush1.msra.mxu0 0.0
    %1299 = vmatprep.subr.mxu0 0.0
    %1300 = vmatpush1.msra.mxu0 0.0
    %1301 = vmatprep.subr.mxu0 0.0
    %1302 = vmatpush1.msra.mxu0 0.0
    %1303 = vmatprep.subr.mxu0 0.0
    %1304 = vmatpush1.msra.mxu0 0.0
    %1305 = vmatprep.subr.mxu0 0.0
    %1306 = vmatpush1.msra.mxu0 0.0
    %1307 = vmatprep.subr.mxu0 0.0
    %1308 = vmatpush1.msra.mxu0 0.0
    %1309 = vmatprep.subr.mxu0 0.0
    %1310 = vmatpush1.msra.mxu0 0.0
    %1311 = vmatprep.subr.mxu0 0.0
    %1312 = vmatpush1.msra.mxu0 0.0
    %1313 = vmatprep.subr.mxu0 0.0
    %1314 = vmatpush1.msra.mxu0 0.0
    %1315 = vmatprep.subr.mxu0 0.0
    %1316 = vmatpush1.msra.mxu0 0.0
    %1317 = vmatprep.subr.mxu0 0.0
    %1318 = vmatpush1.msra.mxu0 0.0
    %1319 = vmatprep.subr.mxu0 0.0
    %1320 = vmatpush1.msra.mxu0 %v101
    %1321 = vmatprep.subr.mxu0 0.0
    %1322 = vmatpush1.msra.mxu0 %v100
    %1323 = vmatprep.subr.mxu0 0.0
    %1324 = vmatpush1.msra.mxu0 %v99
    %1325 = vmatprep.subr.mxu0 0.0
    %1326 = vmatpush1.msra.mxu0 %v98
    %1327 = vmatprep.subr.mxu0 0.0
    %1328 = vmatpush2.msra.mxu0 0.0
    %1329 = vmatprep.subr.mxu0 0.0
    %1330 = vmatpush2.msra.mxu0 0.0
    %1331 = vmatprep.subr.mxu0 0.0
    %1332 = vmatpush2.msra.mxu0 0.0
    %1333 = vmatprep.subr.mxu0 0.0
    %1334 = vmatpush2.msra.mxu0 0.0
    %1335 = vmatprep.subr.mxu0 0.0
    %1336 = vmatpush2.msra.mxu0 0.0
    %1337 = vmatprep.subr.mxu0 0.0
    %1338 = vmatpush2.msra.mxu0 0.0
    %1339 = vmatprep.subr.mxu0 0.0
    %1340 = vmatpush2.msra.mxu0 0.0
    %1341 = vmatprep.subr.mxu0 0.0
    %1342 = vmatpush2.msra.mxu0 0.0
    %1343 = vmatprep.subr.mxu0 0.0
    %1344 = vmatpush2.msra.mxu0 0.0
    %1345 = vmatprep.subr.mxu0 0.0
    %1346 = vmatpush2.msra.mxu0 0.0
    %1347 = vmatprep.subr.mxu0 0.0
    %1348 = vmatpush2.msra.mxu0 0.0
    %1349 = vmatprep.subr.mxu0 0.0
    %1350 = vmatpush2.msra.mxu0 0.0
    %1351 = vmatprep.subr.mxu0 0.0
    %1352 = vmatpush2.msra.mxu0 0.0
    %1353 = vmatprep.subr.mxu0 0.0
    %1354 = vmatpush2.msra.mxu0 0.0
    %1355 = vmatprep.subr.mxu0 0.0
    %1356 = vmatpush2.msra.mxu0 0.0
    %1357 = vmatprep.subr.mxu0 0.0
    %1358 = vmatpush2.msra.mxu0 0.0
    %1359 = vmatprep.mubr.f32.mxu0 0.0
    %1360 = vmatmul.mubr.f32.gmra.mxu0 %v1293
    %v1361 = vpop.f32.mrf.mxu0
    %v1362 = vadd.f32 0.0, %v1361
    %v1363 = vpop.f32.mrf.mxu0
    %1364 = vdwg.mxu0
    %v1365 = vadd.f32 %v1287, %v1362
    %v1366 = vxor.u32 %v1365, 2147483648
    %v1367 = vmul.f32 %v1366, 1.442695
    %v1368 = vpow.pop %v1367
    %v1369 = vadd.f32 %v1368, 1.0
    %v1370 = vrcp.pop %v1369
    %v1371 = vmul.f32 1.0, %v1370
    %v1372 = vadd.f32 %v1362, %v284
    %1374 = vrot.lane.b32.xlu0 %v1372, 64
    %v1375 = vpop.permute.xlu0 %1374
    %v1377 = vmul.f32 %v1371, %v1375
    %1379 = vrot.lane.b32.xlu0 %v1377, 64
    %v1380 = vpop.permute.xlu0 %1379
    %v1382 = vadd.f32 %v1287, %v1380
    %v1383 = vtanh.pop %v1382
    %v1384 = vsub.f32 1.0, %v1371
    %1386 = vrot.lane.b32.xlu0 %v1383, 96
    %v1387 = vpop.permute.xlu0 %1386
    %v1389 = vmul.f32 %v1384, %v1387
    %v1390 = vmul.f32 %v1371, %v1210
    %v1391 = vadd.f32 %v1389, %v1390
    %1392 = vset.pattern.permute.xlu0 7
    %1393 = vperm.xlu0 %1392, %v95
    %v1394 = vpop.permute.xlu0 %1393
    %vm1395 = vcmp.eq.s32.totalorder %v116, %v1394
    %v1396 = vsel %vm1395, 1, 0
    %v1397 = vcvt.s32.f32 %v1396
    %v1399 = vsel %vm123, %v1397, 0
    %1401 = vmatprep.subr.mxu0 0.0
    %1402 = vmatpush1.msra.mxu0 0.0
    %1403 = vmatprep.subr.mxu0 0.0
    %1404 = vmatpush1.msra.mxu0 0.0
    %1405 = vmatprep.subr.mxu0 0.0
    %1406 = vmatpush1.msra.mxu0 0.0
    %1407 = vmatprep.subr.mxu0 0.0
    %1408 = vmatpush1.msra.mxu0 0.0
    %1409 = vmatprep.subr.mxu0 0.0
    %1410 = vmatpush1.msra.mxu0 0.0
    %1411 = vmatprep.subr.mxu0 0.0
    %1412 = vmatpush1.msra.mxu0 0.0
    %1413 = vmatprep.subr.mxu0 0.0
    %1414 = vmatpush1.msra.mxu0 0.0
    %1415 = vmatprep.subr.mxu0 0.0
    %1416 = vmatpush1.msra.mxu0 0.0
    %1417 = vmatprep.subr.mxu0 0.0
    %1418 = vmatpush1.msra.mxu0 0.0
    %1419 = vmatprep.subr.mxu0 0.0
    %1420 = vmatpush1.msra.mxu0 0.0
    %1421 = vmatprep.subr.mxu0 0.0
    %1422 = vmatpush1.msra.mxu0 0.0
    %1423 = vmatprep.subr.mxu0 0.0
    %1424 = vmatpush1.msra.mxu0 0.0
    %1425 = vmatprep.subr.mxu0 0.0
    %1426 = vmatpush1.msra.mxu0 0.0
    %1427 = vmatprep.subr.mxu0 0.0
    %1428 = vmatpush1.msra.mxu0 0.0
    %1429 = vmatprep.subr.mxu0 0.0
    %1430 = vmatpush1.msra.mxu0 %v97
    %1431 = vmatprep.subr.mxu0 0.0
    %1432 = vmatpush1.msra.mxu0 %v96
    %1433 = vmatprep.subr.mxu0 0.0
    %1434 = vmatpush2.msra.mxu0 0.0
    %1435 = vmatprep.subr.mxu0 0.0
    %1436 = vmatpush2.msra.mxu0 0.0
    %1437 = vmatprep.subr.mxu0 0.0
    %1438 = vmatpush2.msra.mxu0 0.0
    %1439 = vmatprep.subr.mxu0 0.0
    %1440 = vmatpush2.msra.mxu0 0.0
    %1441 = vmatprep.subr.mxu0 0.0
    %1442 = vmatpush2.msra.mxu0 0.0
    %1443 = vmatprep.subr.mxu0 0.0
    %1444 = vmatpush2.msra.mxu0 0.0
    %1445 = vmatprep.subr.mxu0 0.0
    %1446 = vmatpush2.msra.mxu0 0.0
    %1447 = vmatprep.subr.mxu0 0.0
    %1448 = vmatpush2.msra.mxu0 0.0
    %1449 = vmatprep.subr.mxu0 0.0
    %1450 = vmatpush2.msra.mxu0 0.0
    %1451 = vmatprep.subr.mxu0 0.0
    %1452 = vmatpush2.msra.mxu0 0.0
    %1453 = vmatprep.subr.mxu0 0.0
    %1454 = vmatpush2.msra.mxu0 0.0
    %1455 = vmatprep.subr.mxu0 0.0
    %1456 = vmatpush2.msra.mxu0 0.0
    %1457 = vmatprep.subr.mxu0 0.0
    %1458 = vmatpush2.msra.mxu0 0.0
    %1459 = vmatprep.subr.mxu0 0.0
    %1460 = vmatpush2.msra.mxu0 0.0
    %1461 = vmatprep.subr.mxu0 0.0
    %1462 = vmatpush2.msra.mxu0 0.0
    %1463 = vmatprep.subr.mxu0 0.0
    %1464 = vmatpush2.msra.mxu0 0.0
    %1465 = vmatprep.mubr.f32.mxu0 0.0
    %1466 = vmatmul.mubr.f32.gmra.mxu0 %v1399
    %v1467 = vpop.f32.mrf.mxu0
    %v1468 = vadd.f32 0.0, %v1467
    %v1469 = vpop.f32.mrf.mxu0
    %1470 = vdwg.mxu0
    %1472 = vrot.lane.b32.xlu0 %v1391, 96
    %v1473 = vpop.permute.xlu0 %1472
    %v1474 = vsel %vm197, %v1473, 0
    %1476 = vmatprep.subr.mxu0 0.0
    %1477 = vmatpush1.msra.mxu0 0.0
    %1478 = vmatprep.subr.mxu0 0.0
    %1479 = vmatpush1.msra.mxu0 0.0
    %1480 = vmatprep.subr.mxu0 0.0
    %1481 = vmatpush1.msra.mxu0 0.0
    %1482 = vmatprep.subr.mxu0 0.0
    %1483 = vmatpush1.msra.mxu0 0.0
    %1484 = vmatprep.subr.mxu0 0.0
    %1485 = vmatpush1.msra.mxu0 0.0
    %1486 = vmatprep.subr.mxu0 0.0
    %1487 = vmatpush1.msra.mxu0 0.0
    %1488 = vmatprep.subr.mxu0 0.0
    %1489 = vmatpush1.msra.mxu0 0.0
    %1490 = vmatprep.subr.mxu0 0.0
    %1491 = vmatpush1.msra.mxu0 0.0
    %1492 = vmatprep.subr.mxu0 0.0
    %1493 = vmatpush1.msra.mxu0 0.0
    %1494 = vmatprep.subr.mxu0 0.0
    %1495 = vmatpush1.msra.mxu0 0.0
    %1496 = vmatprep.subr.mxu0 0.0
    %1497 = vmatpush1.msra.mxu0 0.0
    %1498 = vmatprep.subr.mxu0 0.0
    %1499 = vmatpush1.msra.mxu0 0.0
    %1500 = vmatprep.subr.mxu0 0.0
    %1501 = vmatpush1.msra.mxu0 %v101
    %1502 = vmatprep.subr.mxu0 0.0
    %1503 = vmatpush1.msra.mxu0 %v100
    %1504 = vmatprep.subr.mxu0 0.0
    %1505 = vmatpush1.msra.mxu0 %v99
    %1506 = vmatprep.subr.mxu0 0.0
    %1507 = vmatpush1.msra.mxu0 %v98
    %1508 = vmatprep.subr.mxu0 0.0
    %1509 = vmatpush2.msra.mxu0 0.0
    %1510 = vmatprep.subr.mxu0 0.0
    %1511 = vmatpush2.msra.mxu0 0.0
    %1512 = vmatprep.subr.mxu0 0.0
    %1513 = vmatpush2.msra.mxu0 0.0
    %1514 = vmatprep.subr.mxu0 0.0
    %1515 = vmatpush2.msra.mxu0 0.0
    %1516 = vmatprep.subr.mxu0 0.0
    %1517 = vmatpush2.msra.mxu0 0.0
    %1518 = vmatprep.subr.mxu0 0.0
    %1519 = vmatpush2.msra.mxu0 0.0
    %1520 = vmatprep.subr.mxu0 0.0
    %1521 = vmatpush2.msra.mxu0 0.0
    %1522 = vmatprep.subr.mxu0 0.0
    %1523 = vmatpush2.msra.mxu0 0.0
    %1524 = vmatprep.subr.mxu0 0.0
    %1525 = vmatpush2.msra.mxu0 0.0
    %1526 = vmatprep.subr.mxu0 0.0
    %1527 = vmatpush2.msra.mxu0 0.0
    %1528 = vmatprep.subr.mxu0 0.0
    %1529 = vmatpush2.msra.mxu0 0.0
    %1530 = vmatprep.subr.mxu0 0.0
    %1531 = vmatpush2.msra.mxu0 0.0
    %1532 = vmatprep.subr.mxu0 0.0
    %1533 = vmatpush2.msra.mxu0 0.0
    %1534 = vmatprep.subr.mxu0 0.0
    %1535 = vmatpush2.msra.mxu0 0.0
    %1536 = vmatprep.subr.mxu0 0.0
    %1537 = vmatpush2.msra.mxu0 0.0
    %1538 = vmatprep.subr.mxu0 0.0
    %1539 = vmatpush2.msra.mxu0 0.0
    %1540 = vmatprep.mubr.f32.mxu0 0.0
    %1541 = vmatmul.mubr.f32.gmra.mxu0 %v1474
    %v1542 = vpop.f32.mrf.mxu0
    %v1543 = vadd.f32 0.0, %v1542
    %v1544 = vpop.f32.mrf.mxu0
    %1545 = vdwg.mxu0
    %v1546 = vadd.f32 %v1468, %v1543
    %v1547 = vxor.u32 %v1546, 2147483648
    %v1548 = vmul.f32 %v1547, 1.442695
    %v1549 = vpow.pop %v1548
    %v1550 = vadd.f32 %v1549, 1.0
    %v1551 = vrcp.pop %v1550
    %v1552 = vmul.f32 1.0, %v1551
    %v1553 = vadd.f32 %v1543, %v284
    %1555 = vrot.lane.b32.xlu0 %v1553, 64
    %v1556 = vpop.permute.xlu0 %1555
    %v1558 = vmul.f32 %v1552, %v1556
    %1560 = vrot.lane.b32.xlu0 %v1558, 64
    %v1561 = vpop.permute.xlu0 %1560
    %v1563 = vadd.f32 %v1468, %v1561
    %v1564 = vtanh.pop %v1563
    %v1565 = vsub.f32 1.0, %v1552
    %1567 = vrot.lane.b32.xlu0 %v1564, 96
    %v1568 = vpop.permute.xlu0 %1567
    %v1570 = vmul.f32 %v1565, %v1568
    %v1571 = vmul.f32 %v1552, %v1391
    %v1572 = vadd.f32 %v1570, %v1571
    %vm1573 = vcmp.eq.s32.totalorder %v116, 0
    %v1574 = vsel %vm1573, 1, 0
    %v1575 = vcvt.s32.f32 %v1574
    %1577 = vrot.lane.b32.xlu0 %v1572, 112
    %v1578 = vpop.permute.xlu0 %1577
    %v1580 = vsel %vm123, %v1575, %v1578
    %vm1581 = vcmask 392192
    %v1583 = vsel %vm1581, %v1580, 0
    %1585 = vmatprep.subr.mxu0 0.0
    %1586 = vmatpush1.msra.mxu0 0.0
    %1587 = vmatprep.subr.mxu0 0.0
    %1588 = vmatpush1.msra.mxu0 0.0
    %1589 = vmatprep.subr.mxu0 0.0
    %1590 = vmatpush1.msra.mxu0 0.0
    %1591 = vmatprep.subr.mxu0 0.0
    %1592 = vmatpush1.msra.mxu0 0.0
    %1593 = vmatprep.subr.mxu0 0.0
    %1594 = vmatpush1.msra.mxu0 0.0
    %1595 = vmatprep.subr.mxu0 0.0
    %1596 = vmatpush1.msra.mxu0 0.0
    %1597 = vmatprep.subr.mxu0 0.0
    %1598 = vmatpush1.msra.mxu0 0.0
    %1599 = vmatprep.subr.mxu0 0.0
    %1600 = vmatpush1.msra.mxu0 0.0
    %1601 = vmatprep.subr.mxu0 0.0
    %1602 = vmatpush1.msra.mxu0 0.0
    %1603 = vmatprep.subr.mxu0 0.0
    %1604 = vmatpush1.msra.mxu0 0.0
    %1605 = vmatprep.subr.mxu0 0.0
    %1606 = vmatpush1.msra.mxu0 %v108
    %1607 = vmatprep.subr.mxu0 0.0
    %1608 = vmatpush1.msra.mxu0 %v107
    %1609 = vmatprep.subr.mxu0 0.0
    %1610 = vmatpush1.msra.mxu0 %v106
    %1611 = vmatprep.subr.mxu0 0.0
    %1612 = vmatpush1.msra.mxu0 %v105
    %1613 = vmatprep.subr.mxu0 0.0
    %1614 = vmatpush1.msra.mxu0 %v104
    %1615 = vmatprep.subr.mxu0 0.0
    %1616 = vmatpush1.msra.mxu0 %v103
    %1617 = vmatprep.subr.mxu0 0.0
    %1618 = vmatpush2.msra.mxu0 0.0
    %1619 = vmatprep.subr.mxu0 0.0
    %1620 = vmatpush2.msra.mxu0 0.0
    %1621 = vmatprep.subr.mxu0 0.0
    %1622 = vmatpush2.msra.mxu0 0.0
    %1623 = vmatprep.subr.mxu0 0.0
    %1624 = vmatpush2.msra.mxu0 0.0
    %1625 = vmatprep.subr.mxu0 0.0
    %1626 = vmatpush2.msra.mxu0 0.0
    %1627 = vmatprep.subr.mxu0 0.0
    %1628 = vmatpush2.msra.mxu0 0.0
    %1629 = vmatprep.subr.mxu0 0.0
    %1630 = vmatpush2.msra.mxu0 0.0
    %1631 = vmatprep.subr.mxu0 0.0
    %1632 = vmatpush2.msra.mxu0 0.0
    %1633 = vmatprep.subr.mxu0 0.0
    %1634 = vmatpush2.msra.mxu0 0.0
    %1635 = vmatprep.subr.mxu0 0.0
    %1636 = vmatpush2.msra.mxu0 0.0
    %1637 = vmatprep.subr.mxu0 0.0
    %1638 = vmatpush2.msra.mxu0 0.0
    %1639 = vmatprep.subr.mxu0 0.0
    %1640 = vmatpush2.msra.mxu0 0.0
    %1641 = vmatprep.subr.mxu0 0.0
    %1642 = vmatpush2.msra.mxu0 0.0
    %1643 = vmatprep.subr.mxu0 0.0
    %1644 = vmatpush2.msra.mxu0 0.0
    %1645 = vmatprep.subr.mxu0 0.0
    %1646 = vmatpush2.msra.mxu0 0.0
    %1647 = vmatprep.subr.mxu0 0.0
    %1648 = vmatpush2.msra.mxu0 0.0
    %1649 = vmatprep.mubr.f32.mxu0 0.0
    %1650 = vmatmul.mubr.f32.gmra.mxu0 %v1583
    %v1651 = vpop.f32.mrf.mxu0
    %v1652 = vadd.f32 0.0, %v1651
    %v1653 = vpop.f32.mrf.mxu0
    %1654 = vdwg.mxu0
    %v1655 = vxor.u32 %v1652, 2147483648
    %v1656 = vmul.f32 %v1655, 1.442695
    %v1657 = vpow.pop %v1656
    %v1658 = vadd.f32 %v1657, 1.0
    %v1659 = vrcp.pop %v1658
    %v1660 = vmul.f32 1.0, %v1659
    %v1662 = vlaneseq
    %v1663 = vshrl.u32 %v1662, 7
    %v1664 = vsub.s32 0, %v1663
    %v1665 = vrot.slane %v109, %v1664
    %1666 = vrot.lane.b32.xlu0 %v1665, 96
    %v1667 = vpop.permute.xlu0 %1666
    %v1669 = vadd.f32 %v1652, %v1667
    %1671 = vrot.lane.b32.xlu0 %v1669, 32
    %v1672 = vpop.permute.xlu0 %1671
    %v1674 = vmul.f32 %v1660, %v1672
    %1676 = vrot.lane.b32.xlu0 %v1674, 64
    %v1677 = vpop.permute.xlu0 %1676
    %v1679 = vadd.f32 %v1652, %v1677
    %v1680 = vtanh.pop %v1679
    %v1681 = vsub.f32 1.0, %v1660
    %1683 = vrot.lane.b32.xlu0 %v1680, 96
    %v1684 = vpop.permute.xlu0 %1683
    %v1686 = vmul.f32 %v1681, %v1684
    %v1687 = vmul.f32 %v1660, %v1572
    %v1688 = vadd.f32 %v1686, %v1687
    %v1690 = vlaneseq
    %v1691 = vshrl.u32 %v1690, 7
    %v1692 = vsub.s32 0, %v1691
    %v1693 = vrot.slane %v114, %v1692
    %1696 = vrot.lane.b32.xlu0 %v1688, 96
    %v1697 = vpop.permute.xlu0 %1696
    %v1698 = vsel %vm197, %v1697, 0
    %1700 = vmatprep.subr.mxu0 0.0
    %1701 = vmatpush1.msra.mxu0 0.0
    %1702 = vmatprep.subr.mxu0 0.0
    %1703 = vmatpush1.msra.mxu0 0.0
    %1704 = vmatprep.subr.mxu0 0.0
    %1705 = vmatpush1.msra.mxu0 0.0
    %1706 = vmatprep.subr.mxu0 0.0
    %1707 = vmatpush1.msra.mxu0 0.0
    %1708 = vmatprep.subr.mxu0 0.0
    %1709 = vmatpush1.msra.mxu0 0.0
    %1710 = vmatprep.subr.mxu0 0.0
    %1711 = vmatpush1.msra.mxu0 0.0
    %1712 = vmatprep.subr.mxu0 0.0
    %1713 = vmatpush1.msra.mxu0 0.0
    %1714 = vmatprep.subr.mxu0 0.0
    %1715 = vmatpush1.msra.mxu0 0.0
    %1716 = vmatprep.subr.mxu0 0.0
    %1717 = vmatpush1.msra.mxu0 0.0
    %1718 = vmatprep.subr.mxu0 0.0
    %1719 = vmatpush1.msra.mxu0 0.0
    %1720 = vmatprep.subr.mxu0 0.0
    %1721 = vmatpush1.msra.mxu0 0.0
    %1722 = vmatprep.subr.mxu0 0.0
    %1723 = vmatpush1.msra.mxu0 0.0
    %1724 = vmatprep.subr.mxu0 0.0
    %1725 = vmatpush1.msra.mxu0 %v113
    %1726 = vmatprep.subr.mxu0 0.0
    %1727 = vmatpush1.msra.mxu0 %v112
    %1728 = vmatprep.subr.mxu0 0.0
    %1729 = vmatpush1.msra.mxu0 %v111
    %1730 = vmatprep.subr.mxu0 0.0
    %1731 = vmatpush1.msra.mxu0 %v110
    %1732 = vmatprep.subr.mxu0 0.0
    %1733 = vmatpush2.msra.mxu0 0.0
    %1734 = vmatprep.subr.mxu0 0.0
    %1735 = vmatpush2.msra.mxu0 0.0
    %1736 = vmatprep.subr.mxu0 0.0
    %1737 = vmatpush2.msra.mxu0 0.0
    %1738 = vmatprep.subr.mxu0 0.0
    %1739 = vmatpush2.msra.mxu0 0.0
    %1740 = vmatprep.subr.mxu0 0.0
    %1741 = vmatpush2.msra.mxu0 0.0
    %1742 = vmatprep.subr.mxu0 0.0
    %1743 = vmatpush2.msra.mxu0 0.0
    %1744 = vmatprep.subr.mxu0 0.0
    %1745 = vmatpush2.msra.mxu0 0.0
    %1746 = vmatprep.subr.mxu0 0.0
    %1747 = vmatpush2.msra.mxu0 0.0
    %1748 = vmatprep.subr.mxu0 0.0
    %1749 = vmatpush2.msra.mxu0 0.0
    %1750 = vmatprep.subr.mxu0 0.0
    %1751 = vmatpush2.msra.mxu0 0.0
    %1752 = vmatprep.subr.mxu0 0.0
    %1753 = vmatpush2.msra.mxu0 0.0
    %1754 = vmatprep.subr.mxu0 0.0
    %1755 = vmatpush2.msra.mxu0 0.0
    %1756 = vmatprep.subr.mxu0 0.0
    %1757 = vmatpush2.msra.mxu0 0.0
    %1758 = vmatprep.subr.mxu0 0.0
    %1759 = vmatpush2.msra.mxu0 0.0
    %1760 = vmatprep.subr.mxu0 0.0
    %1761 = vmatpush2.msra.mxu0 0.0
    %1762 = vmatprep.subr.mxu0 0.0
    %1763 = vmatpush2.msra.mxu0 0.0
    %1764 = vmatprep.mubr.f32.mxu0 0.0
    %1765 = vmatmul.mubr.f32.gmra.mxu0 %v1698
    %v1766 = vpop.f32.mrf.mxu0
    %v1767 = vadd.f32 %v1693, %v1766
    %v1768 = vpop.f32.mrf.mxu0
    %1769 = vdwg.mxu0
    %vm1770 = vcmask 123904
    %v1771 = vsel %vm1770, %v1767, -inf
    %1772 = vmax.xlane.f32.xlu0 %v1771
    %v1773 = vpop.xlane.xlu0 %1772
    %v1774 = vsub.f32 %v1767, %v1773
    %v1775 = vmul.f32 %v1774, 1.442695
    %v1776 = vpow.pop %v1775
    %v1777 = vsel %vm1770, %v1776, 0.0
    %1778 = vadd.xlane.f32.xlu0 %v1777
    %v1779 = vpop.xlane.xlu0 %1778
    %v1780 = vlog2.pop %v1779
    %v1781 = vmul.f32 %v1780, 0.6931472
    %v1782 = vadd.f32 %v1781, %v1773
    %v1783 = vsub.f32 %v1767, %v1782
    %1784 = vst.msk [vmem:[%s8] sm:$0x3] %vm1770, %v1783
    %vm1785 = vcmp.eq.f32.partialorder %v1767, %v1773
    %v1786 = vsel %vm1785, %v116, 16
    %v1787 = vsel %vm1770, %v1786, 2147483647
    %v1788 = vand.u32 %v1787, 65535
    %v1789 = vshra.s32 %v1787, 16
    %v1790 = vcvt.s32.f32 %v1788
    %v1791 = vcvt.s32.f32 %v1789
    %1792 = vmin.xlane.f32.xlu0 %v1791
    %v1793 = vpop.xlane.xlu0 %1792
    %vm1794 = vcmp.eq.f32.partialorder %v1791, %v1793
    %v1795 = vsel %vm1794, %v1790, inf
    %1796 = vmin.xlane.f32.xlu0 %v1795
    %v1797 = vpop.xlane.xlu0 %1796
    %v1798 = vcvt.f32.s32 %v1797
    %v1799 = vcvt.f32.s32 %v1793
    %v1800 = vshll.u32 %v1799, 16
    %v1801 = vadd.s32 %v1800, %v1798
    %vm1802 = vcmp.eq.s32.totalorder %v116, %v1801
    %v1803 = vsel %vm1802, 1, 0
    %v1804 = vcvt.s32.f32 %v1803
    %1805 = vrot.lane.b32.xlu0 %v1688, 112
    %v1806 = vpop.permute.xlu0 %1805
    %v1808 = vsel %vm123, %v1804, %v1806
    %v1810 = vsel %vm1581, %v1808, 0
    %1812 = vmatprep.subr.mxu0 0.0
    %1813 = vmatpush1.msra.mxu0 0.0
    %1814 = vmatprep.subr.mxu0 0.0
    %1815 = vmatpush1.msra.mxu0 0.0
    %1816 = vmatprep.subr.mxu0 0.0
    %1817 = vmatpush1.msra.mxu0 0.0
    %1818 = vmatprep.subr.mxu0 0.0
    %1819 = vmatpush1.msra.mxu0 0.0
    %1820 = vmatprep.subr.mxu0 0.0
    %1821 = vmatpush1.msra.mxu0 0.0
    %1822 = vmatprep.subr.mxu0 0.0
    %1823 = vmatpush1.msra.mxu0 0.0
    %1824 = vmatprep.subr.mxu0 0.0
    %1825 = vmatpush1.msra.mxu0 0.0
    %1826 = vmatprep.subr.mxu0 0.0
    %1827 = vmatpush1.msra.mxu0 0.0
    %1828 = vmatprep.subr.mxu0 0.0
    %1829 = vmatpush1.msra.mxu0 0.0
    %1830 = vmatprep.subr.mxu0 0.0
    %1831 = vmatpush1.msra.mxu0 0.0
    %1832 = vmatprep.subr.mxu0 0.0
    %1833 = vmatpush1.msra.mxu0 %v108
    %1834 = vmatprep.subr.mxu0 0.0
    %1835 = vmatpush1.msra.mxu0 %v107
    %1836 = vmatprep.subr.mxu0 0.0
    %1837 = vmatpush1.msra.mxu0 %v106
    %1838 = vmatprep.subr.mxu0 0.0
    %1839 = vmatpush1.msra.mxu0 %v105
    %1840 = vmatprep.subr.mxu0 0.0
    %1841 = vmatpush1.msra.mxu0 %v104
    %1842 = vmatprep.subr.mxu0 0.0
    %1843 = vmatpush1.msra.mxu0 %v103
    %1844 = vmatprep.subr.mxu0 0.0
    %1845 = vmatpush2.msra.mxu0 0.0
    %1846 = vmatprep.subr.mxu0 0.0
    %1847 = vmatpush2.msra.mxu0 0.0
    %1848 = vmatprep.subr.mxu0 0.0
    %1849 = vmatpush2.msra.mxu0 0.0
    %1850 = vmatprep.subr.mxu0 0.0
    %1851 = vmatpush2.msra.mxu0 0.0
    %1852 = vmatprep.subr.mxu0 0.0
    %1853 = vmatpush2.msra.mxu0 0.0
    %1854 = vmatprep.subr.mxu0 0.0
    %1855 = vmatpush2.msra.mxu0 0.0
    %1856 = vmatprep.subr.mxu0 0.0
    %1857 = vmatpush2.msra.mxu0 0.0
    %1858 = vmatprep.subr.mxu0 0.0
    %1859 = vmatpush2.msra.mxu0 0.0
    %1860 = vmatprep.subr.mxu0 0.0
    %1861 = vmatpush2.msra.mxu0 0.0
    %1862 = vmatprep.subr.mxu0 0.0
    %1863 = vmatpush2.msra.mxu0 0.0
    %1864 = vmatprep.subr.mxu0 0.0
    %1865 = vmatpush2.msra.mxu0 0.0
    %1866 = vmatprep.subr.mxu0 0.0
    %1867 = vmatpush2.msra.mxu0 0.0
    %1868 = vmatprep.subr.mxu0 0.0
    %1869 = vmatpush2.msra.mxu0 0.0
    %1870 = vmatprep.subr.mxu0 0.0
    %1871 = vmatpush2.msra.mxu0 0.0
    %1872 = vmatprep.subr.mxu0 0.0
    %1873 = vmatpush2.msra.mxu0 0.0
    %1874 = vmatprep.subr.mxu0 0.0
    %1875 = vmatpush2.msra.mxu0 0.0
    %1876 = vmatprep.mubr.f32.mxu0 0.0
    %1877 = vmatmul.mubr.f32.gmra.mxu0 %v1810
    %v1878 = vpop.f32.mrf.mxu0
    %v1879 = vadd.f32 0.0, %v1878
    %v1880 = vpop.f32.mrf.mxu0
    %1881 = vdwg.mxu0
    %v1882 = vxor.u32 %v1879, 2147483648
    %v1883 = vmul.f32 %v1882, 1.442695
    %v1884 = vpow.pop %v1883
    %v1885 = vadd.f32 %v1884, 1.0
    %v1886 = vrcp.pop %v1885
    %v1887 = vmul.f32 1.0, %v1886
    %v1888 = vadd.f32 %v1879, %v1667
    %1890 = vrot.lane.b32.xlu0 %v1888, 32
    %v1891 = vpop.permute.xlu0 %1890
    %v1893 = vmul.f32 %v1887, %v1891
    %1895 = vrot.lane.b32.xlu0 %v1893, 64
    %v1896 = vpop.permute.xlu0 %1895
    %v1898 = vadd.f32 %v1879, %v1896
    %v1899 = vtanh.pop %v1898
    %v1900 = vsub.f32 1.0, %v1887
    %1902 = vrot.lane.b32.xlu0 %v1899, 96
    %v1903 = vpop.permute.xlu0 %1902
    %v1905 = vmul.f32 %v1900, %v1903
    %v1906 = vmul.f32 %v1887, %v1688
    %v1907 = vadd.f32 %v1905, %v1906
    %1909 = vrot.lane.b32.xlu0 %v1907, 96
    %v1910 = vpop.permute.xlu0 %1909
    %v1911 = vsel %vm197, %v1910, 0
    %1913 = vmatprep.subr.mxu0 0.0
    %1914 = vmatpush1.msra.mxu0 0.0
    %1915 = vmatprep.subr.mxu0 0.0
    %1916 = vmatpush1.msra.mxu0 0.0
    %1917 = vmatprep.subr.mxu0 0.0
    %1918 = vmatpush1.msra.mxu0 0.0
    %1919 = vmatprep.subr.mxu0 0.0
    %1920 = vmatpush1.msra.mxu0 0.0
    %1921 = vmatprep.subr.mxu0 0.0
    %1922 = vmatpush1.msra.mxu0 0.0
    %1923 = vmatprep.subr.mxu0 0.0
    %1924 = vmatpush1.msra.mxu0 0.0
    %1925 = vmatprep.subr.mxu0 0.0
    %1926 = vmatpush1.msra.mxu0 0.0
    %1927 = vmatprep.subr.mxu0 0.0
    %1928 = vmatpush1.msra.mxu0 0.0
    %1929 = vmatprep.subr.mxu0 0.0
    %1930 = vmatpush1.msra.mxu0 0.0
    %1931 = vmatprep.subr.mxu0 0.0
    %1932 = vmatpush1.msra.mxu0 0.0
    %1933 = vmatprep.subr.mxu0 0.0
    %1934 = vmatpush1.msra.mxu0 0.0
    %1935 = vmatprep.subr.mxu0 0.0
    %1936 = vmatpush1.msra.mxu0 0.0
    %1937 = vmatprep.subr.mxu0 0.0
    %1938 = vmatpush1.msra.mxu0 %v113
    %1939 = vmatprep.subr.mxu0 0.0
    %1940 = vmatpush1.msra.mxu0 %v112
    %1941 = vmatprep.subr.mxu0 0.0
    %1942 = vmatpush1.msra.mxu0 %v111
    %1943 = vmatprep.subr.mxu0 0.0
    %1944 = vmatpush1.msra.mxu0 %v110
    %1945 = vmatprep.subr.mxu0 0.0
    %1946 = vmatpush2.msra.mxu0 0.0
    %1947 = vmatprep.subr.mxu0 0.0
    %1948 = vmatpush2.msra.mxu0 0.0
    %1949 = vmatprep.subr.mxu0 0.0
    %1950 = vmatpush2.msra.mxu0 0.0
    %1951 = vmatprep.subr.mxu0 0.0
    %1952 = vmatpush2.msra.mxu0 0.0
    %1953 = vmatprep.subr.mxu0 0.0
    %1954 = vmatpush2.msra.mxu0 0.0
    %1955 = vmatprep.subr.mxu0 0.0
    %1956 = vmatpush2.msra.mxu0 0.0
    %1957 = vmatprep.subr.mxu0 0.0
    %1958 = vmatpush2.msra.mxu0 0.0
    %1959 = vmatprep.subr.mxu0 0.0
    %1960 = vmatpush2.msra.mxu0 0.0
    %1961 = vmatprep.subr.mxu0 0.0
    %1962 = vmatpush2.msra.mxu0 0.0
    %1963 = vmatprep.subr.mxu0 0.0
    %1964 = vmatpush2.msra.mxu0 0.0
    %1965 = vmatprep.subr.mxu0 0.0
    %1966 = vmatpush2.msra.mxu0 0.0
    %1967 = vmatprep.subr.mxu0 0.0
    %1968 = vmatpush2.msra.mxu0 0.0
    %1969 = vmatprep.subr.mxu0 0.0
    %1970 = vmatpush2.msra.mxu0 0.0
    %1971 = vmatprep.subr.mxu0 0.0
    %1972 = vmatpush2.msra.mxu0 0.0
    %1973 = vmatprep.subr.mxu0 0.0
    %1974 = vmatpush2.msra.mxu0 0.0
    %1975 = vmatprep.subr.mxu0 0.0
    %1976 = vmatpush2.msra.mxu0 0.0
    %1977 = vmatprep.mubr.f32.mxu0 0.0
    %1978 = vmatmul.mubr.f32.gmra.mxu0 %v1911
    %v1979 = vpop.f32.mrf.mxu0
    %v1980 = vadd.f32 %v1693, %v1979
    %v1981 = vpop.f32.mrf.mxu0
    %1982 = vdwg.mxu0
    %v1983 = vsel %vm1770, %v1980, -inf
    %1984 = vmax.xlane.f32.xlu0 %v1983
    %v1985 = vpop.xlane.xlu0 %1984
    %v1986 = vsub.f32 %v1980, %v1985
    %v1987 = vmul.f32 %v1986, 1.442695
    %v1988 = vpow.pop %v1987
    %v1989 = vsel %vm1770, %v1988, 0.0
    %1990 = vadd.xlane.f32.xlu0 %v1989
    %v1991 = vpop.xlane.xlu0 %1990
    %v1992 = vlog2.pop %v1991
    %v1993 = vmul.f32 %v1992, 0.6931472
    %v1994 = vadd.f32 %v1993, %v1985
    %v1995 = vsub.f32 %v1980, %v1994
    %1997 = vrot.lane.b32.xlu0 %v1995, 16
    %v1998 = vpop.permute.xlu0 %1997
    %vm2000 = vcmask 255104
    %2001 = vst.msk [vmem:[%s8] sm:$0x3] %vm2000, %v1998
    %vm2002 = vcmp.eq.f32.partialorder %v1980, %v1985
    %v2003 = vsel %vm2002, %v116, 16
    %v2004 = vsel %vm1770, %v2003, 2147483647
    %v2005 = vand.u32 %v2004, 65535
    %v2006 = vshra.s32 %v2004, 16
    %v2007 = vcvt.s32.f32 %v2005
    %v2008 = vcvt.s32.f32 %v2006
    %2009 = vmin.xlane.f32.xlu0 %v2008
    %v2010 = vpop.xlane.xlu0 %2009
    %vm2011 = vcmp.eq.f32.partialorder %v2008, %v2010
    %v2012 = vsel %vm2011, %v2007, inf
    %2013 = vmin.xlane.f32.xlu0 %v2012
    %v2014 = vpop.xlane.xlu0 %2013
    %v2015 = vcvt.f32.s32 %v2014
    %v2016 = vcvt.f32.s32 %v2010
    %v2017 = vshll.u32 %v2016, 16
    %v2018 = vadd.s32 %v2017, %v2015
    %vm2019 = vcmp.eq.s32.totalorder %v116, %v2018
    %v2020 = vsel %vm2019, 1, 0
    %v2021 = vcvt.s32.f32 %v2020
    %2022 = vrot.lane.b32.xlu0 %v1907, 112
    %v2023 = vpop.permute.xlu0 %2022
    %v2025 = vsel %vm123, %v2021, %v2023
    %v2027 = vsel %vm1581, %v2025, 0
    %2029 = vmatprep.subr.mxu0 0.0
    %2030 = vmatpush1.msra.mxu0 0.0
    %2031 = vmatprep.subr.mxu0 0.0
    %2032 = vmatpush1.msra.mxu0 0.0
    %2033 = vmatprep.subr.mxu0 0.0
    %2034 = vmatpush1.msra.mxu0 0.0
    %2035 = vmatprep.subr.mxu0 0.0
    %2036 = vmatpush1.msra.mxu0 0.0
    %2037 = vmatprep.subr.mxu0 0.0
    %2038 = vmatpush1.msra.mxu0 0.0
    %2039 = vmatprep.subr.mxu0 0.0
    %2040 = vmatpush1.msra.mxu0 0.0
    %2041 = vmatprep.subr.mxu0 0.0
    %2042 = vmatpush1.msra.mxu0 0.0
    %2043 = vmatprep.subr.mxu0 0.0
    %2044 = vmatpush1.msra.mxu0 0.0
    %2045 = vmatprep.subr.mxu0 0.0
    %2046 = vmatpush1.msra.mxu0 0.0
    %2047 = vmatprep.subr.mxu0 0.0
    %2048 = vmatpush1.msra.mxu0 0.0
    %2049 = vmatprep.subr.mxu0 0.0
    %2050 = vmatpush1.msra.mxu0 %v108
    %2051 = vmatprep.subr.mxu0 0.0
    %2052 = vmatpush1.msra.mxu0 %v107
    %2053 = vmatprep.subr.mxu0 0.0
    %2054 = vmatpush1.msra.mxu0 %v106
    %2055 = vmatprep.subr.mxu0 0.0
    %2056 = vmatpush1.msra.mxu0 %v105
    %2057 = vmatprep.subr.mxu0 0.0
    %2058 = vmatpush1.msra.mxu0 %v104
    %2059 = vmatprep.subr.mxu0 0.0
    %2060 = vmatpush1.msra.mxu0 %v103
    %2061 = vmatprep.subr.mxu0 0.0
    %2062 = vmatpush2.msra.mxu0 0.0
    %2063 = vmatprep.subr.mxu0 0.0
    %2064 = vmatpush2.msra.mxu0 0.0
    %2065 = vmatprep.subr.mxu0 0.0
    %2066 = vmatpush2.msra.mxu0 0.0
    %2067 = vmatprep.subr.mxu0 0.0
    %2068 = vmatpush2.msra.mxu0 0.0
    %2069 = vmatprep.subr.mxu0 0.0
    %2070 = vmatpush2.msra.mxu0 0.0
    %2071 = vmatprep.subr.mxu0 0.0
    %2072 = vmatpush2.msra.mxu0 0.0
    %2073 = vmatprep.subr.mxu0 0.0
    %2074 = vmatpush2.msra.mxu0 0.0
    %2075 = vmatprep.subr.mxu0 0.0
    %2076 = vmatpush2.msra.mxu0 0.0
    %2077 = vmatprep.subr.mxu0 0.0
    %2078 = vmatpush2.msra.mxu0 0.0
    %2079 = vmatprep.subr.mxu0 0.0
    %2080 = vmatpush2.msra.mxu0 0.0
    %2081 = vmatprep.subr.mxu0 0.0
    %2082 = vmatpush2.msra.mxu0 0.0
    %2083 = vmatprep.subr.mxu0 0.0
    %2084 = vmatpush2.msra.mxu0 0.0
    %2085 = vmatprep.subr.mxu0 0.0
    %2086 = vmatpush2.msra.mxu0 0.0
    %2087 = vmatprep.subr.mxu0 0.0
    %2088 = vmatpush2.msra.mxu0 0.0
    %2089 = vmatprep.subr.mxu0 0.0
    %2090 = vmatpush2.msra.mxu0 0.0
    %2091 = vmatprep.subr.mxu0 0.0
    %2092 = vmatpush2.msra.mxu0 0.0
    %2093 = vmatprep.mubr.f32.mxu0 0.0
    %2094 = vmatmul.mubr.f32.gmra.mxu0 %v2027
    %v2095 = vpop.f32.mrf.mxu0
    %v2096 = vadd.f32 0.0, %v2095
    %v2097 = vpop.f32.mrf.mxu0
    %2098 = vdwg.mxu0
    %v2099 = vxor.u32 %v2096, 2147483648
    %v2100 = vmul.f32 %v2099, 1.442695
    %v2101 = vpow.pop %v2100
    %v2102 = vadd.f32 %v2101, 1.0
    %v2103 = vrcp.pop %v2102
    %v2104 = vmul.f32 1.0, %v2103
    %v2105 = vadd.f32 %v2096, %v1667
    %2107 = vrot.lane.b32.xlu0 %v2105, 32
    %v2108 = vpop.permute.xlu0 %2107
    %v2110 = vmul.f32 %v2104, %v2108
    %2112 = vrot.lane.b32.xlu0 %v2110, 64
    %v2113 = vpop.permute.xlu0 %2112
    %v2115 = vadd.f32 %v2096, %v2113
    %v2116 = vtanh.pop %v2115
    %v2117 = vsub.f32 1.0, %v2104
    %2119 = vrot.lane.b32.xlu0 %v2116, 96
    %v2120 = vpop.permute.xlu0 %2119
    %v2122 = vmul.f32 %v2117, %v2120
    %v2123 = vmul.f32 %v2104, %v1907
    %v2124 = vadd.f32 %v2122, %v2123
    %2126 = vrot.lane.b32.xlu0 %v2124, 96
    %v2127 = vpop.permute.xlu0 %2126
    %v2128 = vsel %vm197, %v2127, 0
    %2130 = vmatprep.subr.mxu0 0.0
    %2131 = vmatpush1.msra.mxu0 0.0
    %2132 = vmatprep.subr.mxu0 0.0
    %2133 = vmatpush1.msra.mxu0 0.0
    %2134 = vmatprep.subr.mxu0 0.0
    %2135 = vmatpush1.msra.mxu0 0.0
    %2136 = vmatprep.subr.mxu0 0.0
    %2137 = vmatpush1.msra.mxu0 0.0
    %2138 = vmatprep.subr.mxu0 0.0
    %2139 = vmatpush1.msra.mxu0 0.0
    %2140 = vmatprep.subr.mxu0 0.0
    %2141 = vmatpush1.msra.mxu0 0.0
    %2142 = vmatprep.subr.mxu0 0.0
    %2143 = vmatpush1.msra.mxu0 0.0
    %2144 = vmatprep.subr.mxu0 0.0
    %2145 = vmatpush1.msra.mxu0 0.0
    %2146 = vmatprep.subr.mxu0 0.0
    %2147 = vmatpush1.msra.mxu0 0.0
    %2148 = vmatprep.subr.mxu0 0.0
    %2149 = vmatpush1.msra.mxu0 0.0
    %2150 = vmatprep.subr.mxu0 0.0
    %2151 = vmatpush1.msra.mxu0 0.0
    %2152 = vmatprep.subr.mxu0 0.0
    %2153 = vmatpush1.msra.mxu0 0.0
    %2154 = vmatprep.subr.mxu0 0.0
    %2155 = vmatpush1.msra.mxu0 %v113
    %2156 = vmatprep.subr.mxu0 0.0
    %2157 = vmatpush1.msra.mxu0 %v112
    %2158 = vmatprep.subr.mxu0 0.0
    %2159 = vmatpush1.msra.mxu0 %v111
    %2160 = vmatprep.subr.mxu0 0.0
    %2161 = vmatpush1.msra.mxu0 %v110
    %2162 = vmatprep.subr.mxu0 0.0
    %2163 = vmatpush2.msra.mxu0 0.0
    %2164 = vmatprep.subr.mxu0 0.0
    %2165 = vmatpush2.msra.mxu0 0.0
    %2166 = vmatprep.subr.mxu0 0.0
    %2167 = vmatpush2.msra.mxu0 0.0
    %2168 = vmatprep.subr.mxu0 0.0
    %2169 = vmatpush2.msra.mxu0 0.0
    %2170 = vmatprep.subr.mxu0 0.0
    %2171 = vmatpush2.msra.mxu0 0.0
    %2172 = vmatprep.subr.mxu0 0.0
    %2173 = vmatpush2.msra.mxu0 0.0
    %2174 = vmatprep.subr.mxu0 0.0
    %2175 = vmatpush2.msra.mxu0 0.0
    %2176 = vmatprep.subr.mxu0 0.0
    %2177 = vmatpush2.msra.mxu0 0.0
    %2178 = vmatprep.subr.mxu0 0.0
    %2179 = vmatpush2.msra.mxu0 0.0
    %2180 = vmatprep.subr.mxu0 0.0
    %2181 = vmatpush2.msra.mxu0 0.0
    %2182 = vmatprep.subr.mxu0 0.0
    %2183 = vmatpush2.msra.mxu0 0.0
    %2184 = vmatprep.subr.mxu0 0.0
    %2185 = vmatpush2.msra.mxu0 0.0
    %2186 = vmatprep.subr.mxu0 0.0
    %2187 = vmatpush2.msra.mxu0 0.0
    %2188 = vmatprep.subr.mxu0 0.0
    %2189 = vmatpush2.msra.mxu0 0.0
    %2190 = vmatprep.subr.mxu0 0.0
    %2191 = vmatpush2.msra.mxu0 0.0
    %2192 = vmatprep.subr.mxu0 0.0
    %2193 = vmatpush2.msra.mxu0 0.0
    %2194 = vmatprep.mubr.f32.mxu0 0.0
    %2195 = vmatmul.mubr.f32.gmra.mxu0 %v2128
    %v2196 = vpop.f32.mrf.mxu0
    %v2197 = vadd.f32 %v1693, %v2196
    %v2198 = vpop.f32.mrf.mxu0
    %2199 = vdwg.mxu0
    %v2200 = vsel %vm1770, %v2197, -inf
    %2201 = vmax.xlane.f32.xlu0 %v2200
    %v2202 = vpop.xlane.xlu0 %2201
    %v2203 = vsub.f32 %v2197, %v2202
    %v2204 = vmul.f32 %v2203, 1.442695
    %v2205 = vpow.pop %v2204
    %v2206 = vsel %vm1770, %v2205, 0.0
    %2207 = vadd.xlane.f32.xlu0 %v2206
    %v2208 = vpop.xlane.xlu0 %2207
    %v2209 = vlog2.pop %v2208
    %v2210 = vmul.f32 %v2209, 0.6931472
    %v2211 = vadd.f32 %v2210, %v2202
    %v2212 = vsub.f32 %v2197, %v2211
    %2214 = vrot.lane.b32.xlu0 %v2212, 32
    %v2215 = vpop.permute.xlu0 %2214
    %vm2217 = vcmask 386304
    %2218 = vst.msk [vmem:[%s8] sm:$0x3] %vm2217, %v2215
    %vm2219 = vcmp.eq.f32.partialorder %v2197, %v2202
    %v2220 = vsel %vm2219, %v116, 16
    %v2221 = vsel %vm1770, %v2220, 2147483647
    %v2222 = vand.u32 %v2221, 65535
    %v2223 = vshra.s32 %v2221, 16
    %v2224 = vcvt.s32.f32 %v2222
    %v2225 = vcvt.s32.f32 %v2223
    %2226 = vmin.xlane.f32.xlu0 %v2225
    %v2227 = vpop.xlane.xlu0 %2226
    %vm2228 = vcmp.eq.f32.partialorder %v2225, %v2227
    %v2229 = vsel %vm2228, %v2224, inf
    %2230 = vmin.xlane.f32.xlu0 %v2229
    %v2231 = vpop.xlane.xlu0 %2230
    %v2232 = vcvt.f32.s32 %v2231
    %v2233 = vcvt.f32.s32 %v2227
    %v2234 = vshll.u32 %v2233, 16
    %v2235 = vadd.s32 %v2234, %v2232
    %vm2236 = vcmp.eq.s32.totalorder %v116, %v2235
    %v2237 = vsel %vm2236, 1, 0
    %v2238 = vcvt.s32.f32 %v2237
    %2239 = vrot.lane.b32.xlu0 %v2124, 112
    %v2240 = vpop.permute.xlu0 %2239
    %v2242 = vsel %vm123, %v2238, %v2240
    %v2244 = vsel %vm1581, %v2242, 0
    %2246 = vmatprep.subr.mxu0 0.0
    %2247 = vmatpush1.msra.mxu0 0.0
    %2248 = vmatprep.subr.mxu0 0.0
    %2249 = vmatpush1.msra.mxu0 0.0
    %2250 = vmatprep.subr.mxu0 0.0
    %2251 = vmatpush1.msra.mxu0 0.0
    %2252 = vmatprep.subr.mxu0 0.0
    %2253 = vmatpush1.msra.mxu0 0.0
    %2254 = vmatprep.subr.mxu0 0.0
    %2255 = vmatpush1.msra.mxu0 0.0
    %2256 = vmatprep.subr.mxu0 0.0
    %2257 = vmatpush1.msra.mxu0 0.0
    %2258 = vmatprep.subr.mxu0 0.0
    %2259 = vmatpush1.msra.mxu0 0.0
    %2260 = vmatprep.subr.mxu0 0.0
    %2261 = vmatpush1.msra.mxu0 0.0
    %2262 = vmatprep.subr.mxu0 0.0
    %2263 = vmatpush1.msra.mxu0 0.0
    %2264 = vmatprep.subr.mxu0 0.0
    %2265 = vmatpush1.msra.mxu0 0.0
    %2266 = vmatprep.subr.mxu0 0.0
    %2267 = vmatpush1.msra.mxu0 %v108
    %2268 = vmatprep.subr.mxu0 0.0
    %2269 = vmatpush1.msra.mxu0 %v107
    %2270 = vmatprep.subr.mxu0 0.0
    %2271 = vmatpush1.msra.mxu0 %v106
    %2272 = vmatprep.subr.mxu0 0.0
    %2273 = vmatpush1.msra.mxu0 %v105
    %2274 = vmatprep.subr.mxu0 0.0
    %2275 = vmatpush1.msra.mxu0 %v104
    %2276 = vmatprep.subr.mxu0 0.0
    %2277 = vmatpush1.msra.mxu0 %v103
    %2278 = vmatprep.subr.mxu0 0.0
    %2279 = vmatpush2.msra.mxu0 0.0
    %2280 = vmatprep.subr.mxu0 0.0
    %2281 = vmatpush2.msra.mxu0 0.0
    %2282 = vmatprep.subr.mxu0 0.0
    %2283 = vmatpush2.msra.mxu0 0.0
    %2284 = vmatprep.subr.mxu0 0.0
    %2285 = vmatpush2.msra.mxu0 0.0
    %2286 = vmatprep.subr.mxu0 0.0
    %2287 = vmatpush2.msra.mxu0 0.0
    %2288 = vmatprep.subr.mxu0 0.0
    %2289 = vmatpush2.msra.mxu0 0.0
    %2290 = vmatprep.subr.mxu0 0.0
    %2291 = vmatpush2.msra.mxu0 0.0
    %2292 = vmatprep.subr.mxu0 0.0
    %2293 = vmatpush2.msra.mxu0 0.0
    %2294 = vmatprep.subr.mxu0 0.0
    %2295 = vmatpush2.msra.mxu0 0.0
    %2296 = vmatprep.subr.mxu0 0.0
    %2297 = vmatpush2.msra.mxu0 0.0
    %2298 = vmatprep.subr.mxu0 0.0
    %2299 = vmatpush2.msra.mxu0 0.0
    %2300 = vmatprep.subr.mxu0 0.0
    %2301 = vmatpush2.msra.mxu0 0.0
    %2302 = vmatprep.subr.mxu0 0.0
    %2303 = vmatpush2.msra.mxu0 0.0
    %2304 = vmatprep.subr.mxu0 0.0
    %2305 = vmatpush2.msra.mxu0 0.0
    %2306 = vmatprep.subr.mxu0 0.0
    %2307 = vmatpush2.msra.mxu0 0.0
    %2308 = vmatprep.subr.mxu0 0.0
    %2309 = vmatpush2.msra.mxu0 0.0
    %2310 = vmatprep.mubr.f32.mxu0 0.0
    %2311 = vmatmul.mubr.f32.gmra.mxu0 %v2244
    %v2312 = vpop.f32.mrf.mxu0
    %v2313 = vadd.f32 0.0, %v2312
    %v2314 = vpop.f32.mrf.mxu0
    %2315 = vdwg.mxu0
    %v2316 = vxor.u32 %v2313, 2147483648
    %v2317 = vmul.f32 %v2316, 1.442695
    %v2318 = vpow.pop %v2317
    %v2319 = vadd.f32 %v2318, 1.0
    %v2320 = vrcp.pop %v2319
    %v2321 = vmul.f32 1.0, %v2320
    %v2322 = vadd.f32 %v2313, %v1667
    %2324 = vrot.lane.b32.xlu0 %v2322, 32
    %v2325 = vpop.permute.xlu0 %2324
    %v2327 = vmul.f32 %v2321, %v2325
    %2329 = vrot.lane.b32.xlu0 %v2327, 64
    %v2330 = vpop.permute.xlu0 %2329
    %v2332 = vadd.f32 %v2313, %v2330
    %v2333 = vtanh.pop %v2332
    %v2334 = vsub.f32 1.0, %v2321
    %2336 = vrot.lane.b32.xlu0 %v2333, 96
    %v2337 = vpop.permute.xlu0 %2336
    %v2339 = vmul.f32 %v2334, %v2337
    %v2340 = vmul.f32 %v2321, %v2124
    %v2341 = vadd.f32 %v2339, %v2340
    %2343 = vrot.lane.b32.xlu0 %v2341, 96
    %v2344 = vpop.permute.xlu0 %2343
    %v2345 = vsel %vm197, %v2344, 0
    %2347 = vmatprep.subr.mxu0 0.0
    %2348 = vmatpush1.msra.mxu0 0.0
    %2349 = vmatprep.subr.mxu0 0.0
    %2350 = vmatpush1.msra.mxu0 0.0
    %2351 = vmatprep.subr.mxu0 0.0
    %2352 = vmatpush1.msra.mxu0 0.0
    %2353 = vmatprep.subr.mxu0 0.0
    %2354 = vmatpush1.msra.mxu0 0.0
    %2355 = vmatprep.subr.mxu0 0.0
    %2356 = vmatpush1.msra.mxu0 0.0
    %2357 = vmatprep.subr.mxu0 0.0
    %2358 = vmatpush1.msra.mxu0 0.0
    %2359 = vmatprep.subr.mxu0 0.0
    %2360 = vmatpush1.msra.mxu0 0.0
    %2361 = vmatprep.subr.mxu0 0.0
    %2362 = vmatpush1.msra.mxu0 0.0
    %2363 = vmatprep.subr.mxu0 0.0
    %2364 = vmatpush1.msra.mxu0 0.0
    %2365 = vmatprep.subr.mxu0 0.0
    %2366 = vmatpush1.msra.mxu0 0.0
    %2367 = vmatprep.subr.mxu0 0.0
    %2368 = vmatpush1.msra.mxu0 0.0
    %2369 = vmatprep.subr.mxu0 0.0
    %2370 = vmatpush1.msra.mxu0 0.0
    %2371 = vmatprep.subr.mxu0 0.0
    %2372 = vmatpush1.msra.mxu0 %v113
    %2373 = vmatprep.subr.mxu0 0.0
    %2374 = vmatpush1.msra.mxu0 %v112
    %2375 = vmatprep.subr.mxu0 0.0
    %2376 = vmatpush1.msra.mxu0 %v111
    %2377 = vmatprep.subr.mxu0 0.0
    %2378 = vmatpush1.msra.mxu0 %v110
    %2379 = vmatprep.subr.mxu0 0.0
    %2380 = vmatpush2.msra.mxu0 0.0
    %2381 = vmatprep.subr.mxu0 0.0
    %2382 = vmatpush2.msra.mxu0 0.0
    %2383 = vmatprep.subr.mxu0 0.0
    %2384 = vmatpush2.msra.mxu0 0.0
    %2385 = vmatprep.subr.mxu0 0.0
    %2386 = vmatpush2.msra.mxu0 0.0
    %2387 = vmatprep.subr.mxu0 0.0
    %2388 = vmatpush2.msra.mxu0 0.0
    %2389 = vmatprep.subr.mxu0 0.0
    %2390 = vmatpush2.msra.mxu0 0.0
    %2391 = vmatprep.subr.mxu0 0.0
    %2392 = vmatpush2.msra.mxu0 0.0
    %2393 = vmatprep.subr.mxu0 0.0
    %2394 = vmatpush2.msra.mxu0 0.0
    %2395 = vmatprep.subr.mxu0 0.0
    %2396 = vmatpush2.msra.mxu0 0.0
    %2397 = vmatprep.subr.mxu0 0.0
    %2398 = vmatpush2.msra.mxu0 0.0
    %2399 = vmatprep.subr.mxu0 0.0
    %2400 = vmatpush2.msra.mxu0 0.0
    %2401 = vmatprep.subr.mxu0 0.0
    %2402 = vmatpush2.msra.mxu0 0.0
    %2403 = vmatprep.subr.mxu0 0.0
    %2404 = vmatpush2.msra.mxu0 0.0
    %2405 = vmatprep.subr.mxu0 0.0
    %2406 = vmatpush2.msra.mxu0 0.0
    %2407 = vmatprep.subr.mxu0 0.0
    %2408 = vmatpush2.msra.mxu0 0.0
    %2409 = vmatprep.subr.mxu0 0.0
    %2410 = vmatpush2.msra.mxu0 0.0
    %2411 = vmatprep.mubr.f32.mxu0 0.0
    %2412 = vmatmul.mubr.f32.gmra.mxu0 %v2345
    %v2413 = vpop.f32.mrf.mxu0
    %v2414 = vadd.f32 %v1693, %v2413
    %v2415 = vpop.f32.mrf.mxu0
    %2416 = vdwg.mxu0
    %v2417 = vsel %vm1770, %v2414, -inf
    %2418 = vmax.xlane.f32.xlu0 %v2417
    %v2419 = vpop.xlane.xlu0 %2418
    %v2420 = vsub.f32 %v2414, %v2419
    %v2421 = vmul.f32 %v2420, 1.442695
    %v2422 = vpow.pop %v2421
    %v2423 = vsel %vm1770, %v2422, 0.0
    %2424 = vadd.xlane.f32.xlu0 %v2423
    %v2425 = vpop.xlane.xlu0 %2424
    %v2426 = vlog2.pop %v2425
    %v2427 = vmul.f32 %v2426, 0.6931472
    %v2428 = vadd.f32 %v2427, %v2419
    %v2429 = vsub.f32 %v2414, %v2428
    %2431 = vrot.lane.b32.xlu0 %v2429, 48
    %v2432 = vpop.permute.xlu0 %2431
    %vm2434 = vcmask 517504
    %2435 = vst.msk [vmem:[%s8] sm:$0x3] %vm2434, %v2432
    %vm2436 = vcmp.eq.f32.partialorder %v2414, %v2419
    %v2437 = vsel %vm2436, %v116, 16
    %v2438 = vsel %vm1770, %v2437, 2147483647
    %v2439 = vand.u32 %v2438, 65535
    %v2440 = vshra.s32 %v2438, 16
    %v2441 = vcvt.s32.f32 %v2439
    %v2442 = vcvt.s32.f32 %v2440
    %2443 = vmin.xlane.f32.xlu0 %v2442
    %v2444 = vpop.xlane.xlu0 %2443
    %vm2445 = vcmp.eq.f32.partialorder %v2442, %v2444
    %v2446 = vsel %vm2445, %v2441, inf
    %2447 = vmin.xlane.f32.xlu0 %v2446
    %v2448 = vpop.xlane.xlu0 %2447
    %v2449 = vcvt.f32.s32 %v2448
    %v2450 = vcvt.f32.s32 %v2444
    %v2451 = vshll.u32 %v2450, 16
    %v2452 = vadd.s32 %v2451, %v2449
    %vm2453 = vcmp.eq.s32.totalorder %v116, %v2452
    %v2454 = vsel %vm2453, 1, 0
    %v2455 = vcvt.s32.f32 %v2454
    %2456 = vrot.lane.b32.xlu0 %v2341, 112
    %v2457 = vpop.permute.xlu0 %2456
    %v2459 = vsel %vm123, %v2455, %v2457
    %v2461 = vsel %vm1581, %v2459, 0
    %2463 = vmatprep.subr.mxu0 0.0
    %2464 = vmatpush1.msra.mxu0 0.0
    %2465 = vmatprep.subr.mxu0 0.0
    %2466 = vmatpush1.msra.mxu0 0.0
    %2467 = vmatprep.subr.mxu0 0.0
    %2468 = vmatpush1.msra.mxu0 0.0
    %2469 = vmatprep.subr.mxu0 0.0
    %2470 = vmatpush1.msra.mxu0 0.0
    %2471 = vmatprep.subr.mxu0 0.0
    %2472 = vmatpush1.msra.mxu0 0.0
    %2473 = vmatprep.subr.mxu0 0.0
    %2474 = vmatpush1.msra.mxu0 0.0
    %2475 = vmatprep.subr.mxu0 0.0
    %2476 = vmatpush1.msra.mxu0 0.0
    %2477 = vmatprep.subr.mxu0 0.0
    %2478 = vmatpush1.msra.mxu0 0.0
    %2479 = vmatprep.subr.mxu0 0.0
    %2480 = vmatpush1.msra.mxu0 0.0
    %2481 = vmatprep.subr.mxu0 0.0
    %2482 = vmatpush1.msra.mxu0 0.0
    %2483 = vmatprep.subr.mxu0 0.0
    %2484 = vmatpush1.msra.mxu0 %v108
    %2485 = vmatprep.subr.mxu0 0.0
    %2486 = vmatpush1.msra.mxu0 %v107
    %2487 = vmatprep.subr.mxu0 0.0
    %2488 = vmatpush1.msra.mxu0 %v106
    %2489 = vmatprep.subr.mxu0 0.0
    %2490 = vmatpush1.msra.mxu0 %v105
    %2491 = vmatprep.subr.mxu0 0.0
    %2492 = vmatpush1.msra.mxu0 %v104
    %2493 = vmatprep.subr.mxu0 0.0
    %2494 = vmatpush1.msra.mxu0 %v103
    %2495 = vmatprep.subr.mxu0 0.0
    %2496 = vmatpush2.msra.mxu0 0.0
    %2497 = vmatprep.subr.mxu0 0.0
    %2498 = vmatpush2.msra.mxu0 0.0
    %2499 = vmatprep.subr.mxu0 0.0
    %2500 = vmatpush2.msra.mxu0 0.0
    %2501 = vmatprep.subr.mxu0 0.0
    %2502 = vmatpush2.msra.mxu0 0.0
    %2503 = vmatprep.subr.mxu0 0.0
    %2504 = vmatpush2.msra.mxu0 0.0
    %2505 = vmatprep.subr.mxu0 0.0
    %2506 = vmatpush2.msra.mxu0 0.0
    %2507 = vmatprep.subr.mxu0 0.0
    %2508 = vmatpush2.msra.mxu0 0.0
    %2509 = vmatprep.subr.mxu0 0.0
    %2510 = vmatpush2.msra.mxu0 0.0
    %2511 = vmatprep.subr.mxu0 0.0
    %2512 = vmatpush2.msra.mxu0 0.0
    %2513 = vmatprep.subr.mxu0 0.0
    %2514 = vmatpush2.msra.mxu0 0.0
    %2515 = vmatprep.subr.mxu0 0.0
    %2516 = vmatpush2.msra.mxu0 0.0
    %2517 = vmatprep.subr.mxu0 0.0
    %2518 = vmatpush2.msra.mxu0 0.0
    %2519 = vmatprep.subr.mxu0 0.0
    %2520 = vmatpush2.msra.mxu0 0.0
    %2521 = vmatprep.subr.mxu0 0.0
    %2522 = vmatpush2.msra.mxu0 0.0
    %2523 = vmatprep.subr.mxu0 0.0
    %2524 = vmatpush2.msra.mxu0 0.0
    %2525 = vmatprep.subr.mxu0 0.0
    %2526 = vmatpush2.msra.mxu0 0.0
    %2527 = vmatprep.mubr.f32.mxu0 0.0
    %2528 = vmatmul.mubr.f32.gmra.mxu0 %v2461
    %v2529 = vpop.f32.mrf.mxu0
    %v2530 = vadd.f32 0.0, %v2529
    %v2531 = vpop.f32.mrf.mxu0
    %2532 = vdwg.mxu0
    %v2533 = vxor.u32 %v2530, 2147483648
    %v2534 = vmul.f32 %v2533, 1.442695
    %v2535 = vpow.pop %v2534
    %v2536 = vadd.f32 %v2535, 1.0
    %v2537 = vrcp.pop %v2536
    %v2538 = vmul.f32 1.0, %v2537
    %v2539 = vadd.f32 %v2530, %v1667
    %2541 = vrot.lane.b32.xlu0 %v2539, 32
    %v2542 = vpop.permute.xlu0 %2541
    %v2544 = vmul.f32 %v2538, %v2542
    %2546 = vrot.lane.b32.xlu0 %v2544, 64
    %v2547 = vpop.permute.xlu0 %2546
    %v2549 = vadd.f32 %v2530, %v2547
    %v2550 = vtanh.pop %v2549
    %v2551 = vsub.f32 1.0, %v2538
    %2553 = vrot.lane.b32.xlu0 %v2550, 96
    %v2554 = vpop.permute.xlu0 %2553
    %v2556 = vmul.f32 %v2551, %v2554
    %v2557 = vmul.f32 %v2538, %v2341
    %v2558 = vadd.f32 %v2556, %v2557
    %2560 = vrot.lane.b32.xlu0 %v2558, 96
    %v2561 = vpop.permute.xlu0 %2560
    %v2562 = vsel %vm197, %v2561, 0
    %2564 = vmatprep.subr.mxu0 0.0
    %2565 = vmatpush1.msra.mxu0 0.0
    %2566 = vmatprep.subr.mxu0 0.0
    %2567 = vmatpush1.msra.mxu0 0.0
    %2568 = vmatprep.subr.mxu0 0.0
    %2569 = vmatpush1.msra.mxu0 0.0
    %2570 = vmatprep.subr.mxu0 0.0
    %2571 = vmatpush1.msra.mxu0 0.0
    %2572 = vmatprep.subr.mxu0 0.0
    %2573 = vmatpush1.msra.mxu0 0.0
    %2574 = vmatprep.subr.mxu0 0.0
    %2575 = vmatpush1.msra.mxu0 0.0
    %2576 = vmatprep.subr.mxu0 0.0
    %2577 = vmatpush1.msra.mxu0 0.0
    %2578 = vmatprep.subr.mxu0 0.0
    %2579 = vmatpush1.msra.mxu0 0.0
    %2580 = vmatprep.subr.mxu0 0.0
    %2581 = vmatpush1.msra.mxu0 0.0
    %2582 = vmatprep.subr.mxu0 0.0
    %2583 = vmatpush1.msra.mxu0 0.0
    %2584 = vmatprep.subr.mxu0 0.0
    %2585 = vmatpush1.msra.mxu0 0.0
    %2586 = vmatprep.subr.mxu0 0.0
    %2587 = vmatpush1.msra.mxu0 0.0
    %2588 = vmatprep.subr.mxu0 0.0
    %2589 = vmatpush1.msra.mxu0 %v113
    %2590 = vmatprep.subr.mxu0 0.0
    %2591 = vmatpush1.msra.mxu0 %v112
    %2592 = vmatprep.subr.mxu0 0.0
    %2593 = vmatpush1.msra.mxu0 %v111
    %2594 = vmatprep.subr.mxu0 0.0
    %2595 = vmatpush1.msra.mxu0 %v110
    %2596 = vmatprep.subr.mxu0 0.0
    %2597 = vmatpush2.msra.mxu0 0.0
    %2598 = vmatprep.subr.mxu0 0.0
    %2599 = vmatpush2.msra.mxu0 0.0
    %2600 = vmatprep.subr.mxu0 0.0
    %2601 = vmatpush2.msra.mxu0 0.0
    %2602 = vmatprep.subr.mxu0 0.0
    %2603 = vmatpush2.msra.mxu0 0.0
    %2604 = vmatprep.subr.mxu0 0.0
    %2605 = vmatpush2.msra.mxu0 0.0
    %2606 = vmatprep.subr.mxu0 0.0
    %2607 = vmatpush2.msra.mxu0 0.0
    %2608 = vmatprep.subr.mxu0 0.0
    %2609 = vmatpush2.msra.mxu0 0.0
    %2610 = vmatprep.subr.mxu0 0.0
    %2611 = vmatpush2.msra.mxu0 0.0
    %2612 = vmatprep.subr.mxu0 0.0
    %2613 = vmatpush2.msra.mxu0 0.0
    %2614 = vmatprep.subr.mxu0 0.0
    %2615 = vmatpush2.msra.mxu0 0.0
    %2616 = vmatprep.subr.mxu0 0.0
    %2617 = vmatpush2.msra.mxu0 0.0
    %2618 = vmatprep.subr.mxu0 0.0
    %2619 = vmatpush2.msra.mxu0 0.0
    %2620 = vmatprep.subr.mxu0 0.0
    %2621 = vmatpush2.msra.mxu0 0.0
    %2622 = vmatprep.subr.mxu0 0.0
    %2623 = vmatpush2.msra.mxu0 0.0
    %2624 = vmatprep.subr.mxu0 0.0
    %2625 = vmatpush2.msra.mxu0 0.0
    %2626 = vmatprep.subr.mxu0 0.0
    %2627 = vmatpush2.msra.mxu0 0.0
    %2628 = vmatprep.mubr.f32.mxu0 0.0
    %2629 = vmatmul.mubr.f32.gmra.mxu0 %v2562
    %v2630 = vpop.f32.mrf.mxu0
    %v2631 = vadd.f32 %v1693, %v2630
    %v2632 = vpop.f32.mrf.mxu0
    %2633 = vdwg.mxu0
    %v2634 = vsel %vm1770, %v2631, -inf
    %2635 = vmax.xlane.f32.xlu0 %v2634
    %v2636 = vpop.xlane.xlu0 %2635
    %v2637 = vsub.f32 %v2631, %v2636
    %v2638 = vmul.f32 %v2637, 1.442695
    %v2639 = vpow.pop %v2638
    %v2640 = vsel %vm1770, %v2639, 0.0
    %2641 = vadd.xlane.f32.xlu0 %v2640
    %v2642 = vpop.xlane.xlu0 %2641
    %v2643 = vlog2.pop %v2642
    %v2644 = vmul.f32 %v2643, 0.6931472
    %v2645 = vadd.f32 %v2644, %v2636
    %v2646 = vsub.f32 %v2631, %v2645
    %2648 = vrot.lane.b32.xlu0 %v2646, 64
    %v2649 = vpop.permute.xlu0 %2648
    %vm2651 = vcmask 648704
    %2652 = vst.msk [vmem:[%s8] sm:$0x3] %vm2651, %v2649
    %vm2653 = vcmp.eq.f32.partialorder %v2631, %v2636
    %v2654 = vsel %vm2653, %v116, 16
    %v2655 = vsel %vm1770, %v2654, 2147483647
    %v2656 = vand.u32 %v2655, 65535
    %v2657 = vshra.s32 %v2655, 16
    %v2658 = vcvt.s32.f32 %v2656
    %v2659 = vcvt.s32.f32 %v2657
    %2660 = vmin.xlane.f32.xlu0 %v2659
    %v2661 = vpop.xlane.xlu0 %2660
    %vm2662 = vcmp.eq.f32.partialorder %v2659, %v2661
    %v2663 = vsel %vm2662, %v2658, inf
    %2664 = vmin.xlane.f32.xlu0 %v2663
    %v2665 = vpop.xlane.xlu0 %2664
    %v2666 = vcvt.f32.s32 %v2665
    %v2667 = vcvt.f32.s32 %v2661
    %v2668 = vshll.u32 %v2667, 16
    %v2669 = vadd.s32 %v2668, %v2666
    %vm2670 = vcmp.eq.s32.totalorder %v116, %v2669
    %v2671 = vsel %vm2670, 1, 0
    %v2672 = vcvt.s32.f32 %v2671
    %2673 = vrot.lane.b32.xlu0 %v2558, 112
    %v2674 = vpop.permute.xlu0 %2673
    %v2676 = vsel %vm123, %v2672, %v2674
    %v2678 = vsel %vm1581, %v2676, 0
    %2680 = vmatprep.subr.mxu0 0.0
    %2681 = vmatpush1.msra.mxu0 0.0
    %2682 = vmatprep.subr.mxu0 0.0
    %2683 = vmatpush1.msra.mxu0 0.0
    %2684 = vmatprep.subr.mxu0 0.0
    %2685 = vmatpush1.msra.mxu0 0.0
    %2686 = vmatprep.subr.mxu0 0.0
    %2687 = vmatpush1.msra.mxu0 0.0
    %2688 = vmatprep.subr.mxu0 0.0
    %2689 = vmatpush1.msra.mxu0 0.0
    %2690 = vmatprep.subr.mxu0 0.0
    %2691 = vmatpush1.msra.mxu0 0.0
    %2692 = vmatprep.subr.mxu0 0.0
    %2693 = vmatpush1.msra.mxu0 0.0
    %2694 = vmatprep.subr.mxu0 0.0
    %2695 = vmatpush1.msra.mxu0 0.0
    %2696 = vmatprep.subr.mxu0 0.0
    %2697 = vmatpush1.msra.mxu0 0.0
    %2698 = vmatprep.subr.mxu0 0.0
    %2699 = vmatpush1.msra.mxu0 0.0
    %2700 = vmatprep.subr.mxu0 0.0
    %2701 = vmatpush1.msra.mxu0 %v108
    %2702 = vmatprep.subr.mxu0 0.0
    %2703 = vmatpush1.msra.mxu0 %v107
    %2704 = vmatprep.subr.mxu0 0.0
    %2705 = vmatpush1.msra.mxu0 %v106
    %2706 = vmatprep.subr.mxu0 0.0
    %2707 = vmatpush1.msra.mxu0 %v105
    %2708 = vmatprep.subr.mxu0 0.0
    %2709 = vmatpush1.msra.mxu0 %v104
    %2710 = vmatprep.subr.mxu0 0.0
    %2711 = vmatpush1.msra.mxu0 %v103
    %2712 = vmatprep.subr.mxu0 0.0
    %2713 = vmatpush2.msra.mxu0 0.0
    %2714 = vmatprep.subr.mxu0 0.0
    %2715 = vmatpush2.msra.mxu0 0.0
    %2716 = vmatprep.subr.mxu0 0.0
    %2717 = vmatpush2.msra.mxu0 0.0
    %2718 = vmatprep.subr.mxu0 0.0
    %2719 = vmatpush2.msra.mxu0 0.0
    %2720 = vmatprep.subr.mxu0 0.0
    %2721 = vmatpush2.msra.mxu0 0.0
    %2722 = vmatprep.subr.mxu0 0.0
    %2723 = vmatpush2.msra.mxu0 0.0
    %2724 = vmatprep.subr.mxu0 0.0
    %2725 = vmatpush2.msra.mxu0 0.0
    %2726 = vmatprep.subr.mxu0 0.0
    %2727 = vmatpush2.msra.mxu0 0.0
    %2728 = vmatprep.subr.mxu0 0.0
    %2729 = vmatpush2.msra.mxu0 0.0
    %2730 = vmatprep.subr.mxu0 0.0
    %2731 = vmatpush2.msra.mxu0 0.0
    %2732 = vmatprep.subr.mxu0 0.0
    %2733 = vmatpush2.msra.mxu0 0.0
    %2734 = vmatprep.subr.mxu0 0.0
    %2735 = vmatpush2.msra.mxu0 0.0
    %2736 = vmatprep.subr.mxu0 0.0
    %2737 = vmatpush2.msra.mxu0 0.0
    %2738 = vmatprep.subr.mxu0 0.0
    %2739 = vmatpush2.msra.mxu0 0.0
    %2740 = vmatprep.subr.mxu0 0.0
    %2741 = vmatpush2.msra.mxu0 0.0
    %2742 = vmatprep.subr.mxu0 0.0
    %2743 = vmatpush2.msra.mxu0 0.0
    %2744 = vmatprep.mubr.f32.mxu0 0.0
    %2745 = vmatmul.mubr.f32.gmra.mxu0 %v2678
    %v2746 = vpop.f32.mrf.mxu0
    %v2747 = vadd.f32 0.0, %v2746
    %v2748 = vpop.f32.mrf.mxu0
    %2749 = vdwg.mxu0
    %v2750 = vxor.u32 %v2747, 2147483648
    %v2751 = vmul.f32 %v2750, 1.442695
    %v2752 = vpow.pop %v2751
    %v2753 = vadd.f32 %v2752, 1.0
    %v2754 = vrcp.pop %v2753
    %v2755 = vmul.f32 1.0, %v2754
    %v2756 = vadd.f32 %v2747, %v1667
    %2758 = vrot.lane.b32.xlu0 %v2756, 32
    %v2759 = vpop.permute.xlu0 %2758
    %v2761 = vmul.f32 %v2755, %v2759
    %2763 = vrot.lane.b32.xlu0 %v2761, 64
    %v2764 = vpop.permute.xlu0 %2763
    %v2766 = vadd.f32 %v2747, %v2764
    %v2767 = vtanh.pop %v2766
    %v2768 = vsub.f32 1.0, %v2755
    %2770 = vrot.lane.b32.xlu0 %v2767, 96
    %v2771 = vpop.permute.xlu0 %2770
    %v2773 = vmul.f32 %v2768, %v2771
    %v2774 = vmul.f32 %v2755, %v2558
    %v2775 = vadd.f32 %v2773, %v2774
    %2777 = vrot.lane.b32.xlu0 %v2775, 96
    %v2778 = vpop.permute.xlu0 %2777
    %v2779 = vsel %vm197, %v2778, 0
    %2781 = vmatprep.subr.mxu0 0.0
    %2782 = vmatpush1.msra.mxu0 0.0
    %2783 = vmatprep.subr.mxu0 0.0
    %2784 = vmatpush1.msra.mxu0 0.0
    %2785 = vmatprep.subr.mxu0 0.0
    %2786 = vmatpush1.msra.mxu0 0.0
    %2787 = vmatprep.subr.mxu0 0.0
    %2788 = vmatpush1.msra.mxu0 0.0
    %2789 = vmatprep.subr.mxu0 0.0
    %2790 = vmatpush1.msra.mxu0 0.0
    %2791 = vmatprep.subr.mxu0 0.0
    %2792 = vmatpush1.msra.mxu0 0.0
    %2793 = vmatprep.subr.mxu0 0.0
    %2794 = vmatpush1.msra.mxu0 0.0
    %2795 = vmatprep.subr.mxu0 0.0
    %2796 = vmatpush1.msra.mxu0 0.0
    %2797 = vmatprep.subr.mxu0 0.0
    %2798 = vmatpush1.msra.mxu0 0.0
    %2799 = vmatprep.subr.mxu0 0.0
    %2800 = vmatpush1.msra.mxu0 0.0
    %2801 = vmatprep.subr.mxu0 0.0
    %2802 = vmatpush1.msra.mxu0 0.0
    %2803 = vmatprep.subr.mxu0 0.0
    %2804 = vmatpush1.msra.mxu0 0.0
    %2805 = vmatprep.subr.mxu0 0.0
    %2806 = vmatpush1.msra.mxu0 %v113
    %2807 = vmatprep.subr.mxu0 0.0
    %2808 = vmatpush1.msra.mxu0 %v112
    %2809 = vmatprep.subr.mxu0 0.0
    %2810 = vmatpush1.msra.mxu0 %v111
    %2811 = vmatprep.subr.mxu0 0.0
    %2812 = vmatpush1.msra.mxu0 %v110
    %2813 = vmatprep.subr.mxu0 0.0
    %2814 = vmatpush2.msra.mxu0 0.0
    %2815 = vmatprep.subr.mxu0 0.0
    %2816 = vmatpush2.msra.mxu0 0.0
    %2817 = vmatprep.subr.mxu0 0.0
    %2818 = vmatpush2.msra.mxu0 0.0
    %2819 = vmatprep.subr.mxu0 0.0
    %2820 = vmatpush2.msra.mxu0 0.0
    %2821 = vmatprep.subr.mxu0 0.0
    %2822 = vmatpush2.msra.mxu0 0.0
    %2823 = vmatprep.subr.mxu0 0.0
    %2824 = vmatpush2.msra.mxu0 0.0
    %2825 = vmatprep.subr.mxu0 0.0
    %2826 = vmatpush2.msra.mxu0 0.0
    %2827 = vmatprep.subr.mxu0 0.0
    %2828 = vmatpush2.msra.mxu0 0.0
    %2829 = vmatprep.subr.mxu0 0.0
    %2830 = vmatpush2.msra.mxu0 0.0
    %2831 = vmatprep.subr.mxu0 0.0
    %2832 = vmatpush2.msra.mxu0 0.0
    %2833 = vmatprep.subr.mxu0 0.0
    %2834 = vmatpush2.msra.mxu0 0.0
    %2835 = vmatprep.subr.mxu0 0.0
    %2836 = vmatpush2.msra.mxu0 0.0
    %2837 = vmatprep.subr.mxu0 0.0
    %2838 = vmatpush2.msra.mxu0 0.0
    %2839 = vmatprep.subr.mxu0 0.0
    %2840 = vmatpush2.msra.mxu0 0.0
    %2841 = vmatprep.subr.mxu0 0.0
    %2842 = vmatpush2.msra.mxu0 0.0
    %2843 = vmatprep.subr.mxu0 0.0
    %2844 = vmatpush2.msra.mxu0 0.0
    %2845 = vmatprep.mubr.f32.mxu0 0.0
    %2846 = vmatmul.mubr.f32.gmra.mxu0 %v2779
    %v2847 = vpop.f32.mrf.mxu0
    %v2848 = vadd.f32 %v1693, %v2847
    %v2849 = vpop.f32.mrf.mxu0
    %2850 = vdwg.mxu0
    %v2851 = vsel %vm1770, %v2848, -inf
    %2852 = vmax.xlane.f32.xlu0 %v2851
    %v2853 = vpop.xlane.xlu0 %2852
    %v2854 = vsub.f32 %v2848, %v2853
    %v2855 = vmul.f32 %v2854, 1.442695
    %v2856 = vpow.pop %v2855
    %v2857 = vsel %vm1770, %v2856, 0.0
    %2858 = vadd.xlane.f32.xlu0 %v2857
    %v2859 = vpop.xlane.xlu0 %2858
    %v2860 = vlog2.pop %v2859
    %v2861 = vmul.f32 %v2860, 0.6931472
    %v2862 = vadd.f32 %v2861, %v2853
    %v2863 = vsub.f32 %v2848, %v2862
    %2865 = vrot.lane.b32.xlu0 %v2863, 80
    %v2866 = vpop.permute.xlu0 %2865
    %vm2868 = vcmask 779904
    %2869 = vst.msk [vmem:[%s8] sm:$0x3] %vm2868, %v2866
    %vm2870 = vcmp.eq.f32.partialorder %v2848, %v2853
    %v2871 = vsel %vm2870, %v116, 16
    %v2872 = vsel %vm1770, %v2871, 2147483647
    %v2873 = vand.u32 %v2872, 65535
    %v2874 = vshra.s32 %v2872, 16
    %v2875 = vcvt.s32.f32 %v2873
    %v2876 = vcvt.s32.f32 %v2874
    %2877 = vmin.xlane.f32.xlu0 %v2876
    %v2878 = vpop.xlane.xlu0 %2877
    %vm2879 = vcmp.eq.f32.partialorder %v2876, %v2878
    %v2880 = vsel %vm2879, %v2875, inf
    %2881 = vmin.xlane.f32.xlu0 %v2880
    %v2882 = vpop.xlane.xlu0 %2881
    %v2883 = vcvt.f32.s32 %v2882
    %v2884 = vcvt.f32.s32 %v2878
    %v2885 = vshll.u32 %v2884, 16
    %v2886 = vadd.s32 %v2885, %v2883
    %vm2887 = vcmp.eq.s32.totalorder %v116, %v2886
    %v2888 = vsel %vm2887, 1, 0
    %v2889 = vcvt.s32.f32 %v2888
    %2890 = vrot.lane.b32.xlu0 %v2775, 112
    %v2891 = vpop.permute.xlu0 %2890
    %v2893 = vsel %vm123, %v2889, %v2891
    %v2895 = vsel %vm1581, %v2893, 0
    %2897 = vmatprep.subr.mxu0 0.0
    %2898 = vmatpush1.msra.mxu0 0.0
    %2899 = vmatprep.subr.mxu0 0.0
    %2900 = vmatpush1.msra.mxu0 0.0
    %2901 = vmatprep.subr.mxu0 0.0
    %2902 = vmatpush1.msra.mxu0 0.0
    %2903 = vmatprep.subr.mxu0 0.0
    %2904 = vmatpush1.msra.mxu0 0.0
    %2905 = vmatprep.subr.mxu0 0.0
    %2906 = vmatpush1.msra.mxu0 0.0
    %2907 = vmatprep.subr.mxu0 0.0
    %2908 = vmatpush1.msra.mxu0 0.0
    %2909 = vmatprep.subr.mxu0 0.0
    %2910 = vmatpush1.msra.mxu0 0.0
    %2911 = vmatprep.subr.mxu0 0.0
    %2912 = vmatpush1.msra.mxu0 0.0
    %2913 = vmatprep.subr.mxu0 0.0
    %2914 = vmatpush1.msra.mxu0 0.0
    %2915 = vmatprep.subr.mxu0 0.0
    %2916 = vmatpush1.msra.mxu0 0.0
    %2917 = vmatprep.subr.mxu0 0.0
    %2918 = vmatpush1.msra.mxu0 %v108
    %2919 = vmatprep.subr.mxu0 0.0
    %2920 = vmatpush1.msra.mxu0 %v107
    %2921 = vmatprep.subr.mxu0 0.0
    %2922 = vmatpush1.msra.mxu0 %v106
    %2923 = vmatprep.subr.mxu0 0.0
    %2924 = vmatpush1.msra.mxu0 %v105
    %2925 = vmatprep.subr.mxu0 0.0
    %2926 = vmatpush1.msra.mxu0 %v104
    %2927 = vmatprep.subr.mxu0 0.0
    %2928 = vmatpush1.msra.mxu0 %v103
    %2929 = vmatprep.subr.mxu0 0.0
    %2930 = vmatpush2.msra.mxu0 0.0
    %2931 = vmatprep.subr.mxu0 0.0
    %2932 = vmatpush2.msra.mxu0 0.0
    %2933 = vmatprep.subr.mxu0 0.0
    %2934 = vmatpush2.msra.mxu0 0.0
    %2935 = vmatprep.subr.mxu0 0.0
    %2936 = vmatpush2.msra.mxu0 0.0
    %2937 = vmatprep.subr.mxu0 0.0
    %2938 = vmatpush2.msra.mxu0 0.0
    %2939 = vmatprep.subr.mxu0 0.0
    %2940 = vmatpush2.msra.mxu0 0.0
    %2941 = vmatprep.subr.mxu0 0.0
    %2942 = vmatpush2.msra.mxu0 0.0
    %2943 = vmatprep.subr.mxu0 0.0
    %2944 = vmatpush2.msra.mxu0 0.0
    %2945 = vmatprep.subr.mxu0 0.0
    %2946 = vmatpush2.msra.mxu0 0.0
    %2947 = vmatprep.subr.mxu0 0.0
    %2948 = vmatpush2.msra.mxu0 0.0
    %2949 = vmatprep.subr.mxu0 0.0
    %2950 = vmatpush2.msra.mxu0 0.0
    %2951 = vmatprep.subr.mxu0 0.0
    %2952 = vmatpush2.msra.mxu0 0.0
    %2953 = vmatprep.subr.mxu0 0.0
    %2954 = vmatpush2.msra.mxu0 0.0
    %2955 = vmatprep.subr.mxu0 0.0
    %2956 = vmatpush2.msra.mxu0 0.0
    %2957 = vmatprep.subr.mxu0 0.0
    %2958 = vmatpush2.msra.mxu0 0.0
    %2959 = vmatprep.subr.mxu0 0.0
    %2960 = vmatpush2.msra.mxu0 0.0
    %2961 = vmatprep.mubr.f32.mxu0 0.0
    %2962 = vmatmul.mubr.f32.gmra.mxu0 %v2895
    %v2963 = vpop.f32.mrf.mxu0
    %v2964 = vadd.f32 0.0, %v2963
    %v2965 = vpop.f32.mrf.mxu0
    %2966 = vdwg.mxu0
    %v2967 = vxor.u32 %v2964, 2147483648
    %v2968 = vmul.f32 %v2967, 1.442695
    %v2969 = vpow.pop %v2968
    %v2970 = vadd.f32 %v2969, 1.0
    %v2971 = vrcp.pop %v2970
    %v2972 = vmul.f32 1.0, %v2971
    %v2973 = vadd.f32 %v2964, %v1667
    %2975 = vrot.lane.b32.xlu0 %v2973, 32
    %v2976 = vpop.permute.xlu0 %2975
    %v2978 = vmul.f32 %v2972, %v2976
    %2980 = vrot.lane.b32.xlu0 %v2978, 64
    %v2981 = vpop.permute.xlu0 %2980
    %v2983 = vadd.f32 %v2964, %v2981
    %v2984 = vtanh.pop %v2983
    %v2985 = vsub.f32 1.0, %v2972
    %2987 = vrot.lane.b32.xlu0 %v2984, 96
    %v2988 = vpop.permute.xlu0 %2987
    %v2990 = vmul.f32 %v2985, %v2988
    %v2991 = vmul.f32 %v2972, %v2775
    %v2992 = vadd.f32 %v2990, %v2991
    %2994 = vrot.lane.b32.xlu0 %v2992, 96
    %v2995 = vpop.permute.xlu0 %2994
    %v2996 = vsel %vm197, %v2995, 0
    %2998 = vmatprep.subr.mxu0 0.0
    %2999 = vmatpush1.msra.mxu0 0.0
    %3000 = vmatprep.subr.mxu0 0.0
    %3001 = vmatpush1.msra.mxu0 0.0
    %3002 = vmatprep.subr.mxu0 0.0
    %3003 = vmatpush1.msra.mxu0 0.0
    %3004 = vmatprep.subr.mxu0 0.0
    %3005 = vmatpush1.msra.mxu0 0.0
    %3006 = vmatprep.subr.mxu0 0.0
    %3007 = vmatpush1.msra.mxu0 0.0
    %3008 = vmatprep.subr.mxu0 0.0
    %3009 = vmatpush1.msra.mxu0 0.0
    %3010 = vmatprep.subr.mxu0 0.0
    %3011 = vmatpush1.msra.mxu0 0.0
    %3012 = vmatprep.subr.mxu0 0.0
    %3013 = vmatpush1.msra.mxu0 0.0
    %3014 = vmatprep.subr.mxu0 0.0
    %3015 = vmatpush1.msra.mxu0 0.0
    %3016 = vmatprep.subr.mxu0 0.0
    %3017 = vmatpush1.msra.mxu0 0.0
    %3018 = vmatprep.subr.mxu0 0.0
    %3019 = vmatpush1.msra.mxu0 0.0
    %3020 = vmatprep.subr.mxu0 0.0
    %3021 = vmatpush1.msra.mxu0 0.0
    %3022 = vmatprep.subr.mxu0 0.0
    %3023 = vmatpush1.msra.mxu0 %v113
    %3024 = vmatprep.subr.mxu0 0.0
    %3025 = vmatpush1.msra.mxu0 %v112
    %3026 = vmatprep.subr.mxu0 0.0
    %3027 = vmatpush1.msra.mxu0 %v111
    %3028 = vmatprep.subr.mxu0 0.0
    %3029 = vmatpush1.msra.mxu0 %v110
    %3030 = vmatprep.subr.mxu0 0.0
    %3031 = vmatpush2.msra.mxu0 0.0
    %3032 = vmatprep.subr.mxu0 0.0
    %3033 = vmatpush2.msra.mxu0 0.0
    %3034 = vmatprep.subr.mxu0 0.0
    %3035 = vmatpush2.msra.mxu0 0.0
    %3036 = vmatprep.subr.mxu0 0.0
    %3037 = vmatpush2.msra.mxu0 0.0
    %3038 = vmatprep.subr.mxu0 0.0
    %3039 = vmatpush2.msra.mxu0 0.0
    %3040 = vmatprep.subr.mxu0 0.0
    %3041 = vmatpush2.msra.mxu0 0.0
    %3042 = vmatprep.subr.mxu0 0.0
    %3043 = vmatpush2.msra.mxu0 0.0
    %3044 = vmatprep.subr.mxu0 0.0
    %3045 = vmatpush2.msra.mxu0 0.0
    %3046 = vmatprep.subr.mxu0 0.0
    %3047 = vmatpush2.msra.mxu0 0.0
    %3048 = vmatprep.subr.mxu0 0.0
    %3049 = vmatpush2.msra.mxu0 0.0
    %3050 = vmatprep.subr.mxu0 0.0
    %3051 = vmatpush2.msra.mxu0 0.0
    %3052 = vmatprep.subr.mxu0 0.0
    %3053 = vmatpush2.msra.mxu0 0.0
    %3054 = vmatprep.subr.mxu0 0.0
    %3055 = vmatpush2.msra.mxu0 0.0
    %3056 = vmatprep.subr.mxu0 0.0
    %3057 = vmatpush2.msra.mxu0 0.0
    %3058 = vmatprep.subr.mxu0 0.0
    %3059 = vmatpush2.msra.mxu0 0.0
    %3060 = vmatprep.subr.mxu0 0.0
    %3061 = vmatpush2.msra.mxu0 0.0
    %3062 = vmatprep.mubr.f32.mxu0 0.0
    %3063 = vmatmul.mubr.f32.gmra.mxu0 %v2996
    %v3064 = vpop.f32.mrf.mxu0
    %v3065 = vadd.f32 %v1693, %v3064
    %v3066 = vpop.f32.mrf.mxu0
    %3067 = vdwg.mxu0
    %v3068 = vsel %vm1770, %v3065, -inf
    %3069 = vmax.xlane.f32.xlu0 %v3068
    %v3070 = vpop.xlane.xlu0 %3069
    %v3071 = vsub.f32 %v3065, %v3070
    %v3072 = vmul.f32 %v3071, 1.442695
    %v3073 = vpow.pop %v3072
    %v3074 = vsel %vm1770, %v3073, 0.0
    %3075 = vadd.xlane.f32.xlu0 %v3074
    %v3076 = vpop.xlane.xlu0 %3075
    %v3077 = vlog2.pop %v3076
    %v3078 = vmul.f32 %v3077, 0.6931472
    %v3079 = vadd.f32 %v3078, %v3070
    %v3080 = vsub.f32 %v3065, %v3079
    %3082 = vrot.lane.b32.xlu0 %v3080, 96
    %v3083 = vpop.permute.xlu0 %3082
    %vm3085 = vcmask 911104
    %3086 = vst.msk [vmem:[%s8] sm:$0x3] %vm3085, %v3083
    %vm3087 = vcmp.eq.f32.partialorder %v3065, %v3070
    %v3088 = vsel %vm3087, %v116, 16
    %v3089 = vsel %vm1770, %v3088, 2147483647
    %v3090 = vand.u32 %v3089, 65535
    %v3091 = vshra.s32 %v3089, 16
    %v3092 = vcvt.s32.f32 %v3090
    %v3093 = vcvt.s32.f32 %v3091
    %3094 = vmin.xlane.f32.xlu0 %v3093
    %v3095 = vpop.xlane.xlu0 %3094
    %vm3096 = vcmp.eq.f32.partialorder %v3093, %v3095
    %v3097 = vsel %vm3096, %v3092, inf
    %3098 = vmin.xlane.f32.xlu0 %v3097
    %v3099 = vpop.xlane.xlu0 %3098
    %v3100 = vcvt.f32.s32 %v3099
    %v3101 = vcvt.f32.s32 %v3095
    %v3102 = vshll.u32 %v3101, 16
    %v3103 = vadd.s32 %v3102, %v3100
    %vm3104 = vcmp.eq.s32.totalorder %v116, %v3103
    %v3105 = vsel %vm3104, 1, 0
    %v3106 = vcvt.s32.f32 %v3105
    %3107 = vrot.lane.b32.xlu0 %v2992, 112
    %v3108 = vpop.permute.xlu0 %3107
    %v3110 = vsel %vm123, %v3106, %v3108
    %v3112 = vsel %vm1581, %v3110, 0
    %3114 = vmatprep.subr.mxu0 0.0
    %3115 = vmatpush1.msra.mxu0 0.0
    %3116 = vmatprep.subr.mxu0 0.0
    %3117 = vmatpush1.msra.mxu0 0.0
    %3118 = vmatprep.subr.mxu0 0.0
    %3119 = vmatpush1.msra.mxu0 0.0
    %3120 = vmatprep.subr.mxu0 0.0
    %3121 = vmatpush1.msra.mxu0 0.0
    %3122 = vmatprep.subr.mxu0 0.0
    %3123 = vmatpush1.msra.mxu0 0.0
    %3124 = vmatprep.subr.mxu0 0.0
    %3125 = vmatpush1.msra.mxu0 0.0
    %3126 = vmatprep.subr.mxu0 0.0
    %3127 = vmatpush1.msra.mxu0 0.0
    %3128 = vmatprep.subr.mxu0 0.0
    %3129 = vmatpush1.msra.mxu0 0.0
    %3130 = vmatprep.subr.mxu0 0.0
    %3131 = vmatpush1.msra.mxu0 0.0
    %3132 = vmatprep.subr.mxu0 0.0
    %3133 = vmatpush1.msra.mxu0 0.0
    %3134 = vmatprep.subr.mxu0 0.0
    %3135 = vmatpush1.msra.mxu0 %v108
    %3136 = vmatprep.subr.mxu0 0.0
    %3137 = vmatpush1.msra.mxu0 %v107
    %3138 = vmatprep.subr.mxu0 0.0
    %3139 = vmatpush1.msra.mxu0 %v106
    %3140 = vmatprep.subr.mxu0 0.0
    %3141 = vmatpush1.msra.mxu0 %v105
    %3142 = vmatprep.subr.mxu0 0.0
    %3143 = vmatpush1.msra.mxu0 %v104
    %3144 = vmatprep.subr.mxu0 0.0
    %3145 = vmatpush1.msra.mxu0 %v103
    %3146 = vmatprep.subr.mxu0 0.0
    %3147 = vmatpush2.msra.mxu0 0.0
    %3148 = vmatprep.subr.mxu0 0.0
    %3149 = vmatpush2.msra.mxu0 0.0
    %3150 = vmatprep.subr.mxu0 0.0
    %3151 = vmatpush2.msra.mxu0 0.0
    %3152 = vmatprep.subr.mxu0 0.0
    %3153 = vmatpush2.msra.mxu0 0.0
    %3154 = vmatprep.subr.mxu0 0.0
    %3155 = vmatpush2.msra.mxu0 0.0
    %3156 = vmatprep.subr.mxu0 0.0
    %3157 = vmatpush2.msra.mxu0 0.0
    %3158 = vmatprep.subr.mxu0 0.0
    %3159 = vmatpush2.msra.mxu0 0.0
    %3160 = vmatprep.subr.mxu0 0.0
    %3161 = vmatpush2.msra.mxu0 0.0
    %3162 = vmatprep.subr.mxu0 0.0
    %3163 = vmatpush2.msra.mxu0 0.0
    %3164 = vmatprep.subr.mxu0 0.0
    %3165 = vmatpush2.msra.mxu0 0.0
    %3166 = vmatprep.subr.mxu0 0.0
    %3167 = vmatpush2.msra.mxu0 0.0
    %3168 = vmatprep.subr.mxu0 0.0
    %3169 = vmatpush2.msra.mxu0 0.0
    %3170 = vmatprep.subr.mxu0 0.0
    %3171 = vmatpush2.msra.mxu0 0.0
    %3172 = vmatprep.subr.mxu0 0.0
    %3173 = vmatpush2.msra.mxu0 0.0
    %3174 = vmatprep.subr.mxu0 0.0
    %3175 = vmatpush2.msra.mxu0 0.0
    %3176 = vmatprep.subr.mxu0 0.0
    %3177 = vmatpush2.msra.mxu0 0.0
    %3178 = vmatprep.mubr.f32.mxu0 0.0
    %3179 = vmatmul.mubr.f32.gmra.mxu0 %v3112
    %v3180 = vpop.f32.mrf.mxu0
    %v3181 = vadd.f32 0.0, %v3180
    %v3182 = vpop.f32.mrf.mxu0
    %3183 = vdwg.mxu0
    %v3184 = vxor.u32 %v3181, 2147483648
    %v3185 = vmul.f32 %v3184, 1.442695
    %v3186 = vpow.pop %v3185
    %v3187 = vadd.f32 %v3186, 1.0
    %v3188 = vrcp.pop %v3187
    %v3189 = vmul.f32 1.0, %v3188
    %v3190 = vadd.f32 %v3181, %v1667
    %3192 = vrot.lane.b32.xlu0 %v3190, 32
    %v3193 = vpop.permute.xlu0 %3192
    %v3195 = vmul.f32 %v3189, %v3193
    %3197 = vrot.lane.b32.xlu0 %v3195, 64
    %v3198 = vpop.permute.xlu0 %3197
    %v3200 = vadd.f32 %v3181, %v3198
    %v3201 = vtanh.pop %v3200
    %v3202 = vsub.f32 1.0, %v3189
    %3204 = vrot.lane.b32.xlu0 %v3201, 96
    %v3205 = vpop.permute.xlu0 %3204
    %v3207 = vmul.f32 %v3202, %v3205
    %v3208 = vmul.f32 %v3189, %v2992
    %v3209 = vadd.f32 %v3207, %v3208
    %3211 = vrot.lane.b32.xlu0 %v3209, 96
    %v3212 = vpop.permute.xlu0 %3211
    %v3213 = vsel %vm197, %v3212, 0
    %3215 = vmatprep.subr.mxu0 0.0
    %3216 = vmatpush1.msra.mxu0 0.0
    %3217 = vmatprep.subr.mxu0 0.0
    %3218 = vmatpush1.msra.mxu0 0.0
    %3219 = vmatprep.subr.mxu0 0.0
    %3220 = vmatpush1.msra.mxu0 0.0
    %3221 = vmatprep.subr.mxu0 0.0
    %3222 = vmatpush1.msra.mxu0 0.0
    %3223 = vmatprep.subr.mxu0 0.0
    %3224 = vmatpush1.msra.mxu0 0.0
    %3225 = vmatprep.subr.mxu0 0.0
    %3226 = vmatpush1.msra.mxu0 0.0
    %3227 = vmatprep.subr.mxu0 0.0
    %3228 = vmatpush1.msra.mxu0 0.0
    %3229 = vmatprep.subr.mxu0 0.0
    %3230 = vmatpush1.msra.mxu0 0.0
    %3231 = vmatprep.subr.mxu0 0.0
    %3232 = vmatpush1.msra.mxu0 0.0
    %3233 = vmatprep.subr.mxu0 0.0
    %3234 = vmatpush1.msra.mxu0 0.0
    %3235 = vmatprep.subr.mxu0 0.0
    %3236 = vmatpush1.msra.mxu0 0.0
    %3237 = vmatprep.subr.mxu0 0.0
    %3238 = vmatpush1.msra.mxu0 0.0
    %3239 = vmatprep.subr.mxu0 0.0
    %3240 = vmatpush1.msra.mxu0 %v113
    %3241 = vmatprep.subr.mxu0 0.0
    %3242 = vmatpush1.msra.mxu0 %v112
    %3243 = vmatprep.subr.mxu0 0.0
    %3244 = vmatpush1.msra.mxu0 %v111
    %3245 = vmatprep.subr.mxu0 0.0
    %3246 = vmatpush1.msra.mxu0 %v110
    %3247 = vmatprep.subr.mxu0 0.0
    %3248 = vmatpush2.msra.mxu0 0.0
    %3249 = vmatprep.subr.mxu0 0.0
    %3250 = vmatpush2.msra.mxu0 0.0
    %3251 = vmatprep.subr.mxu0 0.0
    %3252 = vmatpush2.msra.mxu0 0.0
    %3253 = vmatprep.subr.mxu0 0.0
    %3254 = vmatpush2.msra.mxu0 0.0
    %3255 = vmatprep.subr.mxu0 0.0
    %3256 = vmatpush2.msra.mxu0 0.0
    %3257 = vmatprep.subr.mxu0 0.0
    %3258 = vmatpush2.msra.mxu0 0.0
    %3259 = vmatprep.subr.mxu0 0.0
    %3260 = vmatpush2.msra.mxu0 0.0
    %3261 = vmatprep.subr.mxu0 0.0
    %3262 = vmatpush2.msra.mxu0 0.0
    %3263 = vmatprep.subr.mxu0 0.0
    %3264 = vmatpush2.msra.mxu0 0.0
    %3265 = vmatprep.subr.mxu0 0.0
    %3266 = vmatpush2.msra.mxu0 0.0
    %3267 = vmatprep.subr.mxu0 0.0
    %3268 = vmatpush2.msra.mxu0 0.0
    %3269 = vmatprep.subr.mxu0 0.0
    %3270 = vmatpush2.msra.mxu0 0.0
    %3271 = vmatprep.subr.mxu0 0.0
    %3272 = vmatpush2.msra.mxu0 0.0
    %3273 = vmatprep.subr.mxu0 0.0
    %3274 = vmatpush2.msra.mxu0 0.0
    %3275 = vmatprep.subr.mxu0 0.0
    %3276 = vmatpush2.msra.mxu0 0.0
    %3277 = vmatprep.subr.mxu0 0.0
    %3278 = vmatpush2.msra.mxu0 0.0
    %3279 = vmatprep.mubr.f32.mxu0 0.0
    %3280 = vmatmul.mubr.f32.gmra.mxu0 %v3213
    %v3281 = vpop.f32.mrf.mxu0
    %v3282 = vadd.f32 %v1693, %v3281
    %v3283 = vpop.f32.mrf.mxu0
    %3284 = vdwg.mxu0
    %v3285 = vsel %vm1770, %v3282, -inf
    %3286 = vmax.xlane.f32.xlu0 %v3285
    %v3287 = vpop.xlane.xlu0 %3286
    %v3288 = vsub.f32 %v3282, %v3287
    %v3289 = vmul.f32 %v3288, 1.442695
    %v3290 = vpow.pop %v3289
    %v3291 = vsel %vm1770, %v3290, 0.0
    %3292 = vadd.xlane.f32.xlu0 %v3291
    %v3293 = vpop.xlane.xlu0 %3292
    %v3294 = vlog2.pop %v3293
    %v3295 = vmul.f32 %v3294, 0.6931472
    %v3296 = vadd.f32 %v3295, %v3287
    %v3297 = vsub.f32 %v3282, %v3296
    %3299 = vrot.lane.b32.xlu0 %v3297, 112
    %v3300 = vpop.permute.xlu0 %3299
    %vm3302 = vcmask 1042304
    %3303 = vst.msk [vmem:[%s8] sm:$0x3] %vm3302, %v3300
    // Predicated region
    $region54: #{translator_forward.1} parent=1 // pred_check
      _
    $region55: #{translator_forward.1} parent=1 // pred_check_branch
      %3305 = sbr.rel (0) target = $region57
    $region56: #{translator_forward.1} parent=1 // pred_region
      _
    $region57: #{translator_forward.1} parent=1 // pred_fallthru
      _
    // Predicated region
    $region58: #{translator_forward.1} parent=1 // pred_check
      _
    $region59: #{translator_forward.1} parent=1 // pred_check_branch
      %3307 = sbr.rel (0) target = $region61
    $region60: #{translator_forward.1} parent=1 // pred_region
      _
    $region61: #{translator_forward.1} parent=1 // pred_fallthru
      _
    %3308 = vsyncpa [#allocation3], 1
    %3309 = vsyncpa [#allocation5], 1
    %3310 = vsyncpa [#allocation8], 1

</llo_original>
